<compile_context>
chip_gen: v7x
topology: tpu7x:2x2x1
jax: 0.10.0
libtpu: 0.0.40
codegen_flags: <defaults>
</compile_context>

<pallas_src>
import functools

import jax
import jax.numpy as jnp
from jax.experimental import pallas as pl
from jax.experimental.pallas import tpu as pltpu


# ----------------------------------------------------------------------------
# In-kernel building blocks
# ----------------------------------------------------------------------------
def _project(h, w):
    """(Bt, S, D) f32 @ (D, E) bf16 -> (Bt, S, E) f32, via a flattened 2-D dot."""
    bt, s, d = h.shape
    h2 = h.reshape(bt * s, d).astype(jnp.bfloat16)
    y = jnp.dot(h2, w, preferred_element_type=jnp.float32)
    return y.reshape(bt, s, w.shape[1])


def _self_attention(h, wq, wk, wv):
    """Batched self-attention; softmax over keys, f32 math, bf16 MXU operands."""
    q = _project(h, wq)
    k = _project(h, wk)
    v = _project(h, wv)
    # Contract the feature axis directly (no explicit k.T / relayout).
    s = jnp.einsum("bqd,bkd->bqk", q.astype(jnp.bfloat16), k.astype(jnp.bfloat16),
                   preferred_element_type=jnp.float32)
    s = s - jnp.max(s, axis=-1, keepdims=True)          # stable softmax (f32, VPU)
    p = jnp.exp(s)                                       # EUP
    denom = jnp.sum(p, axis=-1, keepdims=True)           # (Bt, S, 1)
    out = jnp.einsum("bqk,bkd->bqd", p.astype(jnp.bfloat16), v.astype(jnp.bfloat16),
                     preferred_element_type=jnp.float32)
    # Normalize after p@v: one (Bt,S,1) reciprocal on the EUP instead of an
    # (S,S) elementwise divide.
    return out * pl.reciprocal(denom, approx=True)


def _linear_relu(h, w, b):
    """(Bt, S, D) -> relu((Bt*S, D) @ (D, E) + b), back to (Bt, S, E)."""
    bt, s, d = h.shape
    h2 = h.reshape(bt * s, d).astype(jnp.bfloat16)
    y = jnp.dot(h2, w, preferred_element_type=jnp.float32) + b   # bias in f32
    y = jnp.maximum(y, 0.0)
    return y.reshape(bt, s, w.shape[1])


def fcn_kernel(x_ref,
               wq1_ref, wk1_ref, wv1_ref, w1_ref, b1_ref,
               wq2_ref, wk2_ref, wv2_ref, w2_ref, b2_ref,
               wq3_ref, wk3_ref, wv3_ref, w3_ref, b3_ref,
               o_ref):
    h = x_ref[...].astype(jnp.float32)                        # (Bt, S, Dp_in)

    h = _self_attention(h, wq1_ref[...], wk1_ref[...], wv1_ref[...])
    h = _linear_relu(h, w1_ref[...], b1_ref[...])             # (Bt, S, 128)

    h = _self_attention(h, wq2_ref[...], wk2_ref[...], wv2_ref[...])
    h = _linear_relu(h, w2_ref[...], b2_ref[...])             # (Bt, S, 256)

    h = _self_attention(h, wq3_ref[...], wk3_ref[...], wv3_ref[...])
    # Dropout(p=0.2): identity at inference (no mask / no 1/(1-p) scaling).
    # TODO(synk): training-mode dropout (RNG mask + rescale) not implemented.
    h = _linear_relu(h, w3_ref[...], b3_ref[...])             # (Bt, S, 128)

    o_ref[...] = h.astype(o_ref.dtype)


# ----------------------------------------------------------------------------
# Parameters
# ----------------------------------------------------------------------------
PARAM_ORDER = ("wq1", "wk1", "wv1", "w1", "b1",
               "wq2", "wk2", "wv2", "w2", "b2",
               "wq3", "wk3", "wv3", "w3", "b3")

_H1, _H2 = 120, 150


def init_params(key, input_dim, output_dim):
    """Deterministic Glorot-uniform-ish init — logical (unpadded, f32) params."""
    def glorot(k, shape):
        fan_in, fan_out = shape[-2], shape[-1]
        limit = (6.0 / (fan_in + fan_out)) ** 0.5
        return jax.random.uniform(k, shape, jnp.float32, -limit, limit)

    keys = jax.random.split(key, 12)
    return {
        # SelfAttention 1 (units = input_dim)
        "wq1": glorot(keys[0], (input_dim, input_dim)),
        "wk1": glorot(keys[1], (input_dim, input_dim)),
        "wv1": glorot(keys[2], (input_dim, input_dim)),
        # fc1: input_dim -> 120   (stored as (in, out))
        "w1": glorot(keys[3], (input_dim, _H1)),
        "b1": jnp.zeros((1, _H1), jnp.float32),
        # SelfAttention 2 (units = 120)
        "wq2": glorot(keys[4], (_H1, _H1)),
        "wk2": glorot(keys[5], (_H1, _H1)),
        "wv2": glorot(keys[6], (_H1, _H1)),
        # fc2: 120 -> 150
        "w2": glorot(keys[7], (_H1, _H2)),
        "b2": jnp.zeros((1, _H2), jnp.float32),
        # SelfAttention 3 (units = 150)
        "wq3": glorot(keys[8], (_H2, _H2)),
        "wk3": glorot(keys[9], (_H2, _H2)),
        "wv3": glorot(keys[10], (_H2, _H2)),
        # fc3: 150 -> output_dim
        "w3": glorot(keys[11], (_H2, output_dim)),
        "b3": jnp.zeros((1, output_dim), jnp.float32),
    }


def _round_up(n, m=128):
    return ((n + m - 1) // m) * m


def pack_params(params):
    """Zero-pad every feature dim to a 128-lane multiple and cast weights to
    bf16 (biases stay f32).  Zero padding is numerically exact for this network
    (padded q/k/v columns are zero -> scores/outputs unchanged; padded Linear
    rows only multiply zero activations)."""
    packed = {}
    for name, a in params.items():
        is_bias = name.startswith("b")
        rows = 1 if is_bias else _round_up(a.shape[0])
        cols = _round_up(a.shape[1])
        dtype = jnp.float32 if is_bias else jnp.bfloat16
        buf = jnp.zeros((rows, cols), dtype)
        packed[name] = buf.at[: a.shape[0], : a.shape[1]].set(a.astype(dtype))
    return packed


# ----------------------------------------------------------------------------
# Wrapper
# ----------------------------------------------------------------------------
@functools.partial(jax.jit, static_argnames=("d_out", "batch_blocks"))
def fully_connected_network(x, packed, *, d_out, batch_blocks=2):
    B, S, d_in = x.shape
    dp_in = packed["wq1"].shape[0]
    dp_out = packed["w3"].shape[1]

    # Pad input features to the lane-aligned width (zeros -> exact).
    if d_in < dp_in:
        x = jnp.pad(x, ((0, 0), (0, 0), (0, dp_in - d_in)))

    # >=2 parallel grid steps shard across v7x's two TensorCores; the extra
    # step is negligible overhead on single-TC v5e/v6e.
    nb = max(1, min(batch_blocks, B))
    while B % nb:
        nb -= 1
    bt = B // nb

    param_arrays = [packed[name] for name in PARAM_ORDER]
    # Each weight/bias is loaded whole (full-array block, same block every step).
    weight_specs = [pl.BlockSpec(a.shape, lambda b: (0, 0)) for a in param_arrays]

    out = pl.pallas_call(
        fcn_kernel,
        grid=(nb,),
        in_specs=[pl.BlockSpec((bt, S, dp_in), lambda b: (b, 0, 0))] + weight_specs,
        out_specs=pl.BlockSpec((bt, S, dp_out), lambda b: (b, 0, 0)),
        out_shape=jax.ShapeDtypeStruct((B, S, dp_out), jnp.float32),
        compiler_params=pltpu.CompilerParams(
            dimension_semantics=("parallel",)),
    )(x, *param_arrays)

    return out[:, :, :d_out]


# ----------------------------------------------------------------------------
# Pure-JAX reference (mirrors the kernel's bf16 matmul operands / f32 accum)
# ----------------------------------------------------------------------------
def reference_forward(x, params):
    bf = lambda a: a.astype(jnp.bfloat16)

    def attn(h, wq, wk, wv):
        q = jnp.einsum("bsd,de->bse", bf(h), bf(wq), preferred_element_type=jnp.float32)
        k = jnp.einsum("bsd,de->bse", bf(h), bf(wk), preferred_element_type=jnp.float32)
        v = jnp.einsum("bsd,de->bse", bf(h), bf(wv), preferred_element_type=jnp.float32)
        s = jnp.einsum("bqd,bkd->bqk", bf(q), bf(k), preferred_element_type=jnp.float32)
        p = jnp.exp(s - jnp.max(s, axis=-1, keepdims=True))
        den = jnp.sum(p, axis=-1, keepdims=True)
        o = jnp.einsum("bqk,bkd->bqd", bf(p), bf(v), preferred_element_type=jnp.float32)
        return o / den

    def lin(h, w, b):
        y = jnp.einsum("bsd,de->bse", bf(h), bf(w), preferred_element_type=jnp.float32) + b
        return jnp.maximum(y, 0.0)

    h = attn(x, params["wq1"], params["wk1"], params["wv1"])
    h = lin(h, params["w1"], params["b1"])
    h = attn(h, params["wq2"], params["wk2"], params["wv2"])
    h = lin(h, params["w2"], params["b2"])
    h = attn(h, params["wq3"], params["wk3"], params["wv3"])
    h = lin(h, params["w3"], params["b3"])
    return h


if __name__ == "__main__":
    key = jax.random.PRNGKey(0)
    k_x, k_p = jax.random.split(key)

    B, S, INPUT_DIM, OUTPUT_DIM = 8, 8, 16, 12
    x = jax.random.normal(k_x, (B, S, INPUT_DIM), jnp.float32)
    params = init_params(k_p, INPUT_DIM, OUTPUT_DIM)
    packed = pack_params(params)

    out = fully_connected_network(x, packed, d_out=OUTPUT_DIM, batch_blocks=2)
    out = jax.block_until_ready(out)

    ref = reference_forward(x, params)
    assert out.shape == (B, S, OUTPUT_DIM)
    max_err = float(jnp.max(jnp.abs(out - ref)))
    # Remaining delta vs the bf16-mirrored reference is only the EUP approx
    # reciprocal and MXU accumulation order.
    assert max_err < 2e-2, f"mismatch vs reference: max_err={max_err}"

    print("KERNEL_OK")
</pallas_src>

<mosaic_0001>
module attributes {stable_mosaic.version = 11 : i64} {
  func.func @fcn_kernel(%arg0: i32, %arg1: memref<4x8x128xf32, #tpu.memory_space<vmem>>, %arg2: memref<128x128xbf16, #tpu.memory_space<vmem>>, %arg3: memref<128x128xbf16, #tpu.memory_space<vmem>>, %arg4: memref<128x128xbf16, #tpu.memory_space<vmem>>, %arg5: memref<128x128xbf16, #tpu.memory_space<vmem>>, %arg6: memref<1x128xf32, #tpu.memory_space<vmem>>, %arg7: memref<128x128xbf16, #tpu.memory_space<vmem>>, %arg8: memref<128x128xbf16, #tpu.memory_space<vmem>>, %arg9: memref<128x128xbf16, #tpu.memory_space<vmem>>, %arg10: memref<128x256xbf16, #tpu.memory_space<vmem>>, %arg11: memref<1x256xf32, #tpu.memory_space<vmem>>, %arg12: memref<256x256xbf16, #tpu.memory_space<vmem>>, %arg13: memref<256x256xbf16, #tpu.memory_space<vmem>>, %arg14: memref<256x256xbf16, #tpu.memory_space<vmem>>, %arg15: memref<256x128xbf16, #tpu.memory_space<vmem>>, %arg16: memref<1x128xf32, #tpu.memory_space<vmem>>, %arg17: memref<4x8x128xf32, #tpu.memory_space<vmem>>) attributes {dimension_semantics = [#tpu.dimension_semantics<parallel>], iteration_bounds = array<i64: 2>, scalar_prefetch = 0 : i64, scratch_operands = 0 : i64, tpu.core_type = #tpu.core_type<tc>, window_params = [{transform_indices = @transform_0, window_bounds = array<i64: 4, 8, 128>}, {pipeline_mode = #tpu.pipeline_mode<synchronous>, transform_indices = @transform_1, window_bounds = array<i64: 128, 128>}, {pipeline_mode = #tpu.pipeline_mode<synchronous>, transform_indices = @transform_2, window_bounds = array<i64: 128, 128>}, {pipeline_mode = #tpu.pipeline_mode<synchronous>, transform_indices = @transform_3, window_bounds = array<i64: 128, 128>}, {pipeline_mode = #tpu.pipeline_mode<synchronous>, transform_indices = @transform_4, window_bounds = array<i64: 128, 128>}, {pipeline_mode = #tpu.pipeline_mode<synchronous>, transform_indices = @transform_5, window_bounds = array<i64: 1, 128>}, {pipeline_mode = #tpu.pipeline_mode<synchronous>, transform_indices = @transform_6, window_bounds = array<i64: 128, 128>}, {pipeline_mode = #tpu.pipeline_mode<synchronous>, transform_indices = @transform_7, window_bounds = array<i64: 128, 128>}, {pipeline_mode = #tpu.pipeline_mode<synchronous>, transform_indices = @transform_8, window_bounds = array<i64: 128, 128>}, {pipeline_mode = #tpu.pipeline_mode<synchronous>, transform_indices = @transform_9, window_bounds = array<i64: 128, 256>}, {pipeline_mode = #tpu.pipeline_mode<synchronous>, transform_indices = @transform_10, window_bounds = array<i64: 1, 256>}, {pipeline_mode = #tpu.pipeline_mode<synchronous>, transform_indices = @transform_11, window_bounds = array<i64: 256, 256>}, {pipeline_mode = #tpu.pipeline_mode<synchronous>, transform_indices = @transform_12, window_bounds = array<i64: 256, 256>}, {pipeline_mode = #tpu.pipeline_mode<synchronous>, transform_indices = @transform_13, window_bounds = array<i64: 256, 256>}, {pipeline_mode = #tpu.pipeline_mode<synchronous>, transform_indices = @transform_14, window_bounds = array<i64: 256, 128>}, {pipeline_mode = #tpu.pipeline_mode<synchronous>, transform_indices = @transform_15, window_bounds = array<i64: 1, 128>}, {transform_indices = @transform_16, window_bounds = array<i64: 4, 8, 128>}]} {
    %c0 = arith.constant 0 : index
    %c0_0 = arith.constant 0 : index
    %c0_1 = arith.constant 0 : index
    %0 = vector.load %arg1[%c0, %c0_0, %c0_1] : memref<4x8x128xf32, #tpu.memory_space<vmem>>, vector<4x8x128xf32>
    %c0_2 = arith.constant 0 : index
    %c0_3 = arith.constant 0 : index
    %1 = vector.load %arg2[%c0_2, %c0_3] : memref<128x128xbf16, #tpu.memory_space<vmem>>, vector<128x128xbf16>
    %c0_4 = arith.constant 0 : index
    %c0_5 = arith.constant 0 : index
    %2 = vector.load %arg3[%c0_4, %c0_5] : memref<128x128xbf16, #tpu.memory_space<vmem>>, vector<128x128xbf16>
    %c0_6 = arith.constant 0 : index
    %c0_7 = arith.constant 0 : index
    %3 = vector.load %arg4[%c0_6, %c0_7] : memref<128x128xbf16, #tpu.memory_space<vmem>>, vector<128x128xbf16>
    %4 = vector.shape_cast %0 : vector<4x8x128xf32> to vector<32x128xf32>
    %5 = arith.truncf %4 : vector<32x128xf32> to vector<32x128xbf16>
    %cst = arith.constant dense<0.000000e+00> : vector<32x128xf32>
    %6 = tpu.matmul %5, %1, %cst {dimension_numbers = #tpu.dot_dimension_numbers<[1], [0], [0], [1], [0, 0, 1, 1], [], []>} : vector<32x128xbf16>, vector<128x128xbf16>, vector<32x128xf32> -> vector<32x128xf32>
    %7 = vector.shape_cast %6 : vector<32x128xf32> to vector<4x8x128xf32>
    %8 = vector.shape_cast %0 : vector<4x8x128xf32> to vector<32x128xf32>
    %9 = arith.truncf %8 : vector<32x128xf32> to vector<32x128xbf16>
    %cst_8 = arith.constant dense<0.000000e+00> : vector<32x128xf32>
    %10 = tpu.matmul %9, %2, %cst_8 {dimension_numbers = #tpu.dot_dimension_numbers<[1], [0], [0], [1], [0, 0, 1, 1], [], []>} : vector<32x128xbf16>, vector<128x128xbf16>, vector<32x128xf32> -> vector<32x128xf32>
    %11 = vector.shape_cast %10 : vector<32x128xf32> to vector<4x8x128xf32>
    %12 = vector.shape_cast %0 : vector<4x8x128xf32> to vector<32x128xf32>
    %13 = arith.truncf %12 : vector<32x128xf32> to vector<32x128xbf16>
    %cst_9 = arith.constant dense<0.000000e+00> : vector<32x128xf32>
    %14 = tpu.matmul %13, %3, %cst_9 {dimension_numbers = #tpu.dot_dimension_numbers<[1], [0], [0], [1], [0, 0, 1, 1], [], []>} : vector<32x128xbf16>, vector<128x128xbf16>, vector<32x128xf32> -> vector<32x128xf32>
    %15 = vector.shape_cast %14 : vector<32x128xf32> to vector<4x8x128xf32>
    %16 = arith.truncf %7 : vector<4x8x128xf32> to vector<4x8x128xbf16>
    %17 = arith.truncf %11 : vector<4x8x128xf32> to vector<4x8x128xbf16>
    "tpu.trace_start"() <{level = 10 : i32, message = "bqd,bkd->bqk"}> : () -> ()
    %cst_10 = arith.constant dense<0.000000e+00> : vector<4x8x8xf32>
    %18 = tpu.matmul %16, %17, %cst_10 {dimension_numbers = #tpu.dot_dimension_numbers<[2], [2], [1], [1], [0, 0, 0, 1, 1, 1], [0], [0]>} : vector<4x8x128xbf16>, vector<4x8x128xbf16>, vector<4x8x8xf32> -> vector<4x8x8xf32>
    "tpu.trace_stop"() : () -> ()
    %cst_11 = arith.constant dense<0xFF800000> : vector<4x8xf32>
    %19 = vector.multi_reduction <maximumf>, %18, %cst_11 [2] : vector<4x8x8xf32> to vector<4x8xf32>
    %20 = vector.shape_cast %19 : vector<4x8xf32> to vector<4x8x1xf32>
    %21 = vector.broadcast %20 : vector<4x8x1xf32> to vector<4x8x8xf32>
    %22 = arith.subf %18, %21 : vector<4x8x8xf32>
    %23 = math.exp %22 : vector<4x8x8xf32>
    %cst_12 = arith.constant dense<0.000000e+00> : vector<4x8xf32>
    %24 = vector.multi_reduction <add>, %23, %cst_12 [2] : vector<4x8x8xf32> to vector<4x8xf32>
    %25 = vector.shape_cast %24 : vector<4x8xf32> to vector<4x8x1xf32>
    %26 = arith.truncf %23 : vector<4x8x8xf32> to vector<4x8x8xbf16>
    %27 = arith.truncf %15 : vector<4x8x128xf32> to vector<4x8x128xbf16>
    "tpu.trace_start"() <{level = 10 : i32, message = "bqk,bkd->bqd"}> : () -> ()
    %cst_13 = arith.constant dense<0.000000e+00> : vector<4x8x128xf32>
    %28 = tpu.matmul %26, %27, %cst_13 {dimension_numbers = #tpu.dot_dimension_numbers<[2], [1], [1], [2], [0, 0, 0, 1, 1, 2], [0], [0]>} : vector<4x8x8xbf16>, vector<4x8x128xbf16>, vector<4x8x128xf32> -> vector<4x8x128xf32>
    "tpu.trace_stop"() : () -> ()
    %29 = tpu.reciprocal %25 {approx = true} : vector<4x8x1xf32> -> vector<4x8x1xf32>
    %30 = vector.broadcast %29 : vector<4x8x1xf32> to vector<4x8x128xf32>
    %31 = arith.mulf %28, %30 : vector<4x8x128xf32>
    %c0_14 = arith.constant 0 : index
    %c0_15 = arith.constant 0 : index
    %32 = vector.load %arg5[%c0_14, %c0_15] : memref<128x128xbf16, #tpu.memory_space<vmem>>, vector<128x128xbf16>
    %c0_16 = arith.constant 0 : index
    %c0_17 = arith.constant 0 : index
    %33 = vector.load %arg6[%c0_16, %c0_17] : memref<1x128xf32, #tpu.memory_space<vmem>>, vector<1x128xf32>
    %34 = vector.shape_cast %31 : vector<4x8x128xf32> to vector<32x128xf32>
    %35 = arith.truncf %34 : vector<32x128xf32> to vector<32x128xbf16>
    %cst_18 = arith.constant dense<0.000000e+00> : vector<32x128xf32>
    %36 = tpu.matmul %35, %32, %cst_18 {dimension_numbers = #tpu.dot_dimension_numbers<[1], [0], [0], [1], [0, 0, 1, 1], [], []>} : vector<32x128xbf16>, vector<128x128xbf16>, vector<32x128xf32> -> vector<32x128xf32>
    %37 = vector.broadcast %33 : vector<1x128xf32> to vector<32x128xf32>
    %38 = arith.addf %36, %37 : vector<32x128xf32>
    %cst_19 = arith.constant 0.000000e+00 : f32
    %39 = vector.broadcast %cst_19 : f32 to vector<32x128xf32>
    %40 = arith.maximumf %38, %39 : vector<32x128xf32>
    %41 = vector.shape_cast %40 : vector<32x128xf32> to vector<4x8x128xf32>
    %c0_20 = arith.constant 0 : index
    %c0_21 = arith.constant 0 : index
    %42 = vector.load %arg7[%c0_20, %c0_21] : memref<128x128xbf16, #tpu.memory_space<vmem>>, vector<128x128xbf16>
    %c0_22 = arith.constant 0 : index
    %c0_23 = arith.constant 0 : index
    %43 = vector.load %arg8[%c0_22, %c0_23] : memref<128x128xbf16, #tpu.memory_space<vmem>>, vector<128x128xbf16>
    %c0_24 = arith.constant 0 : index
    %c0_25 = arith.constant 0 : index
    %44 = vector.load %arg9[%c0_24, %c0_25] : memref<128x128xbf16, #tpu.memory_space<vmem>>, vector<128x128xbf16>
    %45 = vector.shape_cast %41 : vector<4x8x128xf32> to vector<32x128xf32>
    %46 = arith.truncf %45 : vector<32x128xf32> to vector<32x128xbf16>
    %cst_26 = arith.constant dense<0.000000e+00> : vector<32x128xf32>
    %47 = tpu.matmul %46, %42, %cst_26 {dimension_numbers = #tpu.dot_dimension_numbers<[1], [0], [0], [1], [0, 0, 1, 1], [], []>} : vector<32x128xbf16>, vector<128x128xbf16>, vector<32x128xf32> -> vector<32x128xf32>
    %48 = vector.shape_cast %47 : vector<32x128xf32> to vector<4x8x128xf32>
    %49 = vector.shape_cast %41 : vector<4x8x128xf32> to vector<32x128xf32>
    %50 = arith.truncf %49 : vector<32x128xf32> to vector<32x128xbf16>
    %cst_27 = arith.constant dense<0.000000e+00> : vector<32x128xf32>
    %51 = tpu.matmul %50, %43, %cst_27 {dimension_numbers = #tpu.dot_dimension_numbers<[1], [0], [0], [1], [0, 0, 1, 1], [], []>} : vector<32x128xbf16>, vector<128x128xbf16>, vector<32x128xf32> -> vector<32x128xf32>
    %52 = vector.shape_cast %51 : vector<32x128xf32> to vector<4x8x128xf32>
    %53 = vector.shape_cast %41 : vector<4x8x128xf32> to vector<32x128xf32>
    %54 = arith.truncf %53 : vector<32x128xf32> to vector<32x128xbf16>
    %cst_28 = arith.constant dense<0.000000e+00> : vector<32x128xf32>
    %55 = tpu.matmul %54, %44, %cst_28 {dimension_numbers = #tpu.dot_dimension_numbers<[1], [0], [0], [1], [0, 0, 1, 1], [], []>} : vector<32x128xbf16>, vector<128x128xbf16>, vector<32x128xf32> -> vector<32x128xf32>
    %56 = vector.shape_cast %55 : vector<32x128xf32> to vector<4x8x128xf32>
    %57 = arith.truncf %48 : vector<4x8x128xf32> to vector<4x8x128xbf16>
    %58 = arith.truncf %52 : vector<4x8x128xf32> to vector<4x8x128xbf16>
    "tpu.trace_start"() <{level = 10 : i32, message = "bqd,bkd->bqk"}> : () -> ()
    %cst_29 = arith.constant dense<0.000000e+00> : vector<4x8x8xf32>
    %59 = tpu.matmul %57, %58, %cst_29 {dimension_numbers = #tpu.dot_dimension_numbers<[2], [2], [1], [1], [0, 0, 0, 1, 1, 1], [0], [0]>} : vector<4x8x128xbf16>, vector<4x8x128xbf16>, vector<4x8x8xf32> -> vector<4x8x8xf32>
    "tpu.trace_stop"() : () -> ()
    %cst_30 = arith.constant dense<0xFF800000> : vector<4x8xf32>
    %60 = vector.multi_reduction <maximumf>, %59, %cst_30 [2] : vector<4x8x8xf32> to vector<4x8xf32>
    %61 = vector.shape_cast %60 : vector<4x8xf32> to vector<4x8x1xf32>
    %62 = vector.broadcast %61 : vector<4x8x1xf32> to vector<4x8x8xf32>
    %63 = arith.subf %59, %62 : vector<4x8x8xf32>
    %64 = math.exp %63 : vector<4x8x8xf32>
    %cst_31 = arith.constant dense<0.000000e+00> : vector<4x8xf32>
    %65 = vector.multi_reduction <add>, %64, %cst_31 [2] : vector<4x8x8xf32> to vector<4x8xf32>
    %66 = vector.shape_cast %65 : vector<4x8xf32> to vector<4x8x1xf32>
    %67 = arith.truncf %64 : vector<4x8x8xf32> to vector<4x8x8xbf16>
    %68 = arith.truncf %56 : vector<4x8x128xf32> to vector<4x8x128xbf16>
    "tpu.trace_start"() <{level = 10 : i32, message = "bqk,bkd->bqd"}> : () -> ()
    %cst_32 = arith.constant dense<0.000000e+00> : vector<4x8x128xf32>
    %69 = tpu.matmul %67, %68, %cst_32 {dimension_numbers = #tpu.dot_dimension_numbers<[2], [1], [1], [2], [0, 0, 0, 1, 1, 2], [0], [0]>} : vector<4x8x8xbf16>, vector<4x8x128xbf16>, vector<4x8x128xf32> -> vector<4x8x128xf32>
    "tpu.trace_stop"() : () -> ()
    %70 = tpu.reciprocal %66 {approx = true} : vector<4x8x1xf32> -> vector<4x8x1xf32>
    %71 = vector.broadcast %70 : vector<4x8x1xf32> to vector<4x8x128xf32>
    %72 = arith.mulf %69, %71 : vector<4x8x128xf32>
    %c0_33 = arith.constant 0 : index
    %c0_34 = arith.constant 0 : index
    %73 = vector.load %arg10[%c0_33, %c0_34] : memref<128x256xbf16, #tpu.memory_space<vmem>>, vector<128x256xbf16>
    %c0_35 = arith.constant 0 : index
    %c0_36 = arith.constant 0 : index
    %74 = vector.load %arg11[%c0_35, %c0_36] : memref<1x256xf32, #tpu.memory_space<vmem>>, vector<1x256xf32>
    %75 = vector.shape_cast %72 : vector<4x8x128xf32> to vector<32x128xf32>
    %76 = arith.truncf %75 : vector<32x128xf32> to vector<32x128xbf16>
    %cst_37 = arith.constant dense<0.000000e+00> : vector<32x256xf32>
    %77 = tpu.matmul %76, %73, %cst_37 {dimension_numbers = #tpu.dot_dimension_numbers<[1], [0], [0], [1], [0, 0, 1, 1], [], []>} : vector<32x128xbf16>, vector<128x256xbf16>, vector<32x256xf32> -> vector<32x256xf32>
    %78 = vector.broadcast %74 : vector<1x256xf32> to vector<32x256xf32>
    %79 = arith.addf %77, %78 : vector<32x256xf32>
    %cst_38 = arith.constant 0.000000e+00 : f32
    %80 = vector.broadcast %cst_38 : f32 to vector<32x256xf32>
    %81 = arith.maximumf %79, %80 : vector<32x256xf32>
    %82 = vector.shape_cast %81 : vector<32x256xf32> to vector<4x8x256xf32>
    %c0_39 = arith.constant 0 : index
    %c0_40 = arith.constant 0 : index
    %83 = vector.load %arg12[%c0_39, %c0_40] : memref<256x256xbf16, #tpu.memory_space<vmem>>, vector<256x256xbf16>
    %c0_41 = arith.constant 0 : index
    %c0_42 = arith.constant 0 : index
    %84 = vector.load %arg13[%c0_41, %c0_42] : memref<256x256xbf16, #tpu.memory_space<vmem>>, vector<256x256xbf16>
    %c0_43 = arith.constant 0 : index
    %c0_44 = arith.constant 0 : index
    %85 = vector.load %arg14[%c0_43, %c0_44] : memref<256x256xbf16, #tpu.memory_space<vmem>>, vector<256x256xbf16>
    %86 = vector.shape_cast %82 : vector<4x8x256xf32> to vector<32x256xf32>
    %87 = arith.truncf %86 : vector<32x256xf32> to vector<32x256xbf16>
    %cst_45 = arith.constant dense<0.000000e+00> : vector<32x256xf32>
    %88 = tpu.matmul %87, %83, %cst_45 {dimension_numbers = #tpu.dot_dimension_numbers<[1], [0], [0], [1], [0, 0, 1, 1], [], []>} : vector<32x256xbf16>, vector<256x256xbf16>, vector<32x256xf32> -> vector<32x256xf32>
    %89 = vector.shape_cast %88 : vector<32x256xf32> to vector<4x8x256xf32>
    %90 = vector.shape_cast %82 : vector<4x8x256xf32> to vector<32x256xf32>
    %91 = arith.truncf %90 : vector<32x256xf32> to vector<32x256xbf16>
    %cst_46 = arith.constant dense<0.000000e+00> : vector<32x256xf32>
    %92 = tpu.matmul %91, %84, %cst_46 {dimension_numbers = #tpu.dot_dimension_numbers<[1], [0], [0], [1], [0, 0, 1, 1], [], []>} : vector<32x256xbf16>, vector<256x256xbf16>, vector<32x256xf32> -> vector<32x256xf32>
    %93 = vector.shape_cast %92 : vector<32x256xf32> to vector<4x8x256xf32>
    %94 = vector.shape_cast %82 : vector<4x8x256xf32> to vector<32x256xf32>
    %95 = arith.truncf %94 : vector<32x256xf32> to vector<32x256xbf16>
    %cst_47 = arith.constant dense<0.000000e+00> : vector<32x256xf32>
    %96 = tpu.matmul %95, %85, %cst_47 {dimension_numbers = #tpu.dot_dimension_numbers<[1], [0], [0], [1], [0, 0, 1, 1], [], []>} : vector<32x256xbf16>, vector<256x256xbf16>, vector<32x256xf32> -> vector<32x256xf32>
    %97 = vector.shape_cast %96 : vector<32x256xf32> to vector<4x8x256xf32>
    %98 = arith.truncf %89 : vector<4x8x256xf32> to vector<4x8x256xbf16>
    %99 = arith.truncf %93 : vector<4x8x256xf32> to vector<4x8x256xbf16>
    "tpu.trace_start"() <{level = 10 : i32, message = "bqd,bkd->bqk"}> : () -> ()
    %cst_48 = arith.constant dense<0.000000e+00> : vector<4x8x8xf32>
    %100 = tpu.matmul %98, %99, %cst_48 {dimension_numbers = #tpu.dot_dimension_numbers<[2], [2], [1], [1], [0, 0, 0, 1, 1, 1], [0], [0]>} : vector<4x8x256xbf16>, vector<4x8x256xbf16>, vector<4x8x8xf32> -> vector<4x8x8xf32>
    "tpu.trace_stop"() : () -> ()
    %cst_49 = arith.constant dense<0xFF800000> : vector<4x8xf32>
    %101 = vector.multi_reduction <maximumf>, %100, %cst_49 [2] : vector<4x8x8xf32> to vector<4x8xf32>
    %102 = vector.shape_cast %101 : vector<4x8xf32> to vector<4x8x1xf32>
    %103 = vector.broadcast %102 : vector<4x8x1xf32> to vector<4x8x8xf32>
    %104 = arith.subf %100, %103 : vector<4x8x8xf32>
    %105 = math.exp %104 : vector<4x8x8xf32>
    %cst_50 = arith.constant dense<0.000000e+00> : vector<4x8xf32>
    %106 = vector.multi_reduction <add>, %105, %cst_50 [2] : vector<4x8x8xf32> to vector<4x8xf32>
    %107 = vector.shape_cast %106 : vector<4x8xf32> to vector<4x8x1xf32>
    %108 = arith.truncf %105 : vector<4x8x8xf32> to vector<4x8x8xbf16>
    %109 = arith.truncf %97 : vector<4x8x256xf32> to vector<4x8x256xbf16>
    "tpu.trace_start"() <{level = 10 : i32, message = "bqk,bkd->bqd"}> : () -> ()
    %cst_51 = arith.constant dense<0.000000e+00> : vector<4x8x256xf32>
    %110 = tpu.matmul %108, %109, %cst_51 {dimension_numbers = #tpu.dot_dimension_numbers<[2], [1], [1], [2], [0, 0, 0, 1, 1, 2], [0], [0]>} : vector<4x8x8xbf16>, vector<4x8x256xbf16>, vector<4x8x256xf32> -> vector<4x8x256xf32>
    "tpu.trace_stop"() : () -> ()
    %111 = tpu.reciprocal %107 {approx = true} : vector<4x8x1xf32> -> vector<4x8x1xf32>
    %112 = vector.broadcast %111 : vector<4x8x1xf32> to vector<4x8x256xf32>
    %113 = arith.mulf %110, %112 : vector<4x8x256xf32>
    %c0_52 = arith.constant 0 : index
    %c0_53 = arith.constant 0 : index
    %114 = vector.load %arg15[%c0_52, %c0_53] : memref<256x128xbf16, #tpu.memory_space<vmem>>, vector<256x128xbf16>
    %c0_54 = arith.constant 0 : index
    %c0_55 = arith.constant 0 : index
    %115 = vector.load %arg16[%c0_54, %c0_55] : memref<1x128xf32, #tpu.memory_space<vmem>>, vector<1x128xf32>
    %116 = vector.shape_cast %113 : vector<4x8x256xf32> to vector<32x256xf32>
    %117 = arith.truncf %116 : vector<32x256xf32> to vector<32x256xbf16>
    %cst_56 = arith.constant dense<0.000000e+00> : vector<32x128xf32>
    %118 = tpu.matmul %117, %114, %cst_56 {dimension_numbers = #tpu.dot_dimension_numbers<[1], [0], [0], [1], [0, 0, 1, 1], [], []>} : vector<32x256xbf16>, vector<256x128xbf16>, vector<32x128xf32> -> vector<32x128xf32>
    %119 = vector.broadcast %115 : vector<1x128xf32> to vector<32x128xf32>
    %120 = arith.addf %118, %119 : vector<32x128xf32>
    %cst_57 = arith.constant 0.000000e+00 : f32
    %121 = vector.broadcast %cst_57 : f32 to vector<32x128xf32>
    %122 = arith.maximumf %120, %121 : vector<32x128xf32>
    %123 = vector.shape_cast %122 : vector<32x128xf32> to vector<4x8x128xf32>
    %c0_58 = arith.constant 0 : index
    %c0_59 = arith.constant 0 : index
    %c0_60 = arith.constant 0 : index
    %124 = vector.load %arg17[%c0_58, %c0_59, %c0_60] : memref<4x8x128xf32, #tpu.memory_space<vmem>>, vector<4x8x128xf32>
    tpu.vector_store %arg17[%c0_58, %c0_59, %c0_60], %123 {strides = array<i32>} : memref<4x8x128xf32, #tpu.memory_space<vmem>>, vector<4x8x128xf32>,
    return
  }
  func.func @transform_0(%arg0: i32) -> (i32, i32, i32) {
    %c0_i32 = arith.constant 0 : i32
    %c0_i32_0 = arith.constant 0 : i32
    %c0_i32_1 = arith.constant 0 : i32
    return %arg0, %c0_i32, %c0_i32_0 : i32, i32, i32
  }
  func.func @transform_1(%arg0: i32) -> (i32, i32) {
    %c0_i32 = arith.constant 0 : i32
    %c0_i32_0 = arith.constant 0 : i32
    %c0_i32_1 = arith.constant 0 : i32
    return %c0_i32, %c0_i32_0 : i32, i32
  }
  func.func @transform_2(%arg0: i32) -> (i32, i32) {
    %c0_i32 = arith.constant 0 : i32
    %c0_i32_0 = arith.constant 0 : i32
    %c0_i32_1 = arith.constant 0 : i32
    return %c0_i32, %c0_i32_0 : i32, i32
  }
  func.func @transform_3(%arg0: i32) -> (i32, i32) {
    %c0_i32 = arith.constant 0 : i32
    %c0_i32_0 = arith.constant 0 : i32
    %c0_i32_1 = arith.constant 0 : i32
    return %c0_i32, %c0_i32_0 : i32, i32
  }
  func.func @transform_4(%arg0: i32) -> (i32, i32) {
    %c0_i32 = arith.constant 0 : i32
    %c0_i32_0 = arith.constant 0 : i32
    %c0_i32_1 = arith.constant 0 : i32
    return %c0_i32, %c0_i32_0 : i32, i32
  }
  func.func @transform_5(%arg0: i32) -> (i32, i32) {
    %c0_i32 = arith.constant 0 : i32
    %c0_i32_0 = arith.constant 0 : i32
    %c0_i32_1 = arith.constant 0 : i32
    return %c0_i32, %c0_i32_0 : i32, i32
  }
  func.func @transform_6(%arg0: i32) -> (i32, i32) {
    %c0_i32 = arith.constant 0 : i32
    %c0_i32_0 = arith.constant 0 : i32
    %c0_i32_1 = arith.constant 0 : i32
    return %c0_i32, %c0_i32_0 : i32, i32
  }
  func.func @transform_7(%arg0: i32) -> (i32, i32) {
    %c0_i32 = arith.constant 0 : i32
    %c0_i32_0 = arith.constant 0 : i32
    %c0_i32_1 = arith.constant 0 : i32
    return %c0_i32, %c0_i32_0 : i32, i32
  }
  func.func @transform_8(%arg0: i32) -> (i32, i32) {
    %c0_i32 = arith.constant 0 : i32
    %c0_i32_0 = arith.constant 0 : i32
    %c0_i32_1 = arith.constant 0 : i32
    return %c0_i32, %c0_i32_0 : i32, i32
  }
  func.func @transform_9(%arg0: i32) -> (i32, i32) {
    %c0_i32 = arith.constant 0 : i32
    %c0_i32_0 = arith.constant 0 : i32
    %c0_i32_1 = arith.constant 0 : i32
    return %c0_i32, %c0_i32_0 : i32, i32
  }
  func.func @transform_10(%arg0: i32) -> (i32, i32) {
    %c0_i32 = arith.constant 0 : i32
    %c0_i32_0 = arith.constant 0 : i32
    %c0_i32_1 = arith.constant 0 : i32
    return %c0_i32, %c0_i32_0 : i32, i32
  }
  func.func @transform_11(%arg0: i32) -> (i32, i32) {
    %c0_i32 = arith.constant 0 : i32
    %c0_i32_0 = arith.constant 0 : i32
    %c0_i32_1 = arith.constant 0 : i32
    return %c0_i32, %c0_i32_0 : i32, i32
  }
  func.func @transform_12(%arg0: i32) -> (i32, i32) {
    %c0_i32 = arith.constant 0 : i32
    %c0_i32_0 = arith.constant 0 : i32
    %c0_i32_1 = arith.constant 0 : i32
    return %c0_i32, %c0_i32_0 : i32, i32
  }
  func.func @transform_13(%arg0: i32) -> (i32, i32) {
    %c0_i32 = arith.constant 0 : i32
    %c0_i32_0 = arith.constant 0 : i32
    %c0_i32_1 = arith.constant 0 : i32
    return %c0_i32, %c0_i32_0 : i32, i32
  }
  func.func @transform_14(%arg0: i32) -> (i32, i32) {
    %c0_i32 = arith.constant 0 : i32
    %c0_i32_0 = arith.constant 0 : i32
    %c0_i32_1 = arith.constant 0 : i32
    return %c0_i32, %c0_i32_0 : i32, i32
  }
  func.func @transform_15(%arg0: i32) -> (i32, i32) {
    %c0_i32 = arith.constant 0 : i32
    %c0_i32_0 = arith.constant 0 : i32
    %c0_i32_1 = arith.constant 0 : i32
    return %c0_i32, %c0_i32_0 : i32, i32
  }
  func.func @transform_16(%arg0: i32) -> (i32, i32, i32) {
    %c0_i32 = arith.constant 0 : i32
    %c0_i32_0 = arith.constant 0 : i32
    %c0_i32_1 = arith.constant 0 : i32
    return %arg0, %c0_i32, %c0_i32_0 : i32, i32, i32
  }
}

</mosaic_0001>

<llo_original>
// kernel: fully_connected_network.1
$region0: #{fully_connected_network.1}
  #allocation0 [shape = 'u32[]', space=smem, size = 0x4, offset = 0x4, fixed_abs, tag = 'smem constant byte address 0x4 - core index']
  #allocation1 [shape = 'u32[144,128]{1,0:T(1,128)}', space=vmem, size = 0x12000, scoped, tag = 'internal scratch']
  %s0 = inlined_call_operand.vmem [shape: f32[8,8,128], index: 0, kind: input, shape index: {}]
  %s1 = inlined_call_operand.hbm [shape: bf16[128,128], index: 1, kind: input, shape index: {}]
  %s2 = inlined_call_operand.hbm [shape: bf16[128,128], index: 2, kind: input, shape index: {}]
  %s3 = inlined_call_operand.hbm [shape: bf16[128,128], index: 3, kind: input, shape index: {}]
  %s4 = inlined_call_operand.hbm [shape: bf16[128,128], index: 4, kind: input, shape index: {}]
  %s5 = inlined_call_operand.vmem [shape: f32[1,128], index: 5, kind: input, shape index: {}]
  %s6 = inlined_call_operand.hbm [shape: bf16[128,128], index: 6, kind: input, shape index: {}]
  %s7 = inlined_call_operand.hbm [shape: bf16[128,128], index: 7, kind: input, shape index: {}]
  %s8 = inlined_call_operand.hbm [shape: bf16[128,128], index: 8, kind: input, shape index: {}]
  %s9 = inlined_call_operand.vmem [shape: bf16[128,256], index: 9, kind: input, shape index: {}]
  %s10 = inlined_call_operand.vmem [shape: f32[1,256], index: 10, kind: input, shape index: {}]
  %s11 = inlined_call_operand.hbm [shape: bf16[256,256], index: 11, kind: input, shape index: {}]
  %s12 = inlined_call_operand.hbm [shape: bf16[256,256], index: 12, kind: input, shape index: {}]
  %s13 = inlined_call_operand.hbm [shape: bf16[256,256], index: 13, kind: input, shape index: {}]
  %s14 = inlined_call_operand.hbm [shape: bf16[256,128], index: 14, kind: input, shape index: {}]
  %s15 = inlined_call_operand.vmem [shape: f32[1,128], index: 15, kind: input, shape index: {}]
  %s16 = inlined_call_operand.hbm [shape: f32[8,8,128], index: 16, kind: output, shape index: {}]
  %s17 = sld [smem:[#allocation0]]
  $region141: #{fully_connected_network.1} parent=0
    _
  %s19 = ssub.s32 1, %s17
  %s20 = scalar_select 0, %s19, %s17
  $region1: #{fully_connected_network.1} parent=0
    #allocation2 [shape = 'u8[32768]{0}', space=vmem, size = 0x8000, scoped, tag = 'input window, operand 1, single buffered']
    #allocation3 [shape = 's32[2]{0}', space=sflag, size = 0x8, scoped, tag = 'scoped memory for fully_connected_network.1']
    #allocation4 [shape = 's32[2]{0}', space=sflag, size = 0x8, scoped, tag = 'scoped memory for fully_connected_network.1']
    #allocation5 [shape = 'u8[32768]{0}', space=vmem, size = 0x8000, scoped, tag = 'input window, operand 2, single buffered']
    #allocation6 [shape = 's32[1]{0}', space=sflag, size = 0x4, scoped, tag = 'scoped memory for fully_connected_network.1']
    #allocation7 [shape = 'u8[32768]{0}', space=vmem, size = 0x8000, scoped, tag = 'input window, operand 3, single buffered']
    #allocation8 [shape = 'u8[32768]{0}', space=vmem, size = 0x8000, scoped, tag = 'input window, operand 4, single buffered']
    #allocation9 [shape = 's32[1]{0}', space=sflag, size = 0x4, scoped, tag = 'scoped memory for fully_connected_network.1']
    #allocation10 [shape = 'u8[32768]{0}', space=vmem, size = 0x8000, scoped, tag = 'input window, operand 6, single buffered']
    #allocation11 [shape = 'u8[32768]{0}', space=vmem, size = 0x8000, scoped, tag = 'input window, operand 7, single buffered']
    #allocation12 [shape = 's32[1]{0}', space=sflag, size = 0x4, scoped, tag = 'scoped memory for fully_connected_network.1']
    #allocation13 [shape = 'u8[32768]{0}', space=vmem, size = 0x8000, scoped, tag = 'input window, operand 8, single buffered']
    #allocation14 [shape = 'u8[131072]{0}', space=vmem, size = 0x20000, scoped, tag = 'input window, operand 11, single buffered']
    #allocation15 [shape = 's32[1]{0}', space=sflag, size = 0x4, scoped, tag = 'scoped memory for fully_connected_network.1']
    #allocation16 [shape = 'u8[131072]{0}', space=vmem, size = 0x20000, scoped, tag = 'input window, operand 12, single buffered']
    #allocation17 [shape = 'u8[131072]{0}', space=vmem, size = 0x20000, scoped, tag = 'input window, operand 13, single buffered']
    #allocation18 [shape = 's32[1]{0}', space=sflag, size = 0x4, scoped, tag = 'scoped memory for fully_connected_network.1']
    #allocation19 [shape = 'u8[65536]{0}', space=vmem, size = 0x10000, scoped, tag = 'input window, operand 14, single buffered']
    #allocation20 [shape = 'u8[32768]{0}', space=vmem, size = 0x8000, scoped, tag = 'output window, operand 0']
    %21 = vsyncpa [#allocation3], 0
    %22 = vsyncpa [#allocation6], 0
    %23 = vsyncpa [#allocation9], 0
    %24 = vsyncpa [#allocation12], 0
    %25 = vsyncpa [#allocation15], 0
    %26 = vsyncpa [#allocation18], 0
    %27 = vsyncpa [#allocation4], 0
    %s28 = scalar_lea.sflag [#allocation4], 1
    %29 = vsyncpa %s28, 0
    loop: start=0, step=1, limit=4
    $region2: #{fully_connected_network.1} parent=1 // loop_pre_header
      _
    $region3: #{fully_connected_network.1} parent=1 // loop_header
      %s31 = sphi 0, %s35
      %p32 = scmp.ge.s32.totalorder %s31, 4
      %s41 = sphi 0, %s43
      %s44 = sphi 0, %s41
      %s45 = sphi 0, %s44
      %s61 = sphi 0, %s45
      %s65 = sphi 0, %s65
      %s67 = sphi 0, %s65
      %s68 = sphi 0, %s67
      %s82 = sphi 0, %s68
      %s86 = sphi 0, %s86
      %s88 = sphi 0, %s86
      %s89 = sphi 0, %s88
      %s103 = sphi 0, %s89
      %s107 = sphi 0, %s107
      %s109 = sphi 0, %s107
      %s110 = sphi 0, %s109
      %s124 = sphi 0, %s110
      %s128 = sphi 0, %s128
      %s130 = sphi 0, %s128
      %s131 = sphi 0, %s130
      %s145 = sphi 0, %s131
      %s149 = sphi 0, %s149
      %s151 = sphi 0, %s149
      %s152 = sphi 0, %s151
      %s166 = sphi 0, %s152
      %s170 = sphi 0, %s170
      %s172 = sphi 0, %s170
      %s173 = sphi 0, %s172
      %s187 = sphi 0, %s173
      %s191 = sphi 0, %s191
      %s193 = sphi 0, %s191
      %s194 = sphi 0, %s193
      %s208 = sphi 0, %s194
      %s212 = sphi 0, %s212
      %s214 = sphi 0, %s212
      %s215 = sphi 0, %s214
      %s229 = sphi 0, %s215
      %s233 = sphi 0, %s233
      %s235 = sphi 0, %s233
      %s236 = sphi 0, %s235
      %s250 = sphi 0, %s236
      %s254 = sphi 0, %s254
      %s256 = sphi 0, %s254
      %s257 = sphi 0, %s256
      %s271 = sphi 0, %s257
      %s275 = sphi 0, %s275
      %s277 = sphi 0, %s275
      %s278 = sphi 0, %s277
      %s292 = sphi 0, %s278
      %s296 = sphi 0, %s296
      %s298 = sphi 0, %s296
      %s299 = sphi 0, %s298
      %s313 = sphi 0, %s299
      %s317 = sphi 0, %s317
      %s319 = sphi 0, %s317
      %s320 = sphi 0, %s319
      %s334 = sphi 0, %s320
      %s338 = sphi 0, %s338
      %s340 = sphi 0, %s338
      %s341 = sphi 0, %s340
      %s355 = sphi 0, %s341
      %s359 = sphi 0, %s359
      %s361 = sphi 0, %s359
      %s362 = sphi 0, %s361
      %s376 = sphi 0, %s362
      %s382 = sphi 0, %s384
      %s385 = sphi 0, %s382
      %s386 = sphi 0, %s385
      %s402 = sphi 0, %s386
    $region4: #{fully_connected_network.1} parent=1 // loop_header_branch
      %34 = sbr.rel (%p32) target = $region8
    $region5: #{fully_connected_network.1} parent=1 // loop_body
      %s36 = ssub.s32 %s31, 1
      %s37 = ssub.s32 %s31, 2
      %s38 = sadd.s32 %s31, 1
      %s39 = ssub.s32 %s31, %s38
      %p40 = scmp.eq.s32.totalorder %s39, 0
      %s42 = sadd.s32 %s41, 1
      %s43 = scalar_select %p40, %s41, %s42
      %p46 = pneg %p40
      %p47 = scmp.eq.s32.totalorder %s31, 1
      %p48 = por %p46, %p47
      %p49 = scmp.ne.s32.totalorder %s41, %s44
      %p50 = scmp.eq.s32.totalorder %s31, 0
      %p51 = por %p49, %p50
      %p52 = scmp.ne.s32.totalorder %s41, %s44
      %p53 = scmp.eq.s32.totalorder %s36, 1
      %p54 = por %p52, %p53
      %p55 = scmp.ne.s32.totalorder %s44, %s45
      %p56 = scmp.eq.s32.totalorder %s36, 0
      %p57 = por %p55, %p56
      %p58 = scmp.ne.s32.totalorder %s44, %s45
      %p59 = scmp.eq.s32.totalorder %s37, 1
      %p60 = por %p58, %p59
      %p62 = scmp.ne.s32.totalorder %s45, %s61
      %p63 = scmp.eq.s32.totalorder %s37, 0
      %p64 = por %p62, %p63
      %s66 = sadd.s32 %s65, 1
      %p69 = scmp.eq.s32.totalorder %s31, 1
      %p70 = scmp.ne.s32.totalorder %s65, %s67
      %p71 = scmp.eq.s32.totalorder %s31, 0
      %p72 = por %p70, %p71
      %p73 = scmp.ne.s32.totalorder %s65, %s67
      %p74 = scmp.eq.s32.totalorder %s36, 1
      %p75 = por %p73, %p74
      %p76 = scmp.ne.s32.totalorder %s67, %s68
      %p77 = scmp.eq.s32.totalorder %s36, 0
      %p78 = por %p76, %p77
      %p79 = scmp.ne.s32.totalorder %s67, %s68
      %p80 = scmp.eq.s32.totalorder %s37, 1
      %p81 = por %p79, %p80
      %p83 = scmp.ne.s32.totalorder %s68, %s82
      %p84 = scmp.eq.s32.totalorder %s37, 0
      %p85 = por %p83, %p84
      %s87 = sadd.s32 %s86, 1
      %p90 = scmp.eq.s32.totalorder %s31, 1
      %p91 = scmp.ne.s32.totalorder %s86, %s88
      %p92 = scmp.eq.s32.totalorder %s31, 0
      %p93 = por %p91, %p92
      %p94 = scmp.ne.s32.totalorder %s86, %s88
      %p95 = scmp.eq.s32.totalorder %s36, 1
      %p96 = por %p94, %p95
      %p97 = scmp.ne.s32.totalorder %s88, %s89
      %p98 = scmp.eq.s32.totalorder %s36, 0
      %p99 = por %p97, %p98
      %p100 = scmp.ne.s32.totalorder %s88, %s89
      %p101 = scmp.eq.s32.totalorder %s37, 1
      %p102 = por %p100, %p101
      %p104 = scmp.ne.s32.totalorder %s89, %s103
      %p105 = scmp.eq.s32.totalorder %s37, 0
      %p106 = por %p104, %p105
      %s108 = sadd.s32 %s107, 1
      %p111 = scmp.eq.s32.totalorder %s31, 1
      %p112 = scmp.ne.s32.totalorder %s107, %s109
      %p113 = scmp.eq.s32.totalorder %s31, 0
      %p114 = por %p112, %p113
      %p115 = scmp.ne.s32.totalorder %s107, %s109
      %p116 = scmp.eq.s32.totalorder %s36, 1
      %p117 = por %p115, %p116
      %p118 = scmp.ne.s32.totalorder %s109, %s110
      %p119 = scmp.eq.s32.totalorder %s36, 0
      %p120 = por %p118, %p119
      %p121 = scmp.ne.s32.totalorder %s109, %s110
      %p122 = scmp.eq.s32.totalorder %s37, 1
      %p123 = por %p121, %p122
      %p125 = scmp.ne.s32.totalorder %s110, %s124
      %p126 = scmp.eq.s32.totalorder %s37, 0
      %p127 = por %p125, %p126
      %s129 = sadd.s32 %s128, 1
      %p132 = scmp.eq.s32.totalorder %s31, 1
      %p133 = scmp.ne.s32.totalorder %s128, %s130
      %p134 = scmp.eq.s32.totalorder %s31, 0
      %p135 = por %p133, %p134
      %p136 = scmp.ne.s32.totalorder %s128, %s130
      %p137 = scmp.eq.s32.totalorder %s36, 1
      %p138 = por %p136, %p137
      %p139 = scmp.ne.s32.totalorder %s130, %s131
      %p140 = scmp.eq.s32.totalorder %s36, 0
      %p141 = por %p139, %p140
      %p142 = scmp.ne.s32.totalorder %s130, %s131
      %p143 = scmp.eq.s32.totalorder %s37, 1
      %p144 = por %p142, %p143
      %p146 = scmp.ne.s32.totalorder %s131, %s145
      %p147 = scmp.eq.s32.totalorder %s37, 0
      %p148 = por %p146, %p147
      %s150 = sadd.s32 %s149, 1
      %p153 = scmp.eq.s32.totalorder %s31, 1
      %p154 = scmp.ne.s32.totalorder %s149, %s151
      %p155 = scmp.eq.s32.totalorder %s31, 0
      %p156 = por %p154, %p155
      %p157 = scmp.ne.s32.totalorder %s149, %s151
      %p158 = scmp.eq.s32.totalorder %s36, 1
      %p159 = por %p157, %p158
      %p160 = scmp.ne.s32.totalorder %s151, %s152
      %p161 = scmp.eq.s32.totalorder %s36, 0
      %p162 = por %p160, %p161
      %p163 = scmp.ne.s32.totalorder %s151, %s152
      %p164 = scmp.eq.s32.totalorder %s37, 1
      %p165 = por %p163, %p164
      %p167 = scmp.ne.s32.totalorder %s152, %s166
      %p168 = scmp.eq.s32.totalorder %s37, 0
      %p169 = por %p167, %p168
      %s171 = sadd.s32 %s170, 1
      %p174 = scmp.eq.s32.totalorder %s31, 1
      %p175 = scmp.ne.s32.totalorder %s170, %s172
      %p176 = scmp.eq.s32.totalorder %s31, 0
      %p177 = por %p175, %p176
      %p178 = scmp.ne.s32.totalorder %s170, %s172
      %p179 = scmp.eq.s32.totalorder %s36, 1
      %p180 = por %p178, %p179
      %p181 = scmp.ne.s32.totalorder %s172, %s173
      %p182 = scmp.eq.s32.totalorder %s36, 0
      %p183 = por %p181, %p182
      %p184 = scmp.ne.s32.totalorder %s172, %s173
      %p185 = scmp.eq.s32.totalorder %s37, 1
      %p186 = por %p184, %p185
      %p188 = scmp.ne.s32.totalorder %s173, %s187
      %p189 = scmp.eq.s32.totalorder %s37, 0
      %p190 = por %p188, %p189
      %s192 = sadd.s32 %s191, 1
      %p195 = scmp.eq.s32.totalorder %s31, 1
      %p196 = scmp.ne.s32.totalorder %s191, %s193
      %p197 = scmp.eq.s32.totalorder %s31, 0
      %p198 = por %p196, %p197
      %p199 = scmp.ne.s32.totalorder %s191, %s193
      %p200 = scmp.eq.s32.totalorder %s36, 1
      %p201 = por %p199, %p200
      %p202 = scmp.ne.s32.totalorder %s193, %s194
      %p203 = scmp.eq.s32.totalorder %s36, 0
      %p204 = por %p202, %p203
      %p205 = scmp.ne.s32.totalorder %s193, %s194
      %p206 = scmp.eq.s32.totalorder %s37, 1
      %p207 = por %p205, %p206
      %p209 = scmp.ne.s32.totalorder %s194, %s208
      %p210 = scmp.eq.s32.totalorder %s37, 0
      %p211 = por %p209, %p210
      %s213 = sadd.s32 %s212, 1
      %p216 = scmp.eq.s32.totalorder %s31, 1
      %p217 = scmp.ne.s32.totalorder %s212, %s214
      %p218 = scmp.eq.s32.totalorder %s31, 0
      %p219 = por %p217, %p218
      %p220 = scmp.ne.s32.totalorder %s212, %s214
      %p221 = scmp.eq.s32.totalorder %s36, 1
      %p222 = por %p220, %p221
      %p223 = scmp.ne.s32.totalorder %s214, %s215
      %p224 = scmp.eq.s32.totalorder %s36, 0
      %p225 = por %p223, %p224
      %p226 = scmp.ne.s32.totalorder %s214, %s215
      %p227 = scmp.eq.s32.totalorder %s37, 1
      %p228 = por %p226, %p227
      %p230 = scmp.ne.s32.totalorder %s215, %s229
      %p231 = scmp.eq.s32.totalorder %s37, 0
      %p232 = por %p230, %p231
      %s234 = sadd.s32 %s233, 1
      %p237 = scmp.eq.s32.totalorder %s31, 1
      %p238 = scmp.ne.s32.totalorder %s233, %s235
      %p239 = scmp.eq.s32.totalorder %s31, 0
      %p240 = por %p238, %p239
      %p241 = scmp.ne.s32.totalorder %s233, %s235
      %p242 = scmp.eq.s32.totalorder %s36, 1
      %p243 = por %p241, %p242
      %p244 = scmp.ne.s32.totalorder %s235, %s236
      %p245 = scmp.eq.s32.totalorder %s36, 0
      %p246 = por %p244, %p245
      %p247 = scmp.ne.s32.totalorder %s235, %s236
      %p248 = scmp.eq.s32.totalorder %s37, 1
      %p249 = por %p247, %p248
      %p251 = scmp.ne.s32.totalorder %s236, %s250
      %p252 = scmp.eq.s32.totalorder %s37, 0
      %p253 = por %p251, %p252
      %s255 = sadd.s32 %s254, 1
      %p258 = scmp.eq.s32.totalorder %s31, 1
      %p259 = scmp.ne.s32.totalorder %s254, %s256
      %p260 = scmp.eq.s32.totalorder %s31, 0
      %p261 = por %p259, %p260
      %p262 = scmp.ne.s32.totalorder %s254, %s256
      %p263 = scmp.eq.s32.totalorder %s36, 1
      %p264 = por %p262, %p263
      %p265 = scmp.ne.s32.totalorder %s256, %s257
      %p266 = scmp.eq.s32.totalorder %s36, 0
      %p267 = por %p265, %p266
      %p268 = scmp.ne.s32.totalorder %s256, %s257
      %p269 = scmp.eq.s32.totalorder %s37, 1
      %p270 = por %p268, %p269
      %p272 = scmp.ne.s32.totalorder %s257, %s271
      %p273 = scmp.eq.s32.totalorder %s37, 0
      %p274 = por %p272, %p273
      %s276 = sadd.s32 %s275, 1
      %p279 = scmp.eq.s32.totalorder %s31, 1
      %p280 = scmp.ne.s32.totalorder %s275, %s277
      %p281 = scmp.eq.s32.totalorder %s31, 0
      %p282 = por %p280, %p281
      %p283 = scmp.ne.s32.totalorder %s275, %s277
      %p284 = scmp.eq.s32.totalorder %s36, 1
      %p285 = por %p283, %p284
      %p286 = scmp.ne.s32.totalorder %s277, %s278
      %p287 = scmp.eq.s32.totalorder %s36, 0
      %p288 = por %p286, %p287
      %p289 = scmp.ne.s32.totalorder %s277, %s278
      %p290 = scmp.eq.s32.totalorder %s37, 1
      %p291 = por %p289, %p290
      %p293 = scmp.ne.s32.totalorder %s278, %s292
      %p294 = scmp.eq.s32.totalorder %s37, 0
      %p295 = por %p293, %p294
      %s297 = sadd.s32 %s296, 1
      %p300 = scmp.eq.s32.totalorder %s31, 1
      %p301 = scmp.ne.s32.totalorder %s296, %s298
      %p302 = scmp.eq.s32.totalorder %s31, 0
      %p303 = por %p301, %p302
      %p304 = scmp.ne.s32.totalorder %s296, %s298
      %p305 = scmp.eq.s32.totalorder %s36, 1
      %p306 = por %p304, %p305
      %p307 = scmp.ne.s32.totalorder %s298, %s299
      %p308 = scmp.eq.s32.totalorder %s36, 0
      %p309 = por %p307, %p308
      %p310 = scmp.ne.s32.totalorder %s298, %s299
      %p311 = scmp.eq.s32.totalorder %s37, 1
      %p312 = por %p310, %p311
      %p314 = scmp.ne.s32.totalorder %s299, %s313
      %p315 = scmp.eq.s32.totalorder %s37, 0
      %p316 = por %p314, %p315
      %s318 = sadd.s32 %s317, 1
      %p321 = scmp.eq.s32.totalorder %s31, 1
      %p322 = scmp.ne.s32.totalorder %s317, %s319
      %p323 = scmp.eq.s32.totalorder %s31, 0
      %p324 = por %p322, %p323
      %p325 = scmp.ne.s32.totalorder %s317, %s319
      %p326 = scmp.eq.s32.totalorder %s36, 1
      %p327 = por %p325, %p326
      %p328 = scmp.ne.s32.totalorder %s319, %s320
      %p329 = scmp.eq.s32.totalorder %s36, 0
      %p330 = por %p328, %p329
      %p331 = scmp.ne.s32.totalorder %s319, %s320
      %p332 = scmp.eq.s32.totalorder %s37, 1
      %p333 = por %p331, %p332
      %p335 = scmp.ne.s32.totalorder %s320, %s334
      %p336 = scmp.eq.s32.totalorder %s37, 0
      %p337 = por %p335, %p336
      %s339 = sadd.s32 %s338, 1
      %p342 = scmp.eq.s32.totalorder %s31, 1
      %p343 = scmp.ne.s32.totalorder %s338, %s340
      %p344 = scmp.eq.s32.totalorder %s31, 0
      %p345 = por %p343, %p344
      %p346 = scmp.ne.s32.totalorder %s338, %s340
      %p347 = scmp.eq.s32.totalorder %s36, 1
      %p348 = por %p346, %p347
      %p349 = scmp.ne.s32.totalorder %s340, %s341
      %p350 = scmp.eq.s32.totalorder %s36, 0
      %p351 = por %p349, %p350
      %p352 = scmp.ne.s32.totalorder %s340, %s341
      %p353 = scmp.eq.s32.totalorder %s37, 1
      %p354 = por %p352, %p353
      %p356 = scmp.ne.s32.totalorder %s341, %s355
      %p357 = scmp.eq.s32.totalorder %s37, 0
      %p358 = por %p356, %p357
      %s360 = sadd.s32 %s359, 1
      %p363 = scmp.eq.s32.totalorder %s31, 1
      %p364 = scmp.ne.s32.totalorder %s359, %s361
      %p365 = scmp.eq.s32.totalorder %s31, 0
      %p366 = por %p364, %p365
      %p367 = scmp.ne.s32.totalorder %s359, %s361
      %p368 = scmp.eq.s32.totalorder %s36, 1
      %p369 = por %p367, %p368
      %p370 = scmp.ne.s32.totalorder %s361, %s362
      %p371 = scmp.eq.s32.totalorder %s36, 0
      %p372 = por %p370, %p371
      %p373 = scmp.ne.s32.totalorder %s361, %s362
      %p374 = scmp.eq.s32.totalorder %s37, 1
      %p375 = por %p373, %p374
      %p377 = scmp.ne.s32.totalorder %s362, %s376
      %p378 = scmp.eq.s32.totalorder %s37, 0
      %p379 = por %p377, %p378
      %s380 = ssub.s32 %s31, %s38
      %p381 = scmp.eq.s32.totalorder %s380, 0
      %s383 = sadd.s32 %s382, 1
      %s384 = scalar_select %p381, %s382, %s383
      %p387 = pneg %p381
      %p388 = scmp.eq.s32.totalorder %s31, 1
      %p389 = por %p387, %p388
      %p390 = scmp.ne.s32.totalorder %s382, %s385
      %p391 = scmp.eq.s32.totalorder %s31, 0
      %p392 = por %p390, %p391
      %p393 = scmp.ne.s32.totalorder %s382, %s385
      %p394 = scmp.eq.s32.totalorder %s36, 1
      %p395 = por %p393, %p394
      %p396 = scmp.ne.s32.totalorder %s385, %s386
      %p397 = scmp.eq.s32.totalorder %s36, 0
      %p398 = por %p396, %p397
      %p399 = scmp.ne.s32.totalorder %s385, %s386
      %p400 = scmp.eq.s32.totalorder %s37, 1
      %p401 = por %p399, %p400
      %p403 = scmp.ne.s32.totalorder %s386, %s402
      %p404 = scmp.eq.s32.totalorder %s37, 0
      %p405 = por %p403, %p404
      %p406 = scmp.le.s32.totalorder 1, %s31
      %p407 = scmp.lt.s32.totalorder %s31, 3
      %p408 = pnand %p406, %p407
      %p409 = pneg %p408
      // Predicated region
      $region9: #{fully_connected_network.1} parent=5 // pred_check
        _
      $region10: #{fully_connected_network.1} parent=5 // pred_check_branch
        %411 = sbr.rel (%p408) target = $region12
      $region11: #{fully_connected_network.1} parent=5 // pred_region
        %s412 = ssub.s32 %s31, 1
        // Predicated region
        $region13: #{fully_connected_network.1} parent=11 // pred_check
          %p413 = pneg %p78
        $region14: #{fully_connected_network.1} parent=11 // pred_check_branch
          %415 = sbr.rel (%p413) target = $region16
        $region15: #{fully_connected_network.1} parent=11 // pred_region
          %s417 = ssub.s32 1024, 1024
          %418 = vsyncadd [#allocation3], %s417
          %s419 = sshll.u32 [#allocation2], 4
          %s420 = int_to_ptr.vmem [resolvable:$true] %s419
          %425 = dma.hbm_to_vmem [thread:$0]  %s1, 1024, %s420, [#allocation3], 64, 64, 4
        $region16: #{fully_connected_network.1} parent=11 // pred_fallthru
          _
        // Predicated region
        $region17: #{fully_connected_network.1} parent=11 // pred_check
          %p426 = pneg %p99
        $region18: #{fully_connected_network.1} parent=11 // pred_check_branch
          %428 = sbr.rel (%p426) target = $region20
        $region19: #{fully_connected_network.1} parent=11 // pred_region
          %s430 = ssub.s32 1024, 1024
          %431 = vsyncadd [#allocation6], %s430
          %s432 = sshll.u32 [#allocation5], 4
          %s433 = int_to_ptr.vmem [resolvable:$true] %s432
          %438 = dma.hbm_to_vmem [thread:$0]  %s2, 1024, %s433, [#allocation6], 64, 64, 4
        $region20: #{fully_connected_network.1} parent=11 // pred_fallthru
          _
        // Predicated region
        $region21: #{fully_connected_network.1} parent=11 // pred_check
          %p439 = pneg %p120
        $region22: #{fully_connected_network.1} parent=11 // pred_check_branch
          %441 = sbr.rel (%p439) target = $region24
        $region23: #{fully_connected_network.1} parent=11 // pred_region
          %s443 = ssub.s32 1024, 1024
          %444 = vsyncadd [#allocation6], %s443
          %s445 = sshll.u32 [#allocation7], 4
          %s446 = int_to_ptr.vmem [resolvable:$true] %s445
          %451 = dma.hbm_to_vmem [thread:$0]  %s3, 1024, %s446, [#allocation6], 64, 64, 4
        $region24: #{fully_connected_network.1} parent=11 // pred_fallthru
          _
        // Predicated region
        $region25: #{fully_connected_network.1} parent=11 // pred_check
          %p452 = pneg %p141
        $region26: #{fully_connected_network.1} parent=11 // pred_check_branch
          %454 = sbr.rel (%p452) target = $region28
        $region27: #{fully_connected_network.1} parent=11 // pred_region
          %s456 = ssub.s32 1024, 1024
          %457 = vsyncadd [#allocation9], %s456
          %s458 = sshll.u32 [#allocation8], 4
          %s459 = int_to_ptr.vmem [resolvable:$true] %s458
          %464 = dma.hbm_to_vmem [thread:$0]  %s4, 1024, %s459, [#allocation9], 64, 64, 4
        $region28: #{fully_connected_network.1} parent=11 // pred_fallthru
          _
        // Predicated region
        $region29: #{fully_connected_network.1} parent=11 // pred_check
          %p465 = pneg %p162
        $region30: #{fully_connected_network.1} parent=11 // pred_check_branch
          %467 = sbr.rel (%p465) target = $region32
        $region31: #{fully_connected_network.1} parent=11 // pred_region
          _
        $region32: #{fully_connected_network.1} parent=11 // pred_fallthru
          _
        // Predicated region
        $region33: #{fully_connected_network.1} parent=11 // pred_check
          %p468 = pneg %p183
        $region34: #{fully_connected_network.1} parent=11 // pred_check_branch
          %470 = sbr.rel (%p468) target = $region36
        $region35: #{fully_connected_network.1} parent=11 // pred_region
          %s472 = ssub.s32 1024, 1024
          %473 = vsyncadd [#allocation9], %s472
          %s474 = sshll.u32 [#allocation10], 4
          %s475 = int_to_ptr.vmem [resolvable:$true] %s474
          %480 = dma.hbm_to_vmem [thread:$0]  %s6, 1024, %s475, [#allocation9], 64, 64, 4
        $region36: #{fully_connected_network.1} parent=11 // pred_fallthru
          _
        // Predicated region
        $region37: #{fully_connected_network.1} parent=11 // pred_check
          %p481 = pneg %p204
        $region38: #{fully_connected_network.1} parent=11 // pred_check_branch
          %483 = sbr.rel (%p481) target = $region40
        $region39: #{fully_connected_network.1} parent=11 // pred_region
          %s485 = ssub.s32 1024, 1024
          %486 = vsyncadd [#allocation12], %s485
          %s487 = sshll.u32 [#allocation11], 4
          %s488 = int_to_ptr.vmem [resolvable:$true] %s487
          %493 = dma.hbm_to_vmem [thread:$0]  %s7, 1024, %s488, [#allocation12], 64, 64, 4
        $region40: #{fully_connected_network.1} parent=11 // pred_fallthru
          _
        // Predicated region
        $region41: #{fully_connected_network.1} parent=11 // pred_check
          %p494 = pneg %p225
        $region42: #{fully_connected_network.1} parent=11 // pred_check_branch
          %496 = sbr.rel (%p494) target = $region44
        $region43: #{fully_connected_network.1} parent=11 // pred_region
          %s498 = ssub.s32 1024, 1024
          %499 = vsyncadd [#allocation12], %s498
          %s500 = sshll.u32 [#allocation13], 4
          %s501 = int_to_ptr.vmem [resolvable:$true] %s500
          %506 = dma.hbm_to_vmem [thread:$0]  %s8, 1024, %s501, [#allocation12], 64, 64, 4
        $region44: #{fully_connected_network.1} parent=11 // pred_fallthru
          _
        // Predicated region
        $region45: #{fully_connected_network.1} parent=11 // pred_check
          %p507 = pneg %p246
        $region46: #{fully_connected_network.1} parent=11 // pred_check_branch
          %509 = sbr.rel (%p507) target = $region48
        $region47: #{fully_connected_network.1} parent=11 // pred_region
          _
        $region48: #{fully_connected_network.1} parent=11 // pred_fallthru
          _
        // Predicated region
        $region49: #{fully_connected_network.1} parent=11 // pred_check
          %p510 = pneg %p267
        $region50: #{fully_connected_network.1} parent=11 // pred_check_branch
          %512 = sbr.rel (%p510) target = $region52
        $region51: #{fully_connected_network.1} parent=11 // pred_region
          _
        $region52: #{fully_connected_network.1} parent=11 // pred_fallthru
          _
        // Predicated region
        $region53: #{fully_connected_network.1} parent=11 // pred_check
          %p513 = pneg %p288
        $region54: #{fully_connected_network.1} parent=11 // pred_check_branch
          %515 = sbr.rel (%p513) target = $region56
        $region55: #{fully_connected_network.1} parent=11 // pred_region
          %s517 = ssub.s32 4096, 4096
          %518 = vsyncadd [#allocation15], %s517
          %s519 = sshll.u32 [#allocation14], 4
          %s520 = int_to_ptr.vmem [resolvable:$true] %s519
          %525 = dma.hbm_to_vmem [thread:$0]  %s11, 4096, %s520, [#allocation15], 128, 128, 8
        $region56: #{fully_connected_network.1} parent=11 // pred_fallthru
          _
        // Predicated region
        $region57: #{fully_connected_network.1} parent=11 // pred_check
          %p526 = pneg %p309
        $region58: #{fully_connected_network.1} parent=11 // pred_check_branch
          %528 = sbr.rel (%p526) target = $region60
        $region59: #{fully_connected_network.1} parent=11 // pred_region
          %s530 = ssub.s32 4096, 4096
          %531 = vsyncadd [#allocation15], %s530
          %s532 = sshll.u32 [#allocation16], 4
          %s533 = int_to_ptr.vmem [resolvable:$true] %s532
          %538 = dma.hbm_to_vmem [thread:$0]  %s12, 4096, %s533, [#allocation15], 128, 128, 8
        $region60: #{fully_connected_network.1} parent=11 // pred_fallthru
          _
        // Predicated region
        $region61: #{fully_connected_network.1} parent=11 // pred_check
          %p539 = pneg %p330
        $region62: #{fully_connected_network.1} parent=11 // pred_check_branch
          %541 = sbr.rel (%p539) target = $region64
        $region63: #{fully_connected_network.1} parent=11 // pred_region
          %s543 = ssub.s32 4096, 4096
          %544 = vsyncadd [#allocation18], %s543
          %s545 = sshll.u32 [#allocation17], 4
          %s546 = int_to_ptr.vmem [resolvable:$true] %s545
          %551 = dma.hbm_to_vmem [thread:$0]  %s13, 4096, %s546, [#allocation18], 128, 128, 8
        $region64: #{fully_connected_network.1} parent=11 // pred_fallthru
          _
        // Predicated region
        $region65: #{fully_connected_network.1} parent=11 // pred_check
          %p552 = pneg %p351
        $region66: #{fully_connected_network.1} parent=11 // pred_check_branch
          %554 = sbr.rel (%p552) target = $region68
        $region67: #{fully_connected_network.1} parent=11 // pred_region
          %s556 = ssub.s32 2048, 2048
          %557 = vsyncadd [#allocation18], %s556
          %s558 = sshll.u32 [#allocation19], 4
          %s559 = int_to_ptr.vmem [resolvable:$true] %s558
          %564 = dma.hbm_to_vmem [thread:$0]  %s14, 2048, %s559, [#allocation18], 64, 64, 4
        $region68: #{fully_connected_network.1} parent=11 // pred_fallthru
          _
        // Predicated region
        $region69: #{fully_connected_network.1} parent=11 // pred_check
          %p565 = pneg %p372
        $region70: #{fully_connected_network.1} parent=11 // pred_check_branch
          %567 = sbr.rel (%p565) target = $region72
        $region71: #{fully_connected_network.1} parent=11 // pred_region
          _
        $region72: #{fully_connected_network.1} parent=11 // pred_fallthru
          _
      $region12: #{fully_connected_network.1} parent=5 // pred_fallthru
        _
      %p568 = scmp.lt.s32.totalorder %s31, 2
      // Predicated region
      $region73: #{fully_connected_network.1} parent=5 // pred_check
        %p569 = pneg %p568
      $region74: #{fully_connected_network.1} parent=5 // pred_check_branch
        %571 = sbr.rel (%p569) target = $region76
      $region75: #{fully_connected_network.1} parent=5 // pred_region
        // Predicated region
        $region77: #{fully_connected_network.1} parent=75 // pred_check
          %p572 = pneg %p51
        $region78: #{fully_connected_network.1} parent=75 // pred_check_branch
          %574 = sbr.rel (%p572) target = $region80
        $region79: #{fully_connected_network.1} parent=75 // pred_region
          %s575 = smul.u32 4, %s31
          %p576 = scmp.lt.s32.totalorder %s575, 7
          %s577 = scalar_select %p576, %s575, 7
          %s578 = smul.addr %s577, 8
          %s579 = scalar_lea.vmem %s0, %s578
          %s580 = smul.u32 4, %s31
        $region80: #{fully_connected_network.1} parent=75 // pred_fallthru
          _
      $region76: #{fully_connected_network.1} parent=5 // pred_fallthru
        _
      %p581 = scmp.le.s32.totalorder 1, %s31
      %p582 = scmp.lt.s32.totalorder %s31, 3
      %p583 = pnand %p581, %p582
      %p584 = pneg %p583
      // Predicated region
      $region81: #{fully_connected_network.1} parent=5 // pred_check
        _
      $region82: #{fully_connected_network.1} parent=5 // pred_check_branch
        %586 = sbr.rel (%p583) target = $region84
      $region83: #{fully_connected_network.1} parent=5 // pred_region
        %s587 = ssub.s32 %s31, 1
        // Predicated region
        $region85: #{fully_connected_network.1} parent=83 // pred_check
          %p588 = pneg %p78
        $region86: #{fully_connected_network.1} parent=83 // pred_check_branch
          %590 = sbr.rel (%p588) target = $region88
        $region87: #{fully_connected_network.1} parent=83 // pred_region
          %591 = dma.done [#allocation3], 1024
        $region88: #{fully_connected_network.1} parent=83 // pred_fallthru
          _
        // Predicated region
        $region89: #{fully_connected_network.1} parent=83 // pred_check
          %p592 = pneg %p99
        $region90: #{fully_connected_network.1} parent=83 // pred_check_branch
          %594 = sbr.rel (%p592) target = $region92
        $region91: #{fully_connected_network.1} parent=83 // pred_region
          %595 = dma.done [#allocation6], 1024
        $region92: #{fully_connected_network.1} parent=83 // pred_fallthru
          _
        // Predicated region
        $region93: #{fully_connected_network.1} parent=83 // pred_check
          %p596 = pneg %p120
        $region94: #{fully_connected_network.1} parent=83 // pred_check_branch
          %598 = sbr.rel (%p596) target = $region96
        $region95: #{fully_connected_network.1} parent=83 // pred_region
          %599 = dma.done [#allocation6], 1024
        $region96: #{fully_connected_network.1} parent=83 // pred_fallthru
          _
        // Predicated region
        $region97: #{fully_connected_network.1} parent=83 // pred_check
          %p600 = pneg %p141
        $region98: #{fully_connected_network.1} parent=83 // pred_check_branch
          %602 = sbr.rel (%p600) target = $region100
        $region99: #{fully_connected_network.1} parent=83 // pred_region
          %603 = dma.done [#allocation9], 1024
        $region100: #{fully_connected_network.1} parent=83 // pred_fallthru
          _
        // Predicated region
        $region101: #{fully_connected_network.1} parent=83 // pred_check
          %p604 = pneg %p183
        $region102: #{fully_connected_network.1} parent=83 // pred_check_branch
          %606 = sbr.rel (%p604) target = $region104
        $region103: #{fully_connected_network.1} parent=83 // pred_region
          %607 = dma.done [#allocation9], 1024
        $region104: #{fully_connected_network.1} parent=83 // pred_fallthru
          _
        // Predicated region
        $region105: #{fully_connected_network.1} parent=83 // pred_check
          %p608 = pneg %p204
        $region106: #{fully_connected_network.1} parent=83 // pred_check_branch
          %610 = sbr.rel (%p608) target = $region108
        $region107: #{fully_connected_network.1} parent=83 // pred_region
          %611 = dma.done [#allocation12], 1024
        $region108: #{fully_connected_network.1} parent=83 // pred_fallthru
          _
        // Predicated region
        $region109: #{fully_connected_network.1} parent=83 // pred_check
          %p612 = pneg %p225
        $region110: #{fully_connected_network.1} parent=83 // pred_check_branch
          %614 = sbr.rel (%p612) target = $region112
        $region111: #{fully_connected_network.1} parent=83 // pred_region
          %615 = dma.done [#allocation12], 1024
        $region112: #{fully_connected_network.1} parent=83 // pred_fallthru
          _
        // Predicated region
        $region113: #{fully_connected_network.1} parent=83 // pred_check
          %p616 = pneg %p288
        $region114: #{fully_connected_network.1} parent=83 // pred_check_branch
          %618 = sbr.rel (%p616) target = $region116
        $region115: #{fully_connected_network.1} parent=83 // pred_region
          %619 = dma.done [#allocation15], 4096
        $region116: #{fully_connected_network.1} parent=83 // pred_fallthru
          _
        // Predicated region
        $region117: #{fully_connected_network.1} parent=83 // pred_check
          %p620 = pneg %p309
        $region118: #{fully_connected_network.1} parent=83 // pred_check_branch
          %622 = sbr.rel (%p620) target = $region120
        $region119: #{fully_connected_network.1} parent=83 // pred_region
          %623 = dma.done [#allocation15], 4096
        $region120: #{fully_connected_network.1} parent=83 // pred_fallthru
          _
        // Predicated region
        $region121: #{fully_connected_network.1} parent=83 // pred_check
          %p624 = pneg %p330
        $region122: #{fully_connected_network.1} parent=83 // pred_check_branch
          %626 = sbr.rel (%p624) target = $region124
        $region123: #{fully_connected_network.1} parent=83 // pred_region
          %627 = dma.done [#allocation18], 4096
        $region124: #{fully_connected_network.1} parent=83 // pred_fallthru
          _
        // Predicated region
        $region125: #{fully_connected_network.1} parent=83 // pred_check
          %p628 = pneg %p351
        $region126: #{fully_connected_network.1} parent=83 // pred_check_branch
          %630 = sbr.rel (%p628) target = $region128
        $region127: #{fully_connected_network.1} parent=83 // pred_region
          %631 = dma.done [#allocation18], 2048
        $region128: #{fully_connected_network.1} parent=83 // pred_fallthru
          _
        %s632 = smul.u32 4, %s36
        %p633 = scmp.lt.s32.totalorder %s632, 7
        %s634 = scalar_select %p633, %s632, 7
        %s635 = smul.addr %s634, 8
        %s636 = scalar_lea.vmem %s0, %s635
        %p637 = pneg %p57
        %p638 = pneg %p54
        %p639 = pneg %p78
        %p640 = pneg %p75
        %p641 = pneg %p99
        %p642 = pneg %p96
        %p643 = pneg %p120
        %p644 = pneg %p117
        %p645 = pneg %p141
        %p646 = pneg %p138
        %p647 = pneg %p162
        %p648 = pneg %p159
        %p649 = pneg %p183
        %p650 = pneg %p180
        %p651 = pneg %p204
        %p652 = pneg %p201
        %p653 = pneg %p225
        %p654 = pneg %p222
        %p655 = pneg %p246
        %p656 = pneg %p243
        %p657 = pneg %p267
        %p658 = pneg %p264
        %p659 = pneg %p288
        %p660 = pneg %p285
        %p661 = pneg %p309
        %p662 = pneg %p306
        %p663 = pneg %p330
        %p664 = pneg %p327
        %p665 = pneg %p351
        %p666 = pneg %p348
        %p667 = pneg %p372
        %p668 = pneg %p369
        %p669 = pneg %p398
        %p670 = pneg %p395
        %s671 = sand.u32 %s385, 1
        %s672 = scalar_lea.sflag [#allocation4], %s671
        %s673 = sand.u32 %s385, 1
        %s674 = smul.addr %s673, 32
        %s675 = scalar_lea.vmem [#allocation20], %s674
        %s676 = smul.u32 4, %s36
        %p677 = scmp.lt.s32.totalorder %s676, 7
        %s678 = scalar_select %p677, %s676, 7
        %s679 = smul.addr %s678, 8
        %s680 = scalar_lea.vmem %s0, %s679
        %s681 = smul.u32 4, %s36
        %s682 = smul.u32 4, %s36
        %v684 = vld [vmem:[%s680] sm:$0xff]
        %v685 = vld [vmem:[%s680 + $0x8] sm:$0xff]
        %v686 = vld [vmem:[%s680 + $0x10] sm:$0xff]
        %v687 = vld [vmem:[%s680 + $0x18] sm:$0xff]
        %v688 = vld [vmem:[#allocation2] sm:$0xf]
        %v689 = vld [vmem:[#allocation2 + $0x4] sm:$0xf]
        %v690 = vld [vmem:[#allocation2 + $0x8] sm:$0xf]
        %v691 = vld [vmem:[#allocation2 + $0xc] sm:$0xf]
        %v692 = vld [vmem:[#allocation2 + $0x10] sm:$0xf]
        %v693 = vld [vmem:[#allocation2 + $0x14] sm:$0xf]
        %v694 = vld [vmem:[#allocation2 + $0x18] sm:$0xf]
        %v695 = vld [vmem:[#allocation2 + $0x1c] sm:$0xf]
        %v696 = vld [vmem:[#allocation2 + $0x20] sm:$0xf]
        %v697 = vld [vmem:[#allocation2 + $0x24] sm:$0xf]
        %v698 = vld [vmem:[#allocation2 + $0x28] sm:$0xf]
        %v699 = vld [vmem:[#allocation2 + $0x2c] sm:$0xf]
        %v700 = vld [vmem:[#allocation2 + $0x30] sm:$0xf]
        %v701 = vld [vmem:[#allocation2 + $0x34] sm:$0xf]
        %v702 = vld [vmem:[#allocation2 + $0x38] sm:$0xf]
        %v703 = vld [vmem:[#allocation2 + $0x3c] sm:$0xf]
        %v704 = vld [vmem:[#allocation5] sm:$0xf]
        %v705 = vld [vmem:[#allocation5 + $0x4] sm:$0xf]
        %v706 = vld [vmem:[#allocation5 + $0x8] sm:$0xf]
        %v707 = vld [vmem:[#allocation5 + $0xc] sm:$0xf]
        %v708 = vld [vmem:[#allocation5 + $0x10] sm:$0xf]
        %v709 = vld [vmem:[#allocation5 + $0x14] sm:$0xf]
        %v710 = vld [vmem:[#allocation5 + $0x18] sm:$0xf]
        %v711 = vld [vmem:[#allocation5 + $0x1c] sm:$0xf]
        %v712 = vld [vmem:[#allocation5 + $0x20] sm:$0xf]
        %v713 = vld [vmem:[#allocation5 + $0x24] sm:$0xf]
        %v714 = vld [vmem:[#allocation5 + $0x28] sm:$0xf]
        %v715 = vld [vmem:[#allocation5 + $0x2c] sm:$0xf]
        %v716 = vld [vmem:[#allocation5 + $0x30] sm:$0xf]
        %v717 = vld [vmem:[#allocation5 + $0x34] sm:$0xf]
        %v718 = vld [vmem:[#allocation5 + $0x38] sm:$0xf]
        %v719 = vld [vmem:[#allocation5 + $0x3c] sm:$0xf]
        %v720 = vld [vmem:[#allocation7] sm:$0xf]
        %v721 = vld [vmem:[#allocation7 + $0x4] sm:$0xf]
        %v722 = vld [vmem:[#allocation7 + $0x8] sm:$0xf]
        %v723 = vld [vmem:[#allocation7 + $0xc] sm:$0xf]
        %v724 = vld [vmem:[#allocation7 + $0x10] sm:$0xf]
        %v725 = vld [vmem:[#allocation7 + $0x14] sm:$0xf]
        %v726 = vld [vmem:[#allocation7 + $0x18] sm:$0xf]
        %v727 = vld [vmem:[#allocation7 + $0x1c] sm:$0xf]
        %v728 = vld [vmem:[#allocation7 + $0x20] sm:$0xf]
        %v729 = vld [vmem:[#allocation7 + $0x24] sm:$0xf]
        %v730 = vld [vmem:[#allocation7 + $0x28] sm:$0xf]
        %v731 = vld [vmem:[#allocation7 + $0x2c] sm:$0xf]
        %v732 = vld [vmem:[#allocation7 + $0x30] sm:$0xf]
        %v733 = vld [vmem:[#allocation7 + $0x34] sm:$0xf]
        %v734 = vld [vmem:[#allocation7 + $0x38] sm:$0xf]
        %v735 = vld [vmem:[#allocation7 + $0x3c] sm:$0xf]
        %v736 = vpack.c.bf16 %v685, %v684
        %v737 = vpack.c.bf16 %v687, %v686
        %v754 = vunpack.c.l.b16 %v688
        %v755 = vunpack.c.l.b16 %v689
        %v756 = vunpack.c.l.b16 %v690
        %v757 = vunpack.c.l.b16 %v691
        %v758 = vunpack.c.l.b16 %v692
        %v759 = vunpack.c.l.b16 %v693
        %v760 = vunpack.c.l.b16 %v694
        %v761 = vunpack.c.l.b16 %v695
        %v762 = vunpack.c.l.b16 %v696
        %v763 = vunpack.c.l.b16 %v697
        %v764 = vunpack.c.l.b16 %v698
        %v765 = vunpack.c.l.b16 %v699
        %v766 = vunpack.c.l.b16 %v700
        %v767 = vunpack.c.l.b16 %v701
        %v768 = vunpack.c.l.b16 %v702
        %v769 = vunpack.c.l.b16 %v703
        %v770 = vpack.c.b16 %v755, %v754
        %v771 = vpack.c.b16 %v757, %v756
        %v772 = vpack.c.b16 %v759, %v758
        %v773 = vpack.c.b16 %v761, %v760
        %v774 = vpack.c.b16 %v763, %v762
        %v775 = vpack.c.b16 %v765, %v764
        %v776 = vpack.c.b16 %v767, %v766
        %v777 = vpack.c.b16 %v769, %v768
        %786 = vmatprep.subr.bf16.mxu0 0
        %787 = vmatpush1.bf16.msra.mxu0 %v770
        %788 = vmatprep.subr.bf16.mxu0 0
        %789 = vmatpush1.bf16.msra.mxu0 %v771
        %790 = vmatprep.subr.bf16.mxu0 0
        %791 = vmatpush1.bf16.msra.mxu0 %v772
        %792 = vmatprep.subr.bf16.mxu0 0
        %793 = vmatpush1.bf16.msra.mxu0 %v773
        %794 = vmatprep.subr.bf16.mxu0 0
        %795 = vmatpush1.bf16.msra.mxu0 %v774
        %796 = vmatprep.subr.bf16.mxu0 0
        %797 = vmatpush1.bf16.msra.mxu0 %v775
        %798 = vmatprep.subr.bf16.mxu0 0
        %799 = vmatpush1.bf16.msra.mxu0 %v776
        %800 = vmatprep.subr.bf16.mxu0 0
        %801 = vmatpush1.bf16.msra.mxu0 %v777
        %802 = vmatprep.subr.bf16.mxu0 0
        %803 = vmatpush1.bf16.msra.mxu0 0
        %804 = vmatprep.subr.bf16.mxu0 0
        %805 = vmatpush1.bf16.msra.mxu0 0
        %806 = vmatprep.subr.bf16.mxu0 0
        %807 = vmatpush1.bf16.msra.mxu0 0
        %808 = vmatprep.subr.bf16.mxu0 0
        %809 = vmatpush1.bf16.msra.mxu0 0
        %810 = vmatprep.subr.bf16.mxu0 0
        %811 = vmatpush1.bf16.msra.mxu0 0
        %812 = vmatprep.subr.bf16.mxu0 0
        %813 = vmatpush1.bf16.msra.mxu0 0
        %814 = vmatprep.subr.bf16.mxu0 0
        %815 = vmatpush1.bf16.msra.mxu0 0
        %816 = vmatprep.subr.bf16.mxu0 0
        %817 = vmatpush1.bf16.msra.mxu0 0
        %818 = vmatprep.mubr.bf16.mxu0 0
        %819 = vmatmul.mubr.bf16.gmra.mrb[0].mxu0 %v736
        %v820 = vpop.f32.mrb[0].mxu0
        %v821 = vadd.f32 0.0, %v820
        %v822 = vpop.f32.mrb[0].mxu0
        %v823 = vpop.f32.mrb[0].mxu0
        %v824 = vadd.f32 0.0, %v823
        %v825 = vpop.f32.mrb[0].mxu0
        %826 = vmatprep.mubr.bf16.mxu0 0
        %827 = vmatmul.mubr.bf16.gmra.mrb[0].mxu0 %v737
        %v828 = vpop.f32.mrb[0].mxu0
        %v829 = vadd.f32 0.0, %v828
        %v830 = vpop.f32.mrb[0].mxu0
        %v831 = vpop.f32.mrb[0].mxu0
        %v832 = vadd.f32 0.0, %v831
        %v833 = vpop.f32.mrb[0].mxu0
        %834 = vdwg.mxu0
        %v851 = vunpack.c.l.b16 %v704
        %v852 = vunpack.c.l.b16 %v705
        %v853 = vunpack.c.l.b16 %v706
        %v854 = vunpack.c.l.b16 %v707
        %v855 = vunpack.c.l.b16 %v708
        %v856 = vunpack.c.l.b16 %v709
        %v857 = vunpack.c.l.b16 %v710
        %v858 = vunpack.c.l.b16 %v711
        %v859 = vunpack.c.l.b16 %v712
        %v860 = vunpack.c.l.b16 %v713
        %v861 = vunpack.c.l.b16 %v714
        %v862 = vunpack.c.l.b16 %v715
        %v863 = vunpack.c.l.b16 %v716
        %v864 = vunpack.c.l.b16 %v717
        %v865 = vunpack.c.l.b16 %v718
        %v866 = vunpack.c.l.b16 %v719
        %v867 = vpack.c.b16 %v852, %v851
        %v868 = vpack.c.b16 %v854, %v853
        %v869 = vpack.c.b16 %v856, %v855
        %v870 = vpack.c.b16 %v858, %v857
        %v871 = vpack.c.b16 %v860, %v859
        %v872 = vpack.c.b16 %v862, %v861
        %v873 = vpack.c.b16 %v864, %v863
        %v874 = vpack.c.b16 %v866, %v865
        %883 = vmatprep.subr.bf16.mxu0 0
        %884 = vmatpush1.bf16.msra.mxu0 %v867
        %885 = vmatprep.subr.bf16.mxu0 0
        %886 = vmatpush1.bf16.msra.mxu0 %v868
        %887 = vmatprep.subr.bf16.mxu0 0
        %888 = vmatpush1.bf16.msra.mxu0 %v869
        %889 = vmatprep.subr.bf16.mxu0 0
        %890 = vmatpush1.bf16.msra.mxu0 %v870
        %891 = vmatprep.subr.bf16.mxu0 0
        %892 = vmatpush1.bf16.msra.mxu0 %v871
        %893 = vmatprep.subr.bf16.mxu0 0
        %894 = vmatpush1.bf16.msra.mxu0 %v872
        %895 = vmatprep.subr.bf16.mxu0 0
        %896 = vmatpush1.bf16.msra.mxu0 %v873
        %897 = vmatprep.subr.bf16.mxu0 0
        %898 = vmatpush1.bf16.msra.mxu0 %v874
        %899 = vmatprep.subr.bf16.mxu0 0
        %900 = vmatpush1.bf16.msra.mxu0 0
        %901 = vmatprep.subr.bf16.mxu0 0
        %902 = vmatpush1.bf16.msra.mxu0 0
        %903 = vmatprep.subr.bf16.mxu0 0
        %904 = vmatpush1.bf16.msra.mxu0 0
        %905 = vmatprep.subr.bf16.mxu0 0
        %906 = vmatpush1.bf16.msra.mxu0 0
        %907 = vmatprep.subr.bf16.mxu0 0
        %908 = vmatpush1.bf16.msra.mxu0 0
        %909 = vmatprep.subr.bf16.mxu0 0
        %910 = vmatpush1.bf16.msra.mxu0 0
        %911 = vmatprep.subr.bf16.mxu0 0
        %912 = vmatpush1.bf16.msra.mxu0 0
        %913 = vmatprep.subr.bf16.mxu0 0
        %914 = vmatpush1.bf16.msra.mxu0 0
        %915 = vmatprep.mubr.bf16.mxu0 0
        %916 = vmatmul.mubr.bf16.gmra.mrb[0].mxu0 %v736
        %v917 = vpop.f32.mrb[0].mxu0
        %v918 = vadd.f32 0.0, %v917
        %v919 = vpop.f32.mrb[0].mxu0
        %v920 = vpop.f32.mrb[0].mxu0
        %v921 = vadd.f32 0.0, %v920
        %v922 = vpop.f32.mrb[0].mxu0
        %923 = vmatprep.mubr.bf16.mxu0 0
        %924 = vmatmul.mubr.bf16.gmra.mrb[0].mxu0 %v737
        %v925 = vpop.f32.mrb[0].mxu0
        %v926 = vadd.f32 0.0, %v925
        %v927 = vpop.f32.mrb[0].mxu0
        %v928 = vpop.f32.mrb[0].mxu0
        %v929 = vadd.f32 0.0, %v928
        %v930 = vpop.f32.mrb[0].mxu0
        %931 = vdwg.mxu0
        %v948 = vunpack.c.l.b16 %v720
        %v949 = vunpack.c.l.b16 %v721
        %v950 = vunpack.c.l.b16 %v722
        %v951 = vunpack.c.l.b16 %v723
        %v952 = vunpack.c.l.b16 %v724
        %v953 = vunpack.c.l.b16 %v725
        %v954 = vunpack.c.l.b16 %v726
        %v955 = vunpack.c.l.b16 %v727
        %v956 = vunpack.c.l.b16 %v728
        %v957 = vunpack.c.l.b16 %v729
        %v958 = vunpack.c.l.b16 %v730
        %v959 = vunpack.c.l.b16 %v731
        %v960 = vunpack.c.l.b16 %v732
        %v961 = vunpack.c.l.b16 %v733
        %v962 = vunpack.c.l.b16 %v734
        %v963 = vunpack.c.l.b16 %v735
        %v964 = vpack.c.b16 %v949, %v948
        %v965 = vpack.c.b16 %v951, %v950
        %v966 = vpack.c.b16 %v953, %v952
        %v967 = vpack.c.b16 %v955, %v954
        %v968 = vpack.c.b16 %v957, %v956
        %v969 = vpack.c.b16 %v959, %v958
        %v970 = vpack.c.b16 %v961, %v960
        %v971 = vpack.c.b16 %v963, %v962
        %980 = vmatprep.subr.bf16.mxu0 0
        %981 = vmatpush1.bf16.msra.mxu0 %v964
        %982 = vmatprep.subr.bf16.mxu0 0
        %983 = vmatpush1.bf16.msra.mxu0 %v965
        %984 = vmatprep.subr.bf16.mxu0 0
        %985 = vmatpush1.bf16.msra.mxu0 %v966
        %986 = vmatprep.subr.bf16.mxu0 0
        %987 = vmatpush1.bf16.msra.mxu0 %v967
        %988 = vmatprep.subr.bf16.mxu0 0
        %989 = vmatpush1.bf16.msra.mxu0 %v968
        %990 = vmatprep.subr.bf16.mxu0 0
        %991 = vmatpush1.bf16.msra.mxu0 %v969
        %992 = vmatprep.subr.bf16.mxu0 0
        %993 = vmatpush1.bf16.msra.mxu0 %v970
        %994 = vmatprep.subr.bf16.mxu0 0
        %995 = vmatpush1.bf16.msra.mxu0 %v971
        %996 = vmatprep.subr.bf16.mxu0 0
        %997 = vmatpush1.bf16.msra.mxu0 0
        %998 = vmatprep.subr.bf16.mxu0 0
        %999 = vmatpush1.bf16.msra.mxu0 0
        %1000 = vmatprep.subr.bf16.mxu0 0
        %1001 = vmatpush1.bf16.msra.mxu0 0
        %1002 = vmatprep.subr.bf16.mxu0 0
        %1003 = vmatpush1.bf16.msra.mxu0 0
        %1004 = vmatprep.subr.bf16.mxu0 0
        %1005 = vmatpush1.bf16.msra.mxu0 0
        %1006 = vmatprep.subr.bf16.mxu0 0
        %1007 = vmatpush1.bf16.msra.mxu0 0
        %1008 = vmatprep.subr.bf16.mxu0 0
        %1009 = vmatpush1.bf16.msra.mxu0 0
        %1010 = vmatprep.subr.bf16.mxu0 0
        %1011 = vmatpush1.bf16.msra.mxu0 0
        %1012 = vmatprep.mubr.bf16.mxu0 0
        %1013 = vmatmul.mubr.bf16.gmra.mrb[0].mxu0 %v736
        %v1014 = vpop.f32.mrb[0].mxu0
        %v1015 = vadd.f32 0.0, %v1014
        %v1016 = vpop.f32.mrb[0].mxu0
        %v1017 = vpop.f32.mrb[0].mxu0
        %v1018 = vadd.f32 0.0, %v1017
        %v1019 = vpop.f32.mrb[0].mxu0
        %1020 = vmatprep.mubr.bf16.mxu0 0
        %1021 = vmatmul.mubr.bf16.gmra.mrb[0].mxu0 %v737
        %v1022 = vpop.f32.mrb[0].mxu0
        %v1023 = vadd.f32 0.0, %v1022
        %v1024 = vpop.f32.mrb[0].mxu0
        %v1025 = vpop.f32.mrb[0].mxu0
        %v1026 = vadd.f32 0.0, %v1025
        %v1027 = vpop.f32.mrb[0].mxu0
        %1028 = vdwg.mxu0
        %v1029 = vpack.c.bf16 %v821, %v821
        %v1030 = vpack.c.bf16 %v824, %v824
        %v1031 = vpack.c.bf16 %v829, %v829
        %v1032 = vpack.c.bf16 %v832, %v832
        %v1033 = vpack.c.bf16 %v918, %v918
        %v1034 = vpack.c.bf16 %v921, %v921
        %v1035 = vpack.c.bf16 %v926, %v926
        %v1036 = vpack.c.bf16 %v929, %v929
        %1037 = vmatprep.subr.bf16.mxu0 0
        %1038 = vmatpush1.bf16.xpose.msra.mxu0 %v1033
        %1039 = vmatprep.subr.bf16.mxu0 0
        %1040 = vmatpush1.bf16.xpose.msra.mxu0 0
        %1041 = vmatprep.subr.bf16.mxu0 0
        %1042 = vmatpush1.bf16.xpose.msra.mxu0 0
        %1043 = vmatprep.subr.bf16.mxu0 0
        %1044 = vmatpush1.bf16.xpose.msra.mxu0 0
        %1045 = vmatprep.subr.bf16.mxu0 0
        %1046 = vmatpush1.bf16.xpose.msra.mxu0 0
        %1047 = vmatprep.subr.bf16.mxu0 0
        %1048 = vmatpush1.bf16.xpose.msra.mxu0 0
        %1049 = vmatprep.subr.bf16.mxu0 0
        %1050 = vmatpush1.bf16.xpose.msra.mxu0 0
        %1051 = vmatprep.subr.bf16.mxu0 0
        %1052 = vmatpush1.bf16.xpose.msra.mxu0 0
        %1053 = vmatprep.subr.bf16.mxu0 0
        %1054 = vmatpush1.bf16.xpose.msra.mxu0 0
        %1055 = vmatprep.subr.bf16.mxu0 0
        %1056 = vmatpush1.bf16.xpose.msra.mxu0 0
        %1057 = vmatprep.subr.bf16.mxu0 0
        %1058 = vmatpush1.bf16.xpose.msra.mxu0 0
        %1059 = vmatprep.subr.bf16.mxu0 0
        %1060 = vmatpush1.bf16.xpose.msra.mxu0 0
        %1061 = vmatprep.subr.bf16.mxu0 0
        %1062 = vmatpush1.bf16.xpose.msra.mxu0 0
        %1063 = vmatprep.subr.bf16.mxu0 0
        %1064 = vmatpush1.bf16.xpose.msra.mxu0 0
        %1065 = vmatprep.subr.bf16.mxu0 0
        %1066 = vmatpush1.bf16.xpose.msra.mxu0 0
        %1067 = vmatprep.subr.bf16.mxu0 0
        %1068 = vmatpush1.bf16.xpose.msra.mxu0 0
        %1069 = vmatprep.mubr.bf16.mxu0 0
        %1070 = vmatmul.mubr.bf16.gmra.mrb[0].mxu0 %v1029
        %v1071 = vpop.f32.mrb[0].mxu0
        %v1072 = vadd.f32 0.0, %v1071
        %v1073 = vpop.f32.mrb[0].mxu0
        %v1074 = vpop.f32.mrb[0].mxu0
        %v1075 = vpop.f32.mrb[0].mxu0
        %1076 = vdwg.mxu0
        %1077 = vmatprep.subr.bf16.mxu0 0
        %1078 = vmatpush1.bf16.xpose.msra.mxu0 %v1034
        %1079 = vmatprep.subr.bf16.mxu0 0
        %1080 = vmatpush1.bf16.xpose.msra.mxu0 0
        %1081 = vmatprep.subr.bf16.mxu0 0
        %1082 = vmatpush1.bf16.xpose.msra.mxu0 0
        %1083 = vmatprep.subr.bf16.mxu0 0
        %1084 = vmatpush1.bf16.xpose.msra.mxu0 0
        %1085 = vmatprep.subr.bf16.mxu0 0
        %1086 = vmatpush1.bf16.xpose.msra.mxu0 0
        %1087 = vmatprep.subr.bf16.mxu0 0
        %1088 = vmatpush1.bf16.xpose.msra.mxu0 0
        %1089 = vmatprep.subr.bf16.mxu0 0
        %1090 = vmatpush1.bf16.xpose.msra.mxu0 0
        %1091 = vmatprep.subr.bf16.mxu0 0
        %1092 = vmatpush1.bf16.xpose.msra.mxu0 0
        %1093 = vmatprep.subr.bf16.mxu0 0
        %1094 = vmatpush1.bf16.xpose.msra.mxu0 0
        %1095 = vmatprep.subr.bf16.mxu0 0
        %1096 = vmatpush1.bf16.xpose.msra.mxu0 0
        %1097 = vmatprep.subr.bf16.mxu0 0
        %1098 = vmatpush1.bf16.xpose.msra.mxu0 0
        %1099 = vmatprep.subr.bf16.mxu0 0
        %1100 = vmatpush1.bf16.xpose.msra.mxu0 0
        %1101 = vmatprep.subr.bf16.mxu0 0
        %1102 = vmatpush1.bf16.xpose.msra.mxu0 0
        %1103 = vmatprep.subr.bf16.mxu0 0
        %1104 = vmatpush1.bf16.xpose.msra.mxu0 0
        %1105 = vmatprep.subr.bf16.mxu0 0
        %1106 = vmatpush1.bf16.xpose.msra.mxu0 0
        %1107 = vmatprep.subr.bf16.mxu0 0
        %1108 = vmatpush1.bf16.xpose.msra.mxu0 0
        %1109 = vmatprep.mubr.bf16.mxu0 0
        %1110 = vmatmul.mubr.bf16.gmra.mrb[0].mxu0 %v1030
        %v1111 = vpop.f32.mrb[0].mxu0
        %v1112 = vadd.f32 0.0, %v1111
        %v1113 = vpop.f32.mrb[0].mxu0
        %v1114 = vpop.f32.mrb[0].mxu0
        %v1115 = vpop.f32.mrb[0].mxu0
        %1116 = vdwg.mxu0
        %1117 = vmatprep.subr.bf16.mxu0 0
        %1118 = vmatpush1.bf16.xpose.msra.mxu0 %v1035
        %1119 = vmatprep.subr.bf16.mxu0 0
        %1120 = vmatpush1.bf16.xpose.msra.mxu0 0
        %1121 = vmatprep.subr.bf16.mxu0 0
        %1122 = vmatpush1.bf16.xpose.msra.mxu0 0
        %1123 = vmatprep.subr.bf16.mxu0 0
        %1124 = vmatpush1.bf16.xpose.msra.mxu0 0
        %1125 = vmatprep.subr.bf16.mxu0 0
        %1126 = vmatpush1.bf16.xpose.msra.mxu0 0
        %1127 = vmatprep.subr.bf16.mxu0 0
        %1128 = vmatpush1.bf16.xpose.msra.mxu0 0
        %1129 = vmatprep.subr.bf16.mxu0 0
        %1130 = vmatpush1.bf16.xpose.msra.mxu0 0
        %1131 = vmatprep.subr.bf16.mxu0 0
        %1132 = vmatpush1.bf16.xpose.msra.mxu0 0
        %1133 = vmatprep.subr.bf16.mxu0 0
        %1134 = vmatpush1.bf16.xpose.msra.mxu0 0
        %1135 = vmatprep.subr.bf16.mxu0 0
        %1136 = vmatpush1.bf16.xpose.msra.mxu0 0
        %1137 = vmatprep.subr.bf16.mxu0 0
        %1138 = vmatpush1.bf16.xpose.msra.mxu0 0
        %1139 = vmatprep.subr.bf16.mxu0 0
        %1140 = vmatpush1.bf16.xpose.msra.mxu0 0
        %1141 = vmatprep.subr.bf16.mxu0 0
        %1142 = vmatpush1.bf16.xpose.msra.mxu0 0
        %1143 = vmatprep.subr.bf16.mxu0 0
        %1144 = vmatpush1.bf16.xpose.msra.mxu0 0
        %1145 = vmatprep.subr.bf16.mxu0 0
        %1146 = vmatpush1.bf16.xpose.msra.mxu0 0
        %1147 = vmatprep.subr.bf16.mxu0 0
        %1148 = vmatpush1.bf16.xpose.msra.mxu0 0
        %1149 = vmatprep.mubr.bf16.mxu0 0
        %1150 = vmatmul.mubr.bf16.gmra.mrb[0].mxu0 %v1031
        %v1151 = vpop.f32.mrb[0].mxu0
        %v1152 = vadd.f32 0.0, %v1151
        %v1153 = vpop.f32.mrb[0].mxu0
        %v1154 = vpop.f32.mrb[0].mxu0
        %v1155 = vpop.f32.mrb[0].mxu0
        %1156 = vdwg.mxu0
        %1157 = vmatprep.subr.bf16.mxu0 0
        %1158 = vmatpush1.bf16.xpose.msra.mxu0 %v1036
        %1159 = vmatprep.subr.bf16.mxu0 0
        %1160 = vmatpush1.bf16.xpose.msra.mxu0 0
        %1161 = vmatprep.subr.bf16.mxu0 0
        %1162 = vmatpush1.bf16.xpose.msra.mxu0 0
        %1163 = vmatprep.subr.bf16.mxu0 0
        %1164 = vmatpush1.bf16.xpose.msra.mxu0 0
        %1165 = vmatprep.subr.bf16.mxu0 0
        %1166 = vmatpush1.bf16.xpose.msra.mxu0 0
        %1167 = vmatprep.subr.bf16.mxu0 0
        %1168 = vmatpush1.bf16.xpose.msra.mxu0 0
        %1169 = vmatprep.subr.bf16.mxu0 0
        %1170 = vmatpush1.bf16.xpose.msra.mxu0 0
        %1171 = vmatprep.subr.bf16.mxu0 0
        %1172 = vmatpush1.bf16.xpose.msra.mxu0 0
        %1173 = vmatprep.subr.bf16.mxu0 0
        %1174 = vmatpush1.bf16.xpose.msra.mxu0 0
        %1175 = vmatprep.subr.bf16.mxu0 0
        %1176 = vmatpush1.bf16.xpose.msra.mxu0 0
        %1177 = vmatprep.subr.bf16.mxu0 0
        %1178 = vmatpush1.bf16.xpose.msra.mxu0 0
        %1179 = vmatprep.subr.bf16.mxu0 0
        %1180 = vmatpush1.bf16.xpose.msra.mxu0 0
        %1181 = vmatprep.subr.bf16.mxu0 0
        %1182 = vmatpush1.bf16.xpose.msra.mxu0 0
        %1183 = vmatprep.subr.bf16.mxu0 0
        %1184 = vmatpush1.bf16.xpose.msra.mxu0 0
        %1185 = vmatprep.subr.bf16.mxu0 0
        %1186 = vmatpush1.bf16.xpose.msra.mxu0 0
        %1187 = vmatprep.subr.bf16.mxu0 0
        %1188 = vmatpush1.bf16.xpose.msra.mxu0 0
        %1189 = vmatprep.mubr.bf16.mxu0 0
        %1190 = vmatmul.mubr.bf16.gmra.mrb[0].mxu0 %v1032
        %v1191 = vpop.f32.mrb[0].mxu0
        %v1192 = vadd.f32 0.0, %v1191
        %v1193 = vpop.f32.mrb[0].mxu0
        %v1194 = vpop.f32.mrb[0].mxu0
        %v1195 = vpop.f32.mrb[0].mxu0
        %1196 = vdwg.mxu0
        %vm1197 = vcmask 64512
        %v1198 = vsel %vm1197, %v1072, -inf
        %1199 = vmax.xlane.f32.xlu0 %v1198
        %v1200 = vpop.xlane.xlu0 %1199
        %v1201 = vsel %vm1197, %v1112, -inf
        %1202 = vmax.xlane.f32.xlu0 %v1201
        %v1203 = vpop.xlane.xlu0 %1202
        %v1204 = vsel %vm1197, %v1152, -inf
        %1205 = vmax.xlane.f32.xlu0 %v1204
        %v1206 = vpop.xlane.xlu0 %1205
        %v1207 = vsel %vm1197, %v1192, -inf
        %1208 = vmax.xlane.f32.xlu0 %v1207
        %v1209 = vpop.xlane.xlu0 %1208
        %v1210 = vsub.f32 %v1072, %v1200
        %v1211 = vsub.f32 %v1112, %v1203
        %v1212 = vsub.f32 %v1152, %v1206
        %v1213 = vsub.f32 %v1192, %v1209
        %v1214 = vmul.f32 %v1210, 1.442695
        %v1215 = vpow.pop %v1214
        %v1216 = vmul.f32 %v1211, 1.442695
        %v1217 = vpow.pop %v1216
        %v1218 = vmul.f32 %v1212, 1.442695
        %v1219 = vpow.pop %v1218
        %v1220 = vmul.f32 %v1213, 1.442695
        %v1221 = vpow.pop %v1220
        %v1222 = vsel %vm1197, %v1215, 0.0
        %1223 = vadd.xlane.f32.xlu0 %v1222
        %v1224 = vpop.xlane.xlu0 %1223
        %v1225 = vsel %vm1197, %v1217, 0.0
        %1226 = vadd.xlane.f32.xlu0 %v1225
        %v1227 = vpop.xlane.xlu0 %1226
        %v1228 = vsel %vm1197, %v1219, 0.0
        %1229 = vadd.xlane.f32.xlu0 %v1228
        %v1230 = vpop.xlane.xlu0 %1229
        %v1231 = vsel %vm1197, %v1221, 0.0
        %1232 = vadd.xlane.f32.xlu0 %v1231
        %v1233 = vpop.xlane.xlu0 %1232
        %v1234 = vpack.c.bf16 %v1215, %v1215
        %v1235 = vpack.c.bf16 %v1217, %v1217
        %v1236 = vpack.c.bf16 %v1219, %v1219
        %v1237 = vpack.c.bf16 %v1221, %v1221
        %v1238 = vpack.c.bf16 %v1015, %v1015
        %v1239 = vpack.c.bf16 %v1018, %v1018
        %v1240 = vpack.c.bf16 %v1023, %v1023
        %v1241 = vpack.c.bf16 %v1026, %v1026
        %v1243 = vsel %vm1197, %v1234, 0
        %vm1245 = vcmask 1043456
        %v1247 = vsel %vm1245, %v1238, 0
        %1249 = vmatprep.subr.bf16.mxu0 0
        %1250 = vmatpush1.bf16.msra.mxu0 %v1247
        %1251 = vmatprep.subr.bf16.mxu0 0
        %1252 = vmatpush1.bf16.msra.mxu0 0
        %1253 = vmatprep.subr.bf16.mxu0 0
        %1254 = vmatpush1.bf16.msra.mxu0 0
        %1255 = vmatprep.subr.bf16.mxu0 0
        %1256 = vmatpush1.bf16.msra.mxu0 0
        %1257 = vmatprep.subr.bf16.mxu0 0
        %1258 = vmatpush1.bf16.msra.mxu0 0
        %1259 = vmatprep.subr.bf16.mxu0 0
        %1260 = vmatpush1.bf16.msra.mxu0 0
        %1261 = vmatprep.subr.bf16.mxu0 0
        %1262 = vmatpush1.bf16.msra.mxu0 0
        %1263 = vmatprep.subr.bf16.mxu0 0
        %1264 = vmatpush1.bf16.msra.mxu0 0
        %1265 = vmatprep.subr.bf16.mxu0 0
        %1266 = vmatpush1.bf16.msra.mxu0 0
        %1267 = vmatprep.subr.bf16.mxu0 0
        %1268 = vmatpush1.bf16.msra.mxu0 0
        %1269 = vmatprep.subr.bf16.mxu0 0
        %1270 = vmatpush1.bf16.msra.mxu0 0
        %1271 = vmatprep.subr.bf16.mxu0 0
        %1272 = vmatpush1.bf16.msra.mxu0 0
        %1273 = vmatprep.subr.bf16.mxu0 0
        %1274 = vmatpush1.bf16.msra.mxu0 0
        %1275 = vmatprep.subr.bf16.mxu0 0
        %1276 = vmatpush1.bf16.msra.mxu0 0
        %1277 = vmatprep.subr.bf16.mxu0 0
        %1278 = vmatpush1.bf16.msra.mxu0 0
        %1279 = vmatprep.subr.bf16.mxu0 0
        %1280 = vmatpush1.bf16.msra.mxu0 0
        %1281 = vmatprep.mubr.bf16.mxu0 0
        %1282 = vmatmul.mubr.bf16.gmra.mrb[0].mxu0 %v1243
        %v1283 = vpop.f32.mrb[0].mxu0
        %v1284 = vadd.f32 0.0, %v1283
        %v1285 = vpop.f32.mrb[0].mxu0
        %v1286 = vpop.f32.mrb[0].mxu0
        %v1287 = vpop.f32.mrb[0].mxu0
        %1288 = vdwg.mxu0
        %v1290 = vsel %vm1197, %v1235, 0
        %v1293 = vsel %vm1245, %v1239, 0
        %1295 = vmatprep.subr.bf16.mxu0 0
        %1296 = vmatpush1.bf16.msra.mxu0 %v1293
        %1297 = vmatprep.subr.bf16.mxu0 0
        %1298 = vmatpush1.bf16.msra.mxu0 0
        %1299 = vmatprep.subr.bf16.mxu0 0
        %1300 = vmatpush1.bf16.msra.mxu0 0
        %1301 = vmatprep.subr.bf16.mxu0 0
        %1302 = vmatpush1.bf16.msra.mxu0 0
        %1303 = vmatprep.subr.bf16.mxu0 0
        %1304 = vmatpush1.bf16.msra.mxu0 0
        %1305 = vmatprep.subr.bf16.mxu0 0
        %1306 = vmatpush1.bf16.msra.mxu0 0
        %1307 = vmatprep.subr.bf16.mxu0 0
        %1308 = vmatpush1.bf16.msra.mxu0 0
        %1309 = vmatprep.subr.bf16.mxu0 0
        %1310 = vmatpush1.bf16.msra.mxu0 0
        %1311 = vmatprep.subr.bf16.mxu0 0
        %1312 = vmatpush1.bf16.msra.mxu0 0
        %1313 = vmatprep.subr.bf16.mxu0 0
        %1314 = vmatpush1.bf16.msra.mxu0 0
        %1315 = vmatprep.subr.bf16.mxu0 0
        %1316 = vmatpush1.bf16.msra.mxu0 0
        %1317 = vmatprep.subr.bf16.mxu0 0
        %1318 = vmatpush1.bf16.msra.mxu0 0
        %1319 = vmatprep.subr.bf16.mxu0 0
        %1320 = vmatpush1.bf16.msra.mxu0 0
        %1321 = vmatprep.subr.bf16.mxu0 0
        %1322 = vmatpush1.bf16.msra.mxu0 0
        %1323 = vmatprep.subr.bf16.mxu0 0
        %1324 = vmatpush1.bf16.msra.mxu0 0
        %1325 = vmatprep.subr.bf16.mxu0 0
        %1326 = vmatpush1.bf16.msra.mxu0 0
        %1327 = vmatprep.mubr.bf16.mxu0 0
        %1328 = vmatmul.mubr.bf16.gmra.mrb[0].mxu0 %v1290
        %v1329 = vpop.f32.mrb[0].mxu0
        %v1330 = vadd.f32 0.0, %v1329
        %v1331 = vpop.f32.mrb[0].mxu0
        %v1332 = vpop.f32.mrb[0].mxu0
        %v1333 = vpop.f32.mrb[0].mxu0
        %1334 = vdwg.mxu0
        %v1336 = vsel %vm1197, %v1236, 0
        %v1339 = vsel %vm1245, %v1240, 0
        %1341 = vmatprep.subr.bf16.mxu0 0
        %1342 = vmatpush1.bf16.msra.mxu0 %v1339
        %1343 = vmatprep.subr.bf16.mxu0 0
        %1344 = vmatpush1.bf16.msra.mxu0 0
        %1345 = vmatprep.subr.bf16.mxu0 0
        %1346 = vmatpush1.bf16.msra.mxu0 0
        %1347 = vmatprep.subr.bf16.mxu0 0
        %1348 = vmatpush1.bf16.msra.mxu0 0
        %1349 = vmatprep.subr.bf16.mxu0 0
        %1350 = vmatpush1.bf16.msra.mxu0 0
        %1351 = vmatprep.subr.bf16.mxu0 0
        %1352 = vmatpush1.bf16.msra.mxu0 0
        %1353 = vmatprep.subr.bf16.mxu0 0
        %1354 = vmatpush1.bf16.msra.mxu0 0
        %1355 = vmatprep.subr.bf16.mxu0 0
        %1356 = vmatpush1.bf16.msra.mxu0 0
        %1357 = vmatprep.subr.bf16.mxu0 0
        %1358 = vmatpush1.bf16.msra.mxu0 0
        %1359 = vmatprep.subr.bf16.mxu0 0
        %1360 = vmatpush1.bf16.msra.mxu0 0
        %1361 = vmatprep.subr.bf16.mxu0 0
        %1362 = vmatpush1.bf16.msra.mxu0 0
        %1363 = vmatprep.subr.bf16.mxu0 0
        %1364 = vmatpush1.bf16.msra.mxu0 0
        %1365 = vmatprep.subr.bf16.mxu0 0
        %1366 = vmatpush1.bf16.msra.mxu0 0
        %1367 = vmatprep.subr.bf16.mxu0 0
        %1368 = vmatpush1.bf16.msra.mxu0 0
        %1369 = vmatprep.subr.bf16.mxu0 0
        %1370 = vmatpush1.bf16.msra.mxu0 0
        %1371 = vmatprep.subr.bf16.mxu0 0
        %1372 = vmatpush1.bf16.msra.mxu0 0
        %1373 = vmatprep.mubr.bf16.mxu0 0
        %1374 = vmatmul.mubr.bf16.gmra.mrb[0].mxu0 %v1336
        %v1375 = vpop.f32.mrb[0].mxu0
        %v1376 = vadd.f32 0.0, %v1375
        %v1377 = vpop.f32.mrb[0].mxu0
        %v1378 = vpop.f32.mrb[0].mxu0
        %v1379 = vpop.f32.mrb[0].mxu0
        %1380 = vdwg.mxu0
        %v1382 = vsel %vm1197, %v1237, 0
        %v1385 = vsel %vm1245, %v1241, 0
        %1387 = vmatprep.subr.bf16.mxu0 0
        %1388 = vmatpush1.bf16.msra.mxu0 %v1385
        %1389 = vmatprep.subr.bf16.mxu0 0
        %1390 = vmatpush1.bf16.msra.mxu0 0
        %1391 = vmatprep.subr.bf16.mxu0 0
        %1392 = vmatpush1.bf16.msra.mxu0 0
        %1393 = vmatprep.subr.bf16.mxu0 0
        %1394 = vmatpush1.bf16.msra.mxu0 0
        %1395 = vmatprep.subr.bf16.mxu0 0
        %1396 = vmatpush1.bf16.msra.mxu0 0
        %1397 = vmatprep.subr.bf16.mxu0 0
        %1398 = vmatpush1.bf16.msra.mxu0 0
        %1399 = vmatprep.subr.bf16.mxu0 0
        %1400 = vmatpush1.bf16.msra.mxu0 0
        %1401 = vmatprep.subr.bf16.mxu0 0
        %1402 = vmatpush1.bf16.msra.mxu0 0
        %1403 = vmatprep.subr.bf16.mxu0 0
        %1404 = vmatpush1.bf16.msra.mxu0 0
        %1405 = vmatprep.subr.bf16.mxu0 0
        %1406 = vmatpush1.bf16.msra.mxu0 0
        %1407 = vmatprep.subr.bf16.mxu0 0
        %1408 = vmatpush1.bf16.msra.mxu0 0
        %1409 = vmatprep.subr.bf16.mxu0 0
        %1410 = vmatpush1.bf16.msra.mxu0 0
        %1411 = vmatprep.subr.bf16.mxu0 0
        %1412 = vmatpush1.bf16.msra.mxu0 0
        %1413 = vmatprep.subr.bf16.mxu0 0
        %1414 = vmatpush1.bf16.msra.mxu0 0
        %1415 = vmatprep.subr.bf16.mxu0 0
        %1416 = vmatpush1.bf16.msra.mxu0 0
        %1417 = vmatprep.subr.bf16.mxu0 0
        %1418 = vmatpush1.bf16.msra.mxu0 0
        %1419 = vmatprep.mubr.bf16.mxu0 0
        %1420 = vmatmul.mubr.bf16.gmra.mrb[0].mxu0 %v1382
        %v1421 = vpop.f32.mrb[0].mxu0
        %v1422 = vadd.f32 0.0, %v1421
        %v1423 = vpop.f32.mrb[0].mxu0
        %v1424 = vpop.f32.mrb[0].mxu0
        %v1425 = vpop.f32.mrb[0].mxu0
        %1426 = vdwg.mxu0
        %v1427 = vrcp.pop %v1224
        %v1428 = vrcp.pop %v1227
        %v1429 = vrcp.pop %v1230
        %v1430 = vrcp.pop %v1233
        %v1431 = vmul.f32 %v1284, %v1427
        %v1432 = vmul.f32 %v1330, %v1428
        %v1433 = vmul.f32 %v1376, %v1429
        %v1434 = vmul.f32 %v1422, %v1430
        %v1435 = vld [vmem:[#allocation8] sm:$0xf]
        %v1436 = vld [vmem:[#allocation8 + $0x4] sm:$0xf]
        %v1437 = vld [vmem:[#allocation8 + $0x8] sm:$0xf]
        %v1438 = vld [vmem:[#allocation8 + $0xc] sm:$0xf]
        %v1439 = vld [vmem:[#allocation8 + $0x10] sm:$0xf]
        %v1440 = vld [vmem:[#allocation8 + $0x14] sm:$0xf]
        %v1441 = vld [vmem:[#allocation8 + $0x18] sm:$0xf]
        %v1442 = vld [vmem:[#allocation8 + $0x1c] sm:$0xf]
        %v1443 = vld [vmem:[#allocation8 + $0x20] sm:$0xf]
        %v1444 = vld [vmem:[#allocation8 + $0x24] sm:$0xf]
        %v1445 = vld [vmem:[#allocation8 + $0x28] sm:$0xf]
        %v1446 = vld [vmem:[#allocation8 + $0x2c] sm:$0xf]
        %v1447 = vld [vmem:[#allocation8 + $0x30] sm:$0xf]
        %v1448 = vld [vmem:[#allocation8 + $0x34] sm:$0xf]
        %v1449 = vld [vmem:[#allocation8 + $0x38] sm:$0xf]
        %v1450 = vld [vmem:[#allocation8 + $0x3c] sm:$0xf]
        %v1451 = vld [vmem:[%s5] sm:$0x1]
        %v1452 = vpack.c.bf16 %v1432, %v1431
        %v1453 = vpack.c.bf16 %v1434, %v1433
        %v1455 = vlaneseq
        %v1456 = vshrl.u32 %v1455, 7
        %v1457 = vsub.s32 0, %v1456
        %v1458 = vrot.slane %v1451, %v1457
        %v1476 = vunpack.c.l.b16 %v1435
        %v1477 = vunpack.c.l.b16 %v1436
        %v1478 = vunpack.c.l.b16 %v1437
        %v1479 = vunpack.c.l.b16 %v1438
        %v1480 = vunpack.c.l.b16 %v1439
        %v1481 = vunpack.c.l.b16 %v1440
        %v1482 = vunpack.c.l.b16 %v1441
        %v1483 = vunpack.c.l.b16 %v1442
        %v1484 = vunpack.c.l.b16 %v1443
        %v1485 = vunpack.c.l.b16 %v1444
        %v1486 = vunpack.c.l.b16 %v1445
        %v1487 = vunpack.c.l.b16 %v1446
        %v1488 = vunpack.c.l.b16 %v1447
        %v1489 = vunpack.c.l.b16 %v1448
        %v1490 = vunpack.c.l.b16 %v1449
        %v1491 = vunpack.c.l.b16 %v1450
        %v1492 = vpack.c.b16 %v1477, %v1476
        %v1493 = vpack.c.b16 %v1479, %v1478
        %v1494 = vpack.c.b16 %v1481, %v1480
        %v1495 = vpack.c.b16 %v1483, %v1482
        %v1496 = vpack.c.b16 %v1485, %v1484
        %v1497 = vpack.c.b16 %v1487, %v1486
        %v1498 = vpack.c.b16 %v1489, %v1488
        %v1499 = vpack.c.b16 %v1491, %v1490
        %1508 = vmatprep.subr.bf16.mxu0 0
        %1509 = vmatpush1.bf16.msra.mxu0 %v1492
        %1510 = vmatprep.subr.bf16.mxu0 0
        %1511 = vmatpush1.bf16.msra.mxu0 %v1493
        %1512 = vmatprep.subr.bf16.mxu0 0
        %1513 = vmatpush1.bf16.msra.mxu0 %v1494
        %1514 = vmatprep.subr.bf16.mxu0 0
        %1515 = vmatpush1.bf16.msra.mxu0 %v1495
        %1516 = vmatprep.subr.bf16.mxu0 0
        %1517 = vmatpush1.bf16.msra.mxu0 %v1496
        %1518 = vmatprep.subr.bf16.mxu0 0
        %1519 = vmatpush1.bf16.msra.mxu0 %v1497
        %1520 = vmatprep.subr.bf16.mxu0 0
        %1521 = vmatpush1.bf16.msra.mxu0 %v1498
        %1522 = vmatprep.subr.bf16.mxu0 0
        %1523 = vmatpush1.bf16.msra.mxu0 %v1499
        %1524 = vmatprep.subr.bf16.mxu0 0
        %1525 = vmatpush1.bf16.msra.mxu0 0
        %1526 = vmatprep.subr.bf16.mxu0 0
        %1527 = vmatpush1.bf16.msra.mxu0 0
        %1528 = vmatprep.subr.bf16.mxu0 0
        %1529 = vmatpush1.bf16.msra.mxu0 0
        %1530 = vmatprep.subr.bf16.mxu0 0
        %1531 = vmatpush1.bf16.msra.mxu0 0
        %1532 = vmatprep.subr.bf16.mxu0 0
        %1533 = vmatpush1.bf16.msra.mxu0 0
        %1534 = vmatprep.subr.bf16.mxu0 0
        %1535 = vmatpush1.bf16.msra.mxu0 0
        %1536 = vmatprep.subr.bf16.mxu0 0
        %1537 = vmatpush1.bf16.msra.mxu0 0
        %1538 = vmatprep.subr.bf16.mxu0 0
        %1539 = vmatpush1.bf16.msra.mxu0 0
        %1540 = vmatprep.mubr.bf16.mxu0 0
        %1541 = vmatmul.mubr.bf16.gmra.mrb[0].mxu0 %v1452
        %v1542 = vpop.f32.mrb[0].mxu0
        %v1543 = vadd.f32 %v1458, %v1542
        %v1544 = vpop.f32.mrb[0].mxu0
        %v1545 = vpop.f32.mrb[0].mxu0
        %v1546 = vadd.f32 %v1458, %v1545
        %v1547 = vpop.f32.mrb[0].mxu0
        %1548 = vmatprep.mubr.bf16.mxu0 0
        %1549 = vmatmul.mubr.bf16.gmra.mrb[0].mxu0 %v1453
        %v1550 = vpop.f32.mrb[0].mxu0
        %v1551 = vadd.f32 %v1458, %v1550
        %v1552 = vpop.f32.mrb[0].mxu0
        %v1553 = vpop.f32.mrb[0].mxu0
        %v1554 = vadd.f32 %v1458, %v1553
        %v1555 = vpop.f32.mrb[0].mxu0
        %1556 = vdwg.mxu0
        %v1557 = vmax.f32 %v1543, 0.0
        %v1558 = vmax.f32 %v1546, 0.0
        %v1559 = vmax.f32 %v1551, 0.0
        %v1560 = vmax.f32 %v1554, 0.0
        %v1561 = vld [vmem:[#allocation10] sm:$0xf]
        %v1562 = vld [vmem:[#allocation10 + $0x4] sm:$0xf]
        %v1563 = vld [vmem:[#allocation10 + $0x8] sm:$0xf]
        %v1564 = vld [vmem:[#allocation10 + $0xc] sm:$0xf]
        %v1565 = vld [vmem:[#allocation10 + $0x10] sm:$0xf]
        %v1566 = vld [vmem:[#allocation10 + $0x14] sm:$0xf]
        %v1567 = vld [vmem:[#allocation10 + $0x18] sm:$0xf]
        %v1568 = vld [vmem:[#allocation10 + $0x1c] sm:$0xf]
        %v1569 = vld [vmem:[#allocation10 + $0x20] sm:$0xf]
        %v1570 = vld [vmem:[#allocation10 + $0x24] sm:$0xf]
        %v1571 = vld [vmem:[#allocation10 + $0x28] sm:$0xf]
        %v1572 = vld [vmem:[#allocation10 + $0x2c] sm:$0xf]
        %v1573 = vld [vmem:[#allocation10 + $0x30] sm:$0xf]
        %v1574 = vld [vmem:[#allocation10 + $0x34] sm:$0xf]
        %v1575 = vld [vmem:[#allocation10 + $0x38] sm:$0xf]
        %v1576 = vld [vmem:[#allocation10 + $0x3c] sm:$0xf]
        %v1577 = vld [vmem:[#allocation11] sm:$0xf]
        %v1578 = vld [vmem:[#allocation11 + $0x4] sm:$0xf]
        %v1579 = vld [vmem:[#allocation11 + $0x8] sm:$0xf]
        %v1580 = vld [vmem:[#allocation11 + $0xc] sm:$0xf]
        %v1581 = vld [vmem:[#allocation11 + $0x10] sm:$0xf]
        %v1582 = vld [vmem:[#allocation11 + $0x14] sm:$0xf]
        %v1583 = vld [vmem:[#allocation11 + $0x18] sm:$0xf]
        %v1584 = vld [vmem:[#allocation11 + $0x1c] sm:$0xf]
        %v1585 = vld [vmem:[#allocation11 + $0x20] sm:$0xf]
        %v1586 = vld [vmem:[#allocation11 + $0x24] sm:$0xf]
        %v1587 = vld [vmem:[#allocation11 + $0x28] sm:$0xf]
        %v1588 = vld [vmem:[#allocation11 + $0x2c] sm:$0xf]
        %v1589 = vld [vmem:[#allocation11 + $0x30] sm:$0xf]
        %v1590 = vld [vmem:[#allocation11 + $0x34] sm:$0xf]
        %v1591 = vld [vmem:[#allocation11 + $0x38] sm:$0xf]
        %v1592 = vld [vmem:[#allocation11 + $0x3c] sm:$0xf]
        %v1593 = vld [vmem:[#allocation13] sm:$0xf]
        %v1594 = vld [vmem:[#allocation13 + $0x4] sm:$0xf]
        %v1595 = vld [vmem:[#allocation13 + $0x8] sm:$0xf]
        %v1596 = vld [vmem:[#allocation13 + $0xc] sm:$0xf]
        %v1597 = vld [vmem:[#allocation13 + $0x10] sm:$0xf]
        %v1598 = vld [vmem:[#allocation13 + $0x14] sm:$0xf]
        %v1599 = vld [vmem:[#allocation13 + $0x18] sm:$0xf]
        %v1600 = vld [vmem:[#allocation13 + $0x1c] sm:$0xf]
        %v1601 = vld [vmem:[#allocation13 + $0x20] sm:$0xf]
        %v1602 = vld [vmem:[#allocation13 + $0x24] sm:$0xf]
        %v1603 = vld [vmem:[#allocation13 + $0x28] sm:$0xf]
        %v1604 = vld [vmem:[#allocation13 + $0x2c] sm:$0xf]
        %v1605 = vld [vmem:[#allocation13 + $0x30] sm:$0xf]
        %v1606 = vld [vmem:[#allocation13 + $0x34] sm:$0xf]
        %v1607 = vld [vmem:[#allocation13 + $0x38] sm:$0xf]
        %v1608 = vld [vmem:[#allocation13 + $0x3c] sm:$0xf]
        %v1609 = vpack.c.bf16 %v1558, %v1557
        %v1610 = vpack.c.bf16 %v1560, %v1559
        %v1627 = vunpack.c.l.b16 %v1561
        %v1628 = vunpack.c.l.b16 %v1562
        %v1629 = vunpack.c.l.b16 %v1563
        %v1630 = vunpack.c.l.b16 %v1564
        %v1631 = vunpack.c.l.b16 %v1565
        %v1632 = vunpack.c.l.b16 %v1566
        %v1633 = vunpack.c.l.b16 %v1567
        %v1634 = vunpack.c.l.b16 %v1568
        %v1635 = vunpack.c.l.b16 %v1569
        %v1636 = vunpack.c.l.b16 %v1570
        %v1637 = vunpack.c.l.b16 %v1571
        %v1638 = vunpack.c.l.b16 %v1572
        %v1639 = vunpack.c.l.b16 %v1573
        %v1640 = vunpack.c.l.b16 %v1574
        %v1641 = vunpack.c.l.b16 %v1575
        %v1642 = vunpack.c.l.b16 %v1576
        %v1643 = vpack.c.b16 %v1628, %v1627
        %v1644 = vpack.c.b16 %v1630, %v1629
        %v1645 = vpack.c.b16 %v1632, %v1631
        %v1646 = vpack.c.b16 %v1634, %v1633
        %v1647 = vpack.c.b16 %v1636, %v1635
        %v1648 = vpack.c.b16 %v1638, %v1637
        %v1649 = vpack.c.b16 %v1640, %v1639
        %v1650 = vpack.c.b16 %v1642, %v1641
        %1659 = vmatprep.subr.bf16.mxu0 0
        %1660 = vmatpush1.bf16.msra.mxu0 %v1643
        %1661 = vmatprep.subr.bf16.mxu0 0
        %1662 = vmatpush1.bf16.msra.mxu0 %v1644
        %1663 = vmatprep.subr.bf16.mxu0 0
        %1664 = vmatpush1.bf16.msra.mxu0 %v1645
        %1665 = vmatprep.subr.bf16.mxu0 0
        %1666 = vmatpush1.bf16.msra.mxu0 %v1646
        %1667 = vmatprep.subr.bf16.mxu0 0
        %1668 = vmatpush1.bf16.msra.mxu0 %v1647
        %1669 = vmatprep.subr.bf16.mxu0 0
        %1670 = vmatpush1.bf16.msra.mxu0 %v1648
        %1671 = vmatprep.subr.bf16.mxu0 0
        %1672 = vmatpush1.bf16.msra.mxu0 %v1649
        %1673 = vmatprep.subr.bf16.mxu0 0
        %1674 = vmatpush1.bf16.msra.mxu0 %v1650
        %1675 = vmatprep.subr.bf16.mxu0 0
        %1676 = vmatpush1.bf16.msra.mxu0 0
        %1677 = vmatprep.subr.bf16.mxu0 0
        %1678 = vmatpush1.bf16.msra.mxu0 0
        %1679 = vmatprep.subr.bf16.mxu0 0
        %1680 = vmatpush1.bf16.msra.mxu0 0
        %1681 = vmatprep.subr.bf16.mxu0 0
        %1682 = vmatpush1.bf16.msra.mxu0 0
        %1683 = vmatprep.subr.bf16.mxu0 0
        %1684 = vmatpush1.bf16.msra.mxu0 0
        %1685 = vmatprep.subr.bf16.mxu0 0
        %1686 = vmatpush1.bf16.msra.mxu0 0
        %1687 = vmatprep.subr.bf16.mxu0 0
        %1688 = vmatpush1.bf16.msra.mxu0 0
        %1689 = vmatprep.subr.bf16.mxu0 0
        %1690 = vmatpush1.bf16.msra.mxu0 0
        %1691 = vmatprep.mubr.bf16.mxu0 0
        %1692 = vmatmul.mubr.bf16.gmra.mrb[0].mxu0 %v1609
        %v1693 = vpop.f32.mrb[0].mxu0
        %v1694 = vadd.f32 0.0, %v1693
        %v1695 = vpop.f32.mrb[0].mxu0
        %v1696 = vpop.f32.mrb[0].mxu0
        %v1697 = vadd.f32 0.0, %v1696
        %v1698 = vpop.f32.mrb[0].mxu0
        %1699 = vmatprep.mubr.bf16.mxu0 0
        %1700 = vmatmul.mubr.bf16.gmra.mrb[0].mxu0 %v1610
        %v1701 = vpop.f32.mrb[0].mxu0
        %v1702 = vadd.f32 0.0, %v1701
        %v1703 = vpop.f32.mrb[0].mxu0
        %v1704 = vpop.f32.mrb[0].mxu0
        %v1705 = vadd.f32 0.0, %v1704
        %v1706 = vpop.f32.mrb[0].mxu0
        %1707 = vdwg.mxu0
        %v1724 = vunpack.c.l.b16 %v1577
        %v1725 = vunpack.c.l.b16 %v1578
        %v1726 = vunpack.c.l.b16 %v1579
        %v1727 = vunpack.c.l.b16 %v1580
        %v1728 = vunpack.c.l.b16 %v1581
        %v1729 = vunpack.c.l.b16 %v1582
        %v1730 = vunpack.c.l.b16 %v1583
        %v1731 = vunpack.c.l.b16 %v1584
        %v1732 = vunpack.c.l.b16 %v1585
        %v1733 = vunpack.c.l.b16 %v1586
        %v1734 = vunpack.c.l.b16 %v1587
        %v1735 = vunpack.c.l.b16 %v1588
        %v1736 = vunpack.c.l.b16 %v1589
        %v1737 = vunpack.c.l.b16 %v1590
        %v1738 = vunpack.c.l.b16 %v1591
        %v1739 = vunpack.c.l.b16 %v1592
        %v1740 = vpack.c.b16 %v1725, %v1724
        %v1741 = vpack.c.b16 %v1727, %v1726
        %v1742 = vpack.c.b16 %v1729, %v1728
        %v1743 = vpack.c.b16 %v1731, %v1730
        %v1744 = vpack.c.b16 %v1733, %v1732
        %v1745 = vpack.c.b16 %v1735, %v1734
        %v1746 = vpack.c.b16 %v1737, %v1736
        %v1747 = vpack.c.b16 %v1739, %v1738
        %1756 = vmatprep.subr.bf16.mxu0 0
        %1757 = vmatpush1.bf16.msra.mxu0 %v1740
        %1758 = vmatprep.subr.bf16.mxu0 0
        %1759 = vmatpush1.bf16.msra.mxu0 %v1741
        %1760 = vmatprep.subr.bf16.mxu0 0
        %1761 = vmatpush1.bf16.msra.mxu0 %v1742
        %1762 = vmatprep.subr.bf16.mxu0 0
        %1763 = vmatpush1.bf16.msra.mxu0 %v1743
        %1764 = vmatprep.subr.bf16.mxu0 0
        %1765 = vmatpush1.bf16.msra.mxu0 %v1744
        %1766 = vmatprep.subr.bf16.mxu0 0
        %1767 = vmatpush1.bf16.msra.mxu0 %v1745
        %1768 = vmatprep.subr.bf16.mxu0 0
        %1769 = vmatpush1.bf16.msra.mxu0 %v1746
        %1770 = vmatprep.subr.bf16.mxu0 0
        %1771 = vmatpush1.bf16.msra.mxu0 %v1747
        %1772 = vmatprep.subr.bf16.mxu0 0
        %1773 = vmatpush1.bf16.msra.mxu0 0
        %1774 = vmatprep.subr.bf16.mxu0 0
        %1775 = vmatpush1.bf16.msra.mxu0 0
        %1776 = vmatprep.subr.bf16.mxu0 0
        %1777 = vmatpush1.bf16.msra.mxu0 0
        %1778 = vmatprep.subr.bf16.mxu0 0
        %1779 = vmatpush1.bf16.msra.mxu0 0
        %1780 = vmatprep.subr.bf16.mxu0 0
        %1781 = vmatpush1.bf16.msra.mxu0 0
        %1782 = vmatprep.subr.bf16.mxu0 0
        %1783 = vmatpush1.bf16.msra.mxu0 0
        %1784 = vmatprep.subr.bf16.mxu0 0
        %1785 = vmatpush1.bf16.msra.mxu0 0
        %1786 = vmatprep.subr.bf16.mxu0 0
        %1787 = vmatpush1.bf16.msra.mxu0 0
        %1788 = vmatprep.mubr.bf16.mxu0 0
        %1789 = vmatmul.mubr.bf16.gmra.mrb[0].mxu0 %v1609
        %v1790 = vpop.f32.mrb[0].mxu0
        %v1791 = vadd.f32 0.0, %v1790
        %v1792 = vpop.f32.mrb[0].mxu0
        %v1793 = vpop.f32.mrb[0].mxu0
        %v1794 = vadd.f32 0.0, %v1793
        %v1795 = vpop.f32.mrb[0].mxu0
        %1796 = vmatprep.mubr.bf16.mxu0 0
        %1797 = vmatmul.mubr.bf16.gmra.mrb[0].mxu0 %v1610
        %v1798 = vpop.f32.mrb[0].mxu0
        %v1799 = vadd.f32 0.0, %v1798
        %v1800 = vpop.f32.mrb[0].mxu0
        %v1801 = vpop.f32.mrb[0].mxu0
        %v1802 = vadd.f32 0.0, %v1801
        %v1803 = vpop.f32.mrb[0].mxu0
        %1804 = vdwg.mxu0
        %v1821 = vunpack.c.l.b16 %v1593
        %v1822 = vunpack.c.l.b16 %v1594
        %v1823 = vunpack.c.l.b16 %v1595
        %v1824 = vunpack.c.l.b16 %v1596
        %v1825 = vunpack.c.l.b16 %v1597
        %v1826 = vunpack.c.l.b16 %v1598
        %v1827 = vunpack.c.l.b16 %v1599
        %v1828 = vunpack.c.l.b16 %v1600
        %v1829 = vunpack.c.l.b16 %v1601
        %v1830 = vunpack.c.l.b16 %v1602
        %v1831 = vunpack.c.l.b16 %v1603
        %v1832 = vunpack.c.l.b16 %v1604
        %v1833 = vunpack.c.l.b16 %v1605
        %v1834 = vunpack.c.l.b16 %v1606
        %v1835 = vunpack.c.l.b16 %v1607
        %v1836 = vunpack.c.l.b16 %v1608
        %v1837 = vpack.c.b16 %v1822, %v1821
        %v1838 = vpack.c.b16 %v1824, %v1823
        %v1839 = vpack.c.b16 %v1826, %v1825
        %v1840 = vpack.c.b16 %v1828, %v1827
        %v1841 = vpack.c.b16 %v1830, %v1829
        %v1842 = vpack.c.b16 %v1832, %v1831
        %v1843 = vpack.c.b16 %v1834, %v1833
        %v1844 = vpack.c.b16 %v1836, %v1835
        %1853 = vmatprep.subr.bf16.mxu0 0
        %1854 = vmatpush1.bf16.msra.mxu0 %v1837
        %1855 = vmatprep.subr.bf16.mxu0 0
        %1856 = vmatpush1.bf16.msra.mxu0 %v1838
        %1857 = vmatprep.subr.bf16.mxu0 0
        %1858 = vmatpush1.bf16.msra.mxu0 %v1839
        %1859 = vmatprep.subr.bf16.mxu0 0
        %1860 = vmatpush1.bf16.msra.mxu0 %v1840
        %1861 = vmatprep.subr.bf16.mxu0 0
        %1862 = vmatpush1.bf16.msra.mxu0 %v1841
        %1863 = vmatprep.subr.bf16.mxu0 0
        %1864 = vmatpush1.bf16.msra.mxu0 %v1842
        %1865 = vmatprep.subr.bf16.mxu0 0
        %1866 = vmatpush1.bf16.msra.mxu0 %v1843
        %1867 = vmatprep.subr.bf16.mxu0 0
        %1868 = vmatpush1.bf16.msra.mxu0 %v1844
        %1869 = vmatprep.subr.bf16.mxu0 0
        %1870 = vmatpush1.bf16.msra.mxu0 0
        %1871 = vmatprep.subr.bf16.mxu0 0
        %1872 = vmatpush1.bf16.msra.mxu0 0
        %1873 = vmatprep.subr.bf16.mxu0 0
        %1874 = vmatpush1.bf16.msra.mxu0 0
        %1875 = vmatprep.subr.bf16.mxu0 0
        %1876 = vmatpush1.bf16.msra.mxu0 0
        %1877 = vmatprep.subr.bf16.mxu0 0
        %1878 = vmatpush1.bf16.msra.mxu0 0
        %1879 = vmatprep.subr.bf16.mxu0 0
        %1880 = vmatpush1.bf16.msra.mxu0 0
        %1881 = vmatprep.subr.bf16.mxu0 0
        %1882 = vmatpush1.bf16.msra.mxu0 0
        %1883 = vmatprep.subr.bf16.mxu0 0
        %1884 = vmatpush1.bf16.msra.mxu0 0
        %1885 = vmatprep.mubr.bf16.mxu0 0
        %1886 = vmatmul.mubr.bf16.gmra.mrb[0].mxu0 %v1609
        %v1887 = vpop.f32.mrb[0].mxu0
        %v1888 = vadd.f32 0.0, %v1887
        %v1889 = vpop.f32.mrb[0].mxu0
        %v1890 = vpop.f32.mrb[0].mxu0
        %v1891 = vadd.f32 0.0, %v1890
        %v1892 = vpop.f32.mrb[0].mxu0
        %1893 = vmatprep.mubr.bf16.mxu0 0
        %1894 = vmatmul.mubr.bf16.gmra.mrb[0].mxu0 %v1610
        %v1895 = vpop.f32.mrb[0].mxu0
        %v1896 = vadd.f32 0.0, %v1895
        %v1897 = vpop.f32.mrb[0].mxu0
        %v1898 = vpop.f32.mrb[0].mxu0
        %v1899 = vadd.f32 0.0, %v1898
        %v1900 = vpop.f32.mrb[0].mxu0
        %1901 = vdwg.mxu0
        %v1902 = vpack.c.bf16 %v1694, %v1694
        %v1903 = vpack.c.bf16 %v1697, %v1697
        %v1904 = vpack.c.bf16 %v1702, %v1702
        %v1905 = vpack.c.bf16 %v1705, %v1705
        %v1906 = vpack.c.bf16 %v1791, %v1791
        %v1907 = vpack.c.bf16 %v1794, %v1794
        %v1908 = vpack.c.bf16 %v1799, %v1799
        %v1909 = vpack.c.bf16 %v1802, %v1802
        %1910 = vmatprep.subr.bf16.mxu0 0
        %1911 = vmatpush1.bf16.xpose.msra.mxu0 %v1906
        %1912 = vmatprep.subr.bf16.mxu0 0
        %1913 = vmatpush1.bf16.xpose.msra.mxu0 0
        %1914 = vmatprep.subr.bf16.mxu0 0
        %1915 = vmatpush1.bf16.xpose.msra.mxu0 0
        %1916 = vmatprep.subr.bf16.mxu0 0
        %1917 = vmatpush1.bf16.xpose.msra.mxu0 0
        %1918 = vmatprep.subr.bf16.mxu0 0
        %1919 = vmatpush1.bf16.xpose.msra.mxu0 0
        %1920 = vmatprep.subr.bf16.mxu0 0
        %1921 = vmatpush1.bf16.xpose.msra.mxu0 0
        %1922 = vmatprep.subr.bf16.mxu0 0
        %1923 = vmatpush1.bf16.xpose.msra.mxu0 0
        %1924 = vmatprep.subr.bf16.mxu0 0
        %1925 = vmatpush1.bf16.xpose.msra.mxu0 0
        %1926 = vmatprep.subr.bf16.mxu0 0
        %1927 = vmatpush1.bf16.xpose.msra.mxu0 0
        %1928 = vmatprep.subr.bf16.mxu0 0
        %1929 = vmatpush1.bf16.xpose.msra.mxu0 0
        %1930 = vmatprep.subr.bf16.mxu0 0
        %1931 = vmatpush1.bf16.xpose.msra.mxu0 0
        %1932 = vmatprep.subr.bf16.mxu0 0
        %1933 = vmatpush1.bf16.xpose.msra.mxu0 0
        %1934 = vmatprep.subr.bf16.mxu0 0
        %1935 = vmatpush1.bf16.xpose.msra.mxu0 0
        %1936 = vmatprep.subr.bf16.mxu0 0
        %1937 = vmatpush1.bf16.xpose.msra.mxu0 0
        %1938 = vmatprep.subr.bf16.mxu0 0
        %1939 = vmatpush1.bf16.xpose.msra.mxu0 0
        %1940 = vmatprep.subr.bf16.mxu0 0
        %1941 = vmatpush1.bf16.xpose.msra.mxu0 0
        %1942 = vmatprep.mubr.bf16.mxu0 0
        %1943 = vmatmul.mubr.bf16.gmra.mrb[0].mxu0 %v1902
        %v1944 = vpop.f32.mrb[0].mxu0
        %v1945 = vadd.f32 0.0, %v1944
        %v1946 = vpop.f32.mrb[0].mxu0
        %v1947 = vpop.f32.mrb[0].mxu0
        %v1948 = vpop.f32.mrb[0].mxu0
        %1949 = vdwg.mxu0
        %1950 = vmatprep.subr.bf16.mxu0 0
        %1951 = vmatpush1.bf16.xpose.msra.mxu0 %v1907
        %1952 = vmatprep.subr.bf16.mxu0 0
        %1953 = vmatpush1.bf16.xpose.msra.mxu0 0
        %1954 = vmatprep.subr.bf16.mxu0 0
        %1955 = vmatpush1.bf16.xpose.msra.mxu0 0
        %1956 = vmatprep.subr.bf16.mxu0 0
        %1957 = vmatpush1.bf16.xpose.msra.mxu0 0
        %1958 = vmatprep.subr.bf16.mxu0 0
        %1959 = vmatpush1.bf16.xpose.msra.mxu0 0
        %1960 = vmatprep.subr.bf16.mxu0 0
        %1961 = vmatpush1.bf16.xpose.msra.mxu0 0
        %1962 = vmatprep.subr.bf16.mxu0 0
        %1963 = vmatpush1.bf16.xpose.msra.mxu0 0
        %1964 = vmatprep.subr.bf16.mxu0 0
        %1965 = vmatpush1.bf16.xpose.msra.mxu0 0
        %1966 = vmatprep.subr.bf16.mxu0 0
        %1967 = vmatpush1.bf16.xpose.msra.mxu0 0
        %1968 = vmatprep.subr.bf16.mxu0 0
        %1969 = vmatpush1.bf16.xpose.msra.mxu0 0
        %1970 = vmatprep.subr.bf16.mxu0 0
        %1971 = vmatpush1.bf16.xpose.msra.mxu0 0
        %1972 = vmatprep.subr.bf16.mxu0 0
        %1973 = vmatpush1.bf16.xpose.msra.mxu0 0
        %1974 = vmatprep.subr.bf16.mxu0 0
        %1975 = vmatpush1.bf16.xpose.msra.mxu0 0
        %1976 = vmatprep.subr.bf16.mxu0 0
        %1977 = vmatpush1.bf16.xpose.msra.mxu0 0
        %1978 = vmatprep.subr.bf16.mxu0 0
        %1979 = vmatpush1.bf16.xpose.msra.mxu0 0
        %1980 = vmatprep.subr.bf16.mxu0 0
        %1981 = vmatpush1.bf16.xpose.msra.mxu0 0
        %1982 = vmatprep.mubr.bf16.mxu0 0
        %1983 = vmatmul.mubr.bf16.gmra.mrb[0].mxu0 %v1903
        %v1984 = vpop.f32.mrb[0].mxu0
        %v1985 = vadd.f32 0.0, %v1984
        %v1986 = vpop.f32.mrb[0].mxu0
        %v1987 = vpop.f32.mrb[0].mxu0
        %v1988 = vpop.f32.mrb[0].mxu0
        %1989 = vdwg.mxu0
        %1990 = vmatprep.subr.bf16.mxu0 0
        %1991 = vmatpush1.bf16.xpose.msra.mxu0 %v1908
        %1992 = vmatprep.subr.bf16.mxu0 0
        %1993 = vmatpush1.bf16.xpose.msra.mxu0 0
        %1994 = vmatprep.subr.bf16.mxu0 0
        %1995 = vmatpush1.bf16.xpose.msra.mxu0 0
        %1996 = vmatprep.subr.bf16.mxu0 0
        %1997 = vmatpush1.bf16.xpose.msra.mxu0 0
        %1998 = vmatprep.subr.bf16.mxu0 0
        %1999 = vmatpush1.bf16.xpose.msra.mxu0 0
        %2000 = vmatprep.subr.bf16.mxu0 0
        %2001 = vmatpush1.bf16.xpose.msra.mxu0 0
        %2002 = vmatprep.subr.bf16.mxu0 0
        %2003 = vmatpush1.bf16.xpose.msra.mxu0 0
        %2004 = vmatprep.subr.bf16.mxu0 0
        %2005 = vmatpush1.bf16.xpose.msra.mxu0 0
        %2006 = vmatprep.subr.bf16.mxu0 0
        %2007 = vmatpush1.bf16.xpose.msra.mxu0 0
        %2008 = vmatprep.subr.bf16.mxu0 0
        %2009 = vmatpush1.bf16.xpose.msra.mxu0 0
        %2010 = vmatprep.subr.bf16.mxu0 0
        %2011 = vmatpush1.bf16.xpose.msra.mxu0 0
        %2012 = vmatprep.subr.bf16.mxu0 0
        %2013 = vmatpush1.bf16.xpose.msra.mxu0 0
        %2014 = vmatprep.subr.bf16.mxu0 0
        %2015 = vmatpush1.bf16.xpose.msra.mxu0 0
        %2016 = vmatprep.subr.bf16.mxu0 0
        %2017 = vmatpush1.bf16.xpose.msra.mxu0 0
        %2018 = vmatprep.subr.bf16.mxu0 0
        %2019 = vmatpush1.bf16.xpose.msra.mxu0 0
        %2020 = vmatprep.subr.bf16.mxu0 0
        %2021 = vmatpush1.bf16.xpose.msra.mxu0 0
        %2022 = vmatprep.mubr.bf16.mxu0 0
        %2023 = vmatmul.mubr.bf16.gmra.mrb[0].mxu0 %v1904
        %v2024 = vpop.f32.mrb[0].mxu0
        %v2025 = vadd.f32 0.0, %v2024
        %v2026 = vpop.f32.mrb[0].mxu0
        %v2027 = vpop.f32.mrb[0].mxu0
        %v2028 = vpop.f32.mrb[0].mxu0
        %2029 = vdwg.mxu0
        %2030 = vmatprep.subr.bf16.mxu0 0
        %2031 = vmatpush1.bf16.xpose.msra.mxu0 %v1909
        %2032 = vmatprep.subr.bf16.mxu0 0
        %2033 = vmatpush1.bf16.xpose.msra.mxu0 0
        %2034 = vmatprep.subr.bf16.mxu0 0
        %2035 = vmatpush1.bf16.xpose.msra.mxu0 0
        %2036 = vmatprep.subr.bf16.mxu0 0
        %2037 = vmatpush1.bf16.xpose.msra.mxu0 0
        %2038 = vmatprep.subr.bf16.mxu0 0
        %2039 = vmatpush1.bf16.xpose.msra.mxu0 0
        %2040 = vmatprep.subr.bf16.mxu0 0
        %2041 = vmatpush1.bf16.xpose.msra.mxu0 0
        %2042 = vmatprep.subr.bf16.mxu0 0
        %2043 = vmatpush1.bf16.xpose.msra.mxu0 0
        %2044 = vmatprep.subr.bf16.mxu0 0
        %2045 = vmatpush1.bf16.xpose.msra.mxu0 0
        %2046 = vmatprep.subr.bf16.mxu0 0
        %2047 = vmatpush1.bf16.xpose.msra.mxu0 0
        %2048 = vmatprep.subr.bf16.mxu0 0
        %2049 = vmatpush1.bf16.xpose.msra.mxu0 0
        %2050 = vmatprep.subr.bf16.mxu0 0
        %2051 = vmatpush1.bf16.xpose.msra.mxu0 0
        %2052 = vmatprep.subr.bf16.mxu0 0
        %2053 = vmatpush1.bf16.xpose.msra.mxu0 0
        %2054 = vmatprep.subr.bf16.mxu0 0
        %2055 = vmatpush1.bf16.xpose.msra.mxu0 0
        %2056 = vmatprep.subr.bf16.mxu0 0
        %2057 = vmatpush1.bf16.xpose.msra.mxu0 0
        %2058 = vmatprep.subr.bf16.mxu0 0
        %2059 = vmatpush1.bf16.xpose.msra.mxu0 0
        %2060 = vmatprep.subr.bf16.mxu0 0
        %2061 = vmatpush1.bf16.xpose.msra.mxu0 0
        %2062 = vmatprep.mubr.bf16.mxu0 0
        %2063 = vmatmul.mubr.bf16.gmra.mrb[0].mxu0 %v1905
        %v2064 = vpop.f32.mrb[0].mxu0
        %v2065 = vadd.f32 0.0, %v2064
        %v2066 = vpop.f32.mrb[0].mxu0
        %v2067 = vpop.f32.mrb[0].mxu0
        %v2068 = vpop.f32.mrb[0].mxu0
        %2069 = vdwg.mxu0
        %v2070 = vsel %vm1197, %v1945, -inf
        %2071 = vmax.xlane.f32.xlu0 %v2070
        %v2072 = vpop.xlane.xlu0 %2071
        %v2073 = vsel %vm1197, %v1985, -inf
        %2074 = vmax.xlane.f32.xlu0 %v2073
        %v2075 = vpop.xlane.xlu0 %2074
        %v2076 = vsel %vm1197, %v2025, -inf
        %2077 = vmax.xlane.f32.xlu0 %v2076
        %v2078 = vpop.xlane.xlu0 %2077
        %v2079 = vsel %vm1197, %v2065, -inf
        %2080 = vmax.xlane.f32.xlu0 %v2079
        %v2081 = vpop.xlane.xlu0 %2080
        %v2082 = vsub.f32 %v1945, %v2072
        %v2083 = vsub.f32 %v1985, %v2075
        %v2084 = vsub.f32 %v2025, %v2078
        %v2085 = vsub.f32 %v2065, %v2081
        %v2086 = vmul.f32 %v2082, 1.442695
        %v2087 = vpow.pop %v2086
        %v2088 = vmul.f32 %v2083, 1.442695
        %v2089 = vpow.pop %v2088
        %v2090 = vmul.f32 %v2084, 1.442695
        %v2091 = vpow.pop %v2090
        %v2092 = vmul.f32 %v2085, 1.442695
        %v2093 = vpow.pop %v2092
        %v2094 = vsel %vm1197, %v2087, 0.0
        %2095 = vadd.xlane.f32.xlu0 %v2094
        %v2096 = vpop.xlane.xlu0 %2095
        %v2097 = vsel %vm1197, %v2089, 0.0
        %2098 = vadd.xlane.f32.xlu0 %v2097
        %v2099 = vpop.xlane.xlu0 %2098
        %v2100 = vsel %vm1197, %v2091, 0.0
        %2101 = vadd.xlane.f32.xlu0 %v2100
        %v2102 = vpop.xlane.xlu0 %2101
        %v2103 = vsel %vm1197, %v2093, 0.0
        %2104 = vadd.xlane.f32.xlu0 %v2103
        %v2105 = vpop.xlane.xlu0 %2104
        %v2106 = vpack.c.bf16 %v2087, %v2087
        %v2107 = vpack.c.bf16 %v2089, %v2089
        %v2108 = vpack.c.bf16 %v2091, %v2091
        %v2109 = vpack.c.bf16 %v2093, %v2093
        %v2110 = vpack.c.bf16 %v1888, %v1888
        %v2111 = vpack.c.bf16 %v1891, %v1891
        %v2112 = vpack.c.bf16 %v1896, %v1896
        %v2113 = vpack.c.bf16 %v1899, %v1899
        %v2115 = vsel %vm1197, %v2106, 0
        %v2118 = vsel %vm1245, %v2110, 0
        %2120 = vmatprep.subr.bf16.mxu0 0
        %2121 = vmatpush1.bf16.msra.mxu0 %v2118
        %2122 = vmatprep.subr.bf16.mxu0 0
        %2123 = vmatpush1.bf16.msra.mxu0 0
        %2124 = vmatprep.subr.bf16.mxu0 0
        %2125 = vmatpush1.bf16.msra.mxu0 0
        %2126 = vmatprep.subr.bf16.mxu0 0
        %2127 = vmatpush1.bf16.msra.mxu0 0
        %2128 = vmatprep.subr.bf16.mxu0 0
        %2129 = vmatpush1.bf16.msra.mxu0 0
        %2130 = vmatprep.subr.bf16.mxu0 0
        %2131 = vmatpush1.bf16.msra.mxu0 0
        %2132 = vmatprep.subr.bf16.mxu0 0
        %2133 = vmatpush1.bf16.msra.mxu0 0
        %2134 = vmatprep.subr.bf16.mxu0 0
        %2135 = vmatpush1.bf16.msra.mxu0 0
        %2136 = vmatprep.subr.bf16.mxu0 0
        %2137 = vmatpush1.bf16.msra.mxu0 0
        %2138 = vmatprep.subr.bf16.mxu0 0
        %2139 = vmatpush1.bf16.msra.mxu0 0
        %2140 = vmatprep.subr.bf16.mxu0 0
        %2141 = vmatpush1.bf16.msra.mxu0 0
        %2142 = vmatprep.subr.bf16.mxu0 0
        %2143 = vmatpush1.bf16.msra.mxu0 0
        %2144 = vmatprep.subr.bf16.mxu0 0
        %2145 = vmatpush1.bf16.msra.mxu0 0
        %2146 = vmatprep.subr.bf16.mxu0 0
        %2147 = vmatpush1.bf16.msra.mxu0 0
        %2148 = vmatprep.subr.bf16.mxu0 0
        %2149 = vmatpush1.bf16.msra.mxu0 0
        %2150 = vmatprep.subr.bf16.mxu0 0
        %2151 = vmatpush1.bf16.msra.mxu0 0
        %2152 = vmatprep.mubr.bf16.mxu0 0
        %2153 = vmatmul.mubr.bf16.gmra.mrb[0].mxu0 %v2115
        %v2154 = vpop.f32.mrb[0].mxu0
        %v2155 = vadd.f32 0.0, %v2154
        %v2156 = vpop.f32.mrb[0].mxu0
        %v2157 = vpop.f32.mrb[0].mxu0
        %v2158 = vpop.f32.mrb[0].mxu0
        %2159 = vdwg.mxu0
        %v2161 = vsel %vm1197, %v2107, 0
        %v2164 = vsel %vm1245, %v2111, 0
        %2166 = vmatprep.subr.bf16.mxu0 0
        %2167 = vmatpush1.bf16.msra.mxu0 %v2164
        %2168 = vmatprep.subr.bf16.mxu0 0
        %2169 = vmatpush1.bf16.msra.mxu0 0
        %2170 = vmatprep.subr.bf16.mxu0 0
        %2171 = vmatpush1.bf16.msra.mxu0 0
        %2172 = vmatprep.subr.bf16.mxu0 0
        %2173 = vmatpush1.bf16.msra.mxu0 0
        %2174 = vmatprep.subr.bf16.mxu0 0
        %2175 = vmatpush1.bf16.msra.mxu0 0
        %2176 = vmatprep.subr.bf16.mxu0 0
        %2177 = vmatpush1.bf16.msra.mxu0 0
        %2178 = vmatprep.subr.bf16.mxu0 0
        %2179 = vmatpush1.bf16.msra.mxu0 0
        %2180 = vmatprep.subr.bf16.mxu0 0
        %2181 = vmatpush1.bf16.msra.mxu0 0
        %2182 = vmatprep.subr.bf16.mxu0 0
        %2183 = vmatpush1.bf16.msra.mxu0 0
        %2184 = vmatprep.subr.bf16.mxu0 0
        %2185 = vmatpush1.bf16.msra.mxu0 0
        %2186 = vmatprep.subr.bf16.mxu0 0
        %2187 = vmatpush1.bf16.msra.mxu0 0
        %2188 = vmatprep.subr.bf16.mxu0 0
        %2189 = vmatpush1.bf16.msra.mxu0 0
        %2190 = vmatprep.subr.bf16.mxu0 0
        %2191 = vmatpush1.bf16.msra.mxu0 0
        %2192 = vmatprep.subr.bf16.mxu0 0
        %2193 = vmatpush1.bf16.msra.mxu0 0
        %2194 = vmatprep.subr.bf16.mxu0 0
        %2195 = vmatpush1.bf16.msra.mxu0 0
        %2196 = vmatprep.subr.bf16.mxu0 0
        %2197 = vmatpush1.bf16.msra.mxu0 0
        %2198 = vmatprep.mubr.bf16.mxu0 0
        %2199 = vmatmul.mubr.bf16.gmra.mrb[0].mxu0 %v2161
        %v2200 = vpop.f32.mrb[0].mxu0
        %v2201 = vadd.f32 0.0, %v2200
        %v2202 = vpop.f32.mrb[0].mxu0
        %v2203 = vpop.f32.mrb[0].mxu0
        %v2204 = vpop.f32.mrb[0].mxu0
        %2205 = vdwg.mxu0
        %v2207 = vsel %vm1197, %v2108, 0
        %v2210 = vsel %vm1245, %v2112, 0
        %2212 = vmatprep.subr.bf16.mxu0 0
        %2213 = vmatpush1.bf16.msra.mxu0 %v2210
        %2214 = vmatprep.subr.bf16.mxu0 0
        %2215 = vmatpush1.bf16.msra.mxu0 0
        %2216 = vmatprep.subr.bf16.mxu0 0
        %2217 = vmatpush1.bf16.msra.mxu0 0
        %2218 = vmatprep.subr.bf16.mxu0 0
        %2219 = vmatpush1.bf16.msra.mxu0 0
        %2220 = vmatprep.subr.bf16.mxu0 0
        %2221 = vmatpush1.bf16.msra.mxu0 0
        %2222 = vmatprep.subr.bf16.mxu0 0
        %2223 = vmatpush1.bf16.msra.mxu0 0
        %2224 = vmatprep.subr.bf16.mxu0 0
        %2225 = vmatpush1.bf16.msra.mxu0 0
        %2226 = vmatprep.subr.bf16.mxu0 0
        %2227 = vmatpush1.bf16.msra.mxu0 0
        %2228 = vmatprep.subr.bf16.mxu0 0
        %2229 = vmatpush1.bf16.msra.mxu0 0
        %2230 = vmatprep.subr.bf16.mxu0 0
        %2231 = vmatpush1.bf16.msra.mxu0 0
        %2232 = vmatprep.subr.bf16.mxu0 0
        %2233 = vmatpush1.bf16.msra.mxu0 0
        %2234 = vmatprep.subr.bf16.mxu0 0
        %2235 = vmatpush1.bf16.msra.mxu0 0
        %2236 = vmatprep.subr.bf16.mxu0 0
        %2237 = vmatpush1.bf16.msra.mxu0 0
        %2238 = vmatprep.subr.bf16.mxu0 0
        %2239 = vmatpush1.bf16.msra.mxu0 0
        %2240 = vmatprep.subr.bf16.mxu0 0
        %2241 = vmatpush1.bf16.msra.mxu0 0
        %2242 = vmatprep.subr.bf16.mxu0 0
        %2243 = vmatpush1.bf16.msra.mxu0 0
        %2244 = vmatprep.mubr.bf16.mxu0 0
        %2245 = vmatmul.mubr.bf16.gmra.mrb[0].mxu0 %v2207
        %v2246 = vpop.f32.mrb[0].mxu0
        %v2247 = vadd.f32 0.0, %v2246
        %v2248 = vpop.f32.mrb[0].mxu0
        %v2249 = vpop.f32.mrb[0].mxu0
        %v2250 = vpop.f32.mrb[0].mxu0
        %2251 = vdwg.mxu0
        %v2253 = vsel %vm1197, %v2109, 0
        %v2256 = vsel %vm1245, %v2113, 0
        %2258 = vmatprep.subr.bf16.mxu0 0
        %2259 = vmatpush1.bf16.msra.mxu0 %v2256
        %2260 = vmatprep.subr.bf16.mxu0 0
        %2261 = vmatpush1.bf16.msra.mxu0 0
        %2262 = vmatprep.subr.bf16.mxu0 0
        %2263 = vmatpush1.bf16.msra.mxu0 0
        %2264 = vmatprep.subr.bf16.mxu0 0
        %2265 = vmatpush1.bf16.msra.mxu0 0
        %2266 = vmatprep.subr.bf16.mxu0 0
        %2267 = vmatpush1.bf16.msra.mxu0 0
        %2268 = vmatprep.subr.bf16.mxu0 0
        %2269 = vmatpush1.bf16.msra.mxu0 0
        %2270 = vmatprep.subr.bf16.mxu0 0
        %2271 = vmatpush1.bf16.msra.mxu0 0
        %2272 = vmatprep.subr.bf16.mxu0 0
        %2273 = vmatpush1.bf16.msra.mxu0 0
        %2274 = vmatprep.subr.bf16.mxu0 0
        %2275 = vmatpush1.bf16.msra.mxu0 0
        %2276 = vmatprep.subr.bf16.mxu0 0
        %2277 = vmatpush1.bf16.msra.mxu0 0
        %2278 = vmatprep.subr.bf16.mxu0 0
        %2279 = vmatpush1.bf16.msra.mxu0 0
        %2280 = vmatprep.subr.bf16.mxu0 0
        %2281 = vmatpush1.bf16.msra.mxu0 0
        %2282 = vmatprep.subr.bf16.mxu0 0
        %2283 = vmatpush1.bf16.msra.mxu0 0
        %2284 = vmatprep.subr.bf16.mxu0 0
        %2285 = vmatpush1.bf16.msra.mxu0 0
        %2286 = vmatprep.subr.bf16.mxu0 0
        %2287 = vmatpush1.bf16.msra.mxu0 0
        %2288 = vmatprep.subr.bf16.mxu0 0
        %2289 = vmatpush1.bf16.msra.mxu0 0
        %2290 = vmatprep.mubr.bf16.mxu0 0
        %2291 = vmatmul.mubr.bf16.gmra.mrb[0].mxu0 %v2253
        %v2292 = vpop.f32.mrb[0].mxu0
        %v2293 = vadd.f32 0.0, %v2292
        %v2294 = vpop.f32.mrb[0].mxu0
        %v2295 = vpop.f32.mrb[0].mxu0
        %v2296 = vpop.f32.mrb[0].mxu0
        %2297 = vdwg.mxu0
        %v2298 = vrcp.pop %v2096
        %v2299 = vrcp.pop %v2099
        %v2300 = vrcp.pop %v2102
        %v2301 = vrcp.pop %v2105
        %v2302 = vmul.f32 %v2155, %v2298
        %v2303 = vmul.f32 %v2201, %v2299
        %v2304 = vmul.f32 %v2247, %v2300
        %v2305 = vmul.f32 %v2293, %v2301
        %v2306 = vld [vmem:[%s9] sm:$0xff]
        %v2307 = vld [vmem:[%s9 + $0x8] sm:$0xff]
        %v2308 = vld [vmem:[%s9 + $0x10] sm:$0xff]
        %v2309 = vld [vmem:[%s9 + $0x18] sm:$0xff]
        %v2310 = vld [vmem:[%s9 + $0x20] sm:$0xff]
        %v2311 = vld [vmem:[%s9 + $0x28] sm:$0xff]
        %v2312 = vld [vmem:[%s9 + $0x30] sm:$0xff]
        %v2313 = vld [vmem:[%s9 + $0x38] sm:$0xff]
        %v2314 = vld [vmem:[%s9 + $0x40] sm:$0xff]
        %v2315 = vld [vmem:[%s9 + $0x48] sm:$0xff]
        %v2316 = vld [vmem:[%s9 + $0x50] sm:$0xff]
        %v2317 = vld [vmem:[%s9 + $0x58] sm:$0xff]
        %v2318 = vld [vmem:[%s9 + $0x60] sm:$0xff]
        %v2319 = vld [vmem:[%s9 + $0x68] sm:$0xff]
        %v2320 = vld [vmem:[%s9 + $0x70] sm:$0xff]
        %v2321 = vld [vmem:[%s9 + $0x78] sm:$0xff]
        %v2322 = vld [vmem:[%s10] sm:$0x3]
        %v2323 = vpack.c.bf16 %v2303, %v2302
        %v2324 = vpack.c.bf16 %v2305, %v2304
        %v2326 = vlaneseq
        %v2327 = vshrl.u32 %v2326, 7
        %v2328 = vsub.s32 0, %v2327
        %v2329 = vrot.slane %v2322, %v2328
        %v2330 = vlaneseq
        %v2331 = vshrl.u32 %v2330, 7
        %v2332 = vsub.s32 1, %v2331
        %v2333 = vrot.slane %v2322, %v2332
        %v2352 = vunpack.c.l.b16 %v2306
        %v2353 = vunpack.c.h.b16 %v2306
        %v2354 = vunpack.c.l.b16 %v2307
        %v2355 = vunpack.c.h.b16 %v2307
        %v2356 = vunpack.c.l.b16 %v2308
        %v2357 = vunpack.c.h.b16 %v2308
        %v2358 = vunpack.c.l.b16 %v2309
        %v2359 = vunpack.c.h.b16 %v2309
        %v2360 = vunpack.c.l.b16 %v2310
        %v2361 = vunpack.c.h.b16 %v2310
        %v2362 = vunpack.c.l.b16 %v2311
        %v2363 = vunpack.c.h.b16 %v2311
        %v2364 = vunpack.c.l.b16 %v2312
        %v2365 = vunpack.c.h.b16 %v2312
        %v2366 = vunpack.c.l.b16 %v2313
        %v2367 = vunpack.c.h.b16 %v2313
        %v2368 = vunpack.c.l.b16 %v2314
        %v2369 = vunpack.c.h.b16 %v2314
        %v2370 = vunpack.c.l.b16 %v2315
        %v2371 = vunpack.c.h.b16 %v2315
        %v2372 = vunpack.c.l.b16 %v2316
        %v2373 = vunpack.c.h.b16 %v2316
        %v2374 = vunpack.c.l.b16 %v2317
        %v2375 = vunpack.c.h.b16 %v2317
        %v2376 = vunpack.c.l.b16 %v2318
        %v2377 = vunpack.c.h.b16 %v2318
        %v2378 = vunpack.c.l.b16 %v2319
        %v2379 = vunpack.c.h.b16 %v2319
        %v2380 = vunpack.c.l.b16 %v2320
        %v2381 = vunpack.c.h.b16 %v2320
        %v2382 = vunpack.c.l.b16 %v2321
        %v2383 = vunpack.c.h.b16 %v2321
        %v2384 = vpack.c.b16 %v2354, %v2352
        %v2385 = vpack.c.b16 %v2355, %v2353
        %v2386 = vpack.c.b16 %v2358, %v2356
        %v2387 = vpack.c.b16 %v2359, %v2357
        %v2388 = vpack.c.b16 %v2362, %v2360
        %v2389 = vpack.c.b16 %v2363, %v2361
        %v2390 = vpack.c.b16 %v2366, %v2364
        %v2391 = vpack.c.b16 %v2367, %v2365
        %v2392 = vpack.c.b16 %v2370, %v2368
        %v2393 = vpack.c.b16 %v2371, %v2369
        %v2394 = vpack.c.b16 %v2374, %v2372
        %v2395 = vpack.c.b16 %v2375, %v2373
        %v2396 = vpack.c.b16 %v2378, %v2376
        %v2397 = vpack.c.b16 %v2379, %v2377
        %v2398 = vpack.c.b16 %v2382, %v2380
        %v2399 = vpack.c.b16 %v2383, %v2381
        %2416 = vmatprep.subr.bf16.mxu0 %v2385
        %2417 = vmatpush1.bf16.msra.mxu0 %v2384
        %2418 = vmatprep.subr.bf16.mxu0 %v2387
        %2419 = vmatpush1.bf16.msra.mxu0 %v2386
        %2420 = vmatprep.subr.bf16.mxu0 %v2389
        %2421 = vmatpush1.bf16.msra.mxu0 %v2388
        %2422 = vmatprep.subr.bf16.mxu0 %v2391
        %2423 = vmatpush1.bf16.msra.mxu0 %v2390
        %2424 = vmatprep.subr.bf16.mxu0 %v2393
        %2425 = vmatpush1.bf16.msra.mxu0 %v2392
        %2426 = vmatprep.subr.bf16.mxu0 %v2395
        %2427 = vmatpush1.bf16.msra.mxu0 %v2394
        %2428 = vmatprep.subr.bf16.mxu0 %v2397
        %2429 = vmatpush1.bf16.msra.mxu0 %v2396
        %2430 = vmatprep.subr.bf16.mxu0 %v2399
        %2431 = vmatpush1.bf16.msra.mxu0 %v2398
        %2432 = vmatprep.subr.bf16.mxu0 0
        %2433 = vmatpush1.bf16.msra.mxu0 0
        %2434 = vmatprep.subr.bf16.mxu0 0
        %2435 = vmatpush1.bf16.msra.mxu0 0
        %2436 = vmatprep.subr.bf16.mxu0 0
        %2437 = vmatpush1.bf16.msra.mxu0 0
        %2438 = vmatprep.subr.bf16.mxu0 0
        %2439 = vmatpush1.bf16.msra.mxu0 0
        %2440 = vmatprep.subr.bf16.mxu0 0
        %2441 = vmatpush1.bf16.msra.mxu0 0
        %2442 = vmatprep.subr.bf16.mxu0 0
        %2443 = vmatpush1.bf16.msra.mxu0 0
        %2444 = vmatprep.subr.bf16.mxu0 0
        %2445 = vmatpush1.bf16.msra.mxu0 0
        %2446 = vmatprep.subr.bf16.mxu0 0
        %2447 = vmatpush1.bf16.msra.mxu0 0
        %2448 = vmatprep.mubr.bf16.mxu0 0
        %2449 = vmatmul.mubr.bf16.gmra.mrb[0].mxu0 %v2323
        %v2450 = vpop.f32.mrb[0].mxu0
        %v2451 = vadd.f32 %v2329, %v2450
        %v2452 = vpop.f32.mrb[0].mxu0
        %v2453 = vadd.f32 %v2333, %v2452
        %v2454 = vpop.f32.mrb[0].mxu0
        %v2455 = vadd.f32 %v2329, %v2454
        %v2456 = vpop.f32.mrb[0].mxu0
        %v2457 = vadd.f32 %v2333, %v2456
        %2458 = vmatprep.mubr.bf16.mxu0 0
        %2459 = vmatmul.mubr.bf16.gmra.mrb[0].mxu0 %v2324
        %v2460 = vpop.f32.mrb[0].mxu0
        %v2461 = vadd.f32 %v2329, %v2460
        %v2462 = vpop.f32.mrb[0].mxu0
        %v2463 = vadd.f32 %v2333, %v2462
        %v2464 = vpop.f32.mrb[0].mxu0
        %v2465 = vadd.f32 %v2329, %v2464
        %v2466 = vpop.f32.mrb[0].mxu0
        %v2467 = vadd.f32 %v2333, %v2466
        %2468 = vdwg.mxu0
        %v2469 = vmax.f32 %v2451, 0.0
        %v2470 = vmax.f32 %v2453, 0.0
        %v2471 = vmax.f32 %v2455, 0.0
        %v2472 = vmax.f32 %v2457, 0.0
        %v2473 = vmax.f32 %v2461, 0.0
        %v2474 = vmax.f32 %v2463, 0.0
        %v2475 = vmax.f32 %v2465, 0.0
        %v2476 = vmax.f32 %v2467, 0.0
        %v2477 = vld [vmem:[#allocation14] sm:$0xff]
        %v2478 = vld [vmem:[#allocation14 + $0x8] sm:$0xff]
        %v2479 = vld [vmem:[#allocation14 + $0x10] sm:$0xff]
        %v2480 = vld [vmem:[#allocation14 + $0x18] sm:$0xff]
        %v2481 = vld [vmem:[#allocation14 + $0x20] sm:$0xff]
        %v2482 = vld [vmem:[#allocation14 + $0x28] sm:$0xff]
        %v2483 = vld [vmem:[#allocation14 + $0x30] sm:$0xff]
        %v2484 = vld [vmem:[#allocation14 + $0x38] sm:$0xff]
        %v2485 = vld [vmem:[#allocation14 + $0x40] sm:$0xff]
        %v2486 = vld [vmem:[#allocation14 + $0x48] sm:$0xff]
        %v2487 = vld [vmem:[#allocation14 + $0x50] sm:$0xff]
        %v2488 = vld [vmem:[#allocation14 + $0x58] sm:$0xff]
        %v2489 = vld [vmem:[#allocation14 + $0x60] sm:$0xff]
        %v2490 = vld [vmem:[#allocation14 + $0x68] sm:$0xff]
        %v2491 = vld [vmem:[#allocation14 + $0x70] sm:$0xff]
        %v2492 = vld [vmem:[#allocation14 + $0x78] sm:$0xff]
        %v2493 = vld [vmem:[#allocation14 + $0x80] sm:$0xff]
        %v2494 = vld [vmem:[#allocation14 + $0x88] sm:$0xff]
        %v2495 = vld [vmem:[#allocation14 + $0x90] sm:$0xff]
        %v2496 = vld [vmem:[#allocation14 + $0x98] sm:$0xff]
        %v2497 = vld [vmem:[#allocation14 + $0xa0] sm:$0xff]
        %v2498 = vld [vmem:[#allocation14 + $0xa8] sm:$0xff]
        %v2499 = vld [vmem:[#allocation14 + $0xb0] sm:$0xff]
        %v2500 = vld [vmem:[#allocation14 + $0xb8] sm:$0xff]
        %v2501 = vld [vmem:[#allocation14 + $0xc0] sm:$0xff]
        %v2502 = vld [vmem:[#allocation14 + $0xc8] sm:$0xff]
        %v2503 = vld [vmem:[#allocation14 + $0xd0] sm:$0xff]
        %v2504 = vld [vmem:[#allocation14 + $0xd8] sm:$0xff]
        %v2505 = vld [vmem:[#allocation14 + $0xe0] sm:$0xff]
        %v2506 = vld [vmem:[#allocation14 + $0xe8] sm:$0xff]
        %v2507 = vld [vmem:[#allocation14 + $0xf0] sm:$0xff]
        %v2508 = vld [vmem:[#allocation14 + $0xf8] sm:$0xff]
        %v2509 = vld [vmem:[#allocation16] sm:$0xff]
        %v2510 = vld [vmem:[#allocation16 + $0x8] sm:$0xff]
        %v2511 = vld [vmem:[#allocation16 + $0x10] sm:$0xff]
        %v2512 = vld [vmem:[#allocation16 + $0x18] sm:$0xff]
        %v2513 = vld [vmem:[#allocation16 + $0x20] sm:$0xff]
        %v2514 = vld [vmem:[#allocation16 + $0x28] sm:$0xff]
        %v2515 = vld [vmem:[#allocation16 + $0x30] sm:$0xff]
        %v2516 = vld [vmem:[#allocation16 + $0x38] sm:$0xff]
        %v2517 = vld [vmem:[#allocation16 + $0x40] sm:$0xff]
        %v2518 = vld [vmem:[#allocation16 + $0x48] sm:$0xff]
        %v2519 = vld [vmem:[#allocation16 + $0x50] sm:$0xff]
        %v2520 = vld [vmem:[#allocation16 + $0x58] sm:$0xff]
        %v2521 = vld [vmem:[#allocation16 + $0x60] sm:$0xff]
        %v2522 = vld [vmem:[#allocation16 + $0x68] sm:$0xff]
        %v2523 = vld [vmem:[#allocation16 + $0x70] sm:$0xff]
        %v2524 = vld [vmem:[#allocation16 + $0x78] sm:$0xff]
        %v2525 = vld [vmem:[#allocation16 + $0x80] sm:$0xff]
        %v2526 = vld [vmem:[#allocation16 + $0x88] sm:$0xff]
        %v2527 = vld [vmem:[#allocation16 + $0x90] sm:$0xff]
        %v2528 = vld [vmem:[#allocation16 + $0x98] sm:$0xff]
        %v2529 = vld [vmem:[#allocation16 + $0xa0] sm:$0xff]
        %v2530 = vld [vmem:[#allocation16 + $0xa8] sm:$0xff]
        %v2531 = vld [vmem:[#allocation16 + $0xb0] sm:$0xff]
        %v2532 = vld [vmem:[#allocation16 + $0xb8] sm:$0xff]
        %v2533 = vld [vmem:[#allocation16 + $0xc0] sm:$0xff]
        %v2534 = vld [vmem:[#allocation16 + $0xc8] sm:$0xff]
        %v2535 = vld [vmem:[#allocation16 + $0xd0] sm:$0xff]
        %v2536 = vld [vmem:[#allocation16 + $0xd8] sm:$0xff]
        %v2537 = vld [vmem:[#allocation16 + $0xe0] sm:$0xff]
        %v2538 = vld [vmem:[#allocation16 + $0xe8] sm:$0xff]
        %v2539 = vld [vmem:[#allocation16 + $0xf0] sm:$0xff]
        %v2540 = vld [vmem:[#allocation16 + $0xf8] sm:$0xff]
        %v2541 = vld [vmem:[#allocation17] sm:$0xff]
        %v2542 = vld [vmem:[#allocation17 + $0x8] sm:$0xff]
        %v2543 = vld [vmem:[#allocation17 + $0x10] sm:$0xff]
        %v2544 = vld [vmem:[#allocation17 + $0x18] sm:$0xff]
        %v2545 = vld [vmem:[#allocation17 + $0x20] sm:$0xff]
        %v2546 = vld [vmem:[#allocation17 + $0x28] sm:$0xff]
        %v2547 = vld [vmem:[#allocation17 + $0x30] sm:$0xff]
        %v2548 = vld [vmem:[#allocation17 + $0x38] sm:$0xff]
        %v2549 = vld [vmem:[#allocation17 + $0x40] sm:$0xff]
        %v2550 = vld [vmem:[#allocation17 + $0x48] sm:$0xff]
        %v2551 = vld [vmem:[#allocation17 + $0x50] sm:$0xff]
        %v2552 = vld [vmem:[#allocation17 + $0x58] sm:$0xff]
        %v2553 = vld [vmem:[#allocation17 + $0x60] sm:$0xff]
        %v2554 = vld [vmem:[#allocation17 + $0x68] sm:$0xff]
        %v2555 = vld [vmem:[#allocation17 + $0x70] sm:$0xff]
        %v2556 = vld [vmem:[#allocation17 + $0x78] sm:$0xff]
        %v2557 = vld [vmem:[#allocation17 + $0x80] sm:$0xff]
        %v2558 = vld [vmem:[#allocation17 + $0x88] sm:$0xff]
        %v2559 = vld [vmem:[#allocation17 + $0x90] sm:$0xff]
        %v2560 = vld [vmem:[#allocation17 + $0x98] sm:$0xff]
        %v2561 = vld [vmem:[#allocation17 + $0xa0] sm:$0xff]
        %v2562 = vld [vmem:[#allocation17 + $0xa8] sm:$0xff]
        %v2563 = vld [vmem:[#allocation17 + $0xb0] sm:$0xff]
        %v2564 = vld [vmem:[#allocation17 + $0xb8] sm:$0xff]
        %v2565 = vld [vmem:[#allocation17 + $0xc0] sm:$0xff]
        %v2566 = vld [vmem:[#allocation17 + $0xc8] sm:$0xff]
        %v2567 = vld [vmem:[#allocation17 + $0xd0] sm:$0xff]
        %v2568 = vld [vmem:[#allocation17 + $0xd8] sm:$0xff]
        %v2569 = vld [vmem:[#allocation17 + $0xe0] sm:$0xff]
        %v2570 = vld [vmem:[#allocation17 + $0xe8] sm:$0xff]
        %v2571 = vld [vmem:[#allocation17 + $0xf0] sm:$0xff]
        %v2572 = vld [vmem:[#allocation17 + $0xf8] sm:$0xff]
        %v2573 = vpack.c.bf16 %v2471, %v2469
        %v2574 = vpack.c.bf16 %v2472, %v2470
        %v2575 = vpack.c.bf16 %v2475, %v2473
        %v2576 = vpack.c.bf16 %v2476, %v2474
        %v2609 = vunpack.c.l.b16 %v2477
        %v2610 = vunpack.c.h.b16 %v2477
        %v2611 = vunpack.c.l.b16 %v2478
        %v2612 = vunpack.c.h.b16 %v2478
        %v2613 = vunpack.c.l.b16 %v2479
        %v2614 = vunpack.c.h.b16 %v2479
        %v2615 = vunpack.c.l.b16 %v2480
        %v2616 = vunpack.c.h.b16 %v2480
        %v2617 = vunpack.c.l.b16 %v2481
        %v2618 = vunpack.c.h.b16 %v2481
        %v2619 = vunpack.c.l.b16 %v2482
        %v2620 = vunpack.c.h.b16 %v2482
        %v2621 = vunpack.c.l.b16 %v2483
        %v2622 = vunpack.c.h.b16 %v2483
        %v2623 = vunpack.c.l.b16 %v2484
        %v2624 = vunpack.c.h.b16 %v2484
        %v2625 = vunpack.c.l.b16 %v2485
        %v2626 = vunpack.c.h.b16 %v2485
        %v2627 = vunpack.c.l.b16 %v2486
        %v2628 = vunpack.c.h.b16 %v2486
        %v2629 = vunpack.c.l.b16 %v2487
        %v2630 = vunpack.c.h.b16 %v2487
        %v2631 = vunpack.c.l.b16 %v2488
        %v2632 = vunpack.c.h.b16 %v2488
        %v2633 = vunpack.c.l.b16 %v2489
        %v2634 = vunpack.c.h.b16 %v2489
        %v2635 = vunpack.c.l.b16 %v2490
        %v2636 = vunpack.c.h.b16 %v2490
        %v2637 = vunpack.c.l.b16 %v2491
        %v2638 = vunpack.c.h.b16 %v2491
        %v2639 = vunpack.c.l.b16 %v2492
        %v2640 = vunpack.c.h.b16 %v2492
        %v2641 = vunpack.c.l.b16 %v2493
        %v2642 = vunpack.c.h.b16 %v2493
        %v2643 = vunpack.c.l.b16 %v2494
        %v2644 = vunpack.c.h.b16 %v2494
        %v2645 = vunpack.c.l.b16 %v2495
        %v2646 = vunpack.c.h.b16 %v2495
        %v2647 = vunpack.c.l.b16 %v2496
        %v2648 = vunpack.c.h.b16 %v2496
        %v2649 = vunpack.c.l.b16 %v2497
        %v2650 = vunpack.c.h.b16 %v2497
        %v2651 = vunpack.c.l.b16 %v2498
        %v2652 = vunpack.c.h.b16 %v2498
        %v2653 = vunpack.c.l.b16 %v2499
        %v2654 = vunpack.c.h.b16 %v2499
        %v2655 = vunpack.c.l.b16 %v2500
        %v2656 = vunpack.c.h.b16 %v2500
        %v2657 = vunpack.c.l.b16 %v2501
        %v2658 = vunpack.c.h.b16 %v2501
        %v2659 = vunpack.c.l.b16 %v2502
        %v2660 = vunpack.c.h.b16 %v2502
        %v2661 = vunpack.c.l.b16 %v2503
        %v2662 = vunpack.c.h.b16 %v2503
        %v2663 = vunpack.c.l.b16 %v2504
        %v2664 = vunpack.c.h.b16 %v2504
        %v2665 = vunpack.c.l.b16 %v2505
        %v2666 = vunpack.c.h.b16 %v2505
        %v2667 = vunpack.c.l.b16 %v2506
        %v2668 = vunpack.c.h.b16 %v2506
        %v2669 = vunpack.c.l.b16 %v2507
        %v2670 = vunpack.c.h.b16 %v2507
        %v2671 = vunpack.c.l.b16 %v2508
        %v2672 = vunpack.c.h.b16 %v2508
        %v2673 = vpack.c.b16 %v2611, %v2609
        %v2674 = vpack.c.b16 %v2612, %v2610
        %v2675 = vpack.c.b16 %v2615, %v2613
        %v2676 = vpack.c.b16 %v2616, %v2614
        %v2677 = vpack.c.b16 %v2619, %v2617
        %v2678 = vpack.c.b16 %v2620, %v2618
        %v2679 = vpack.c.b16 %v2623, %v2621
        %v2680 = vpack.c.b16 %v2624, %v2622
        %v2681 = vpack.c.b16 %v2627, %v2625
        %v2682 = vpack.c.b16 %v2628, %v2626
        %v2683 = vpack.c.b16 %v2631, %v2629
        %v2684 = vpack.c.b16 %v2632, %v2630
        %v2685 = vpack.c.b16 %v2635, %v2633
        %v2686 = vpack.c.b16 %v2636, %v2634
        %v2687 = vpack.c.b16 %v2639, %v2637
        %v2688 = vpack.c.b16 %v2640, %v2638
        %v2689 = vpack.c.b16 %v2643, %v2641
        %v2690 = vpack.c.b16 %v2644, %v2642
        %v2691 = vpack.c.b16 %v2647, %v2645
        %v2692 = vpack.c.b16 %v2648, %v2646
        %v2693 = vpack.c.b16 %v2651, %v2649
        %v2694 = vpack.c.b16 %v2652, %v2650
        %v2695 = vpack.c.b16 %v2655, %v2653
        %v2696 = vpack.c.b16 %v2656, %v2654
        %v2697 = vpack.c.b16 %v2659, %v2657
        %v2698 = vpack.c.b16 %v2660, %v2658
        %v2699 = vpack.c.b16 %v2663, %v2661
        %v2700 = vpack.c.b16 %v2664, %v2662
        %v2701 = vpack.c.b16 %v2667, %v2665
        %v2702 = vpack.c.b16 %v2668, %v2666
        %v2703 = vpack.c.b16 %v2671, %v2669
        %v2704 = vpack.c.b16 %v2672, %v2670
        %2737 = vmatprep.subr.bf16.mxu0 %v2674
        %2738 = vmatpush1.bf16.msra.mxu0 %v2673
        %2739 = vmatprep.subr.bf16.mxu0 %v2676
        %2740 = vmatpush1.bf16.msra.mxu0 %v2675
        %2741 = vmatprep.subr.bf16.mxu0 %v2678
        %2742 = vmatpush1.bf16.msra.mxu0 %v2677
        %2743 = vmatprep.subr.bf16.mxu0 %v2680
        %2744 = vmatpush1.bf16.msra.mxu0 %v2679
        %2745 = vmatprep.subr.bf16.mxu0 %v2682
        %2746 = vmatpush1.bf16.msra.mxu0 %v2681
        %2747 = vmatprep.subr.bf16.mxu0 %v2684
        %2748 = vmatpush1.bf16.msra.mxu0 %v2683
        %2749 = vmatprep.subr.bf16.mxu0 %v2686
        %2750 = vmatpush1.bf16.msra.mxu0 %v2685
        %2751 = vmatprep.subr.bf16.mxu0 %v2688
        %2752 = vmatpush1.bf16.msra.mxu0 %v2687
        %2753 = vmatprep.subr.bf16.mxu0 %v2690
        %2754 = vmatpush1.bf16.msra.mxu0 %v2689
        %2755 = vmatprep.subr.bf16.mxu0 %v2692
        %2756 = vmatpush1.bf16.msra.mxu0 %v2691
        %2757 = vmatprep.subr.bf16.mxu0 %v2694
        %2758 = vmatpush1.bf16.msra.mxu0 %v2693
        %2759 = vmatprep.subr.bf16.mxu0 %v2696
        %2760 = vmatpush1.bf16.msra.mxu0 %v2695
        %2761 = vmatprep.subr.bf16.mxu0 %v2698
        %2762 = vmatpush1.bf16.msra.mxu0 %v2697
        %2763 = vmatprep.subr.bf16.mxu0 %v2700
        %2764 = vmatpush1.bf16.msra.mxu0 %v2699
        %2765 = vmatprep.subr.bf16.mxu0 %v2702
        %2766 = vmatpush1.bf16.msra.mxu0 %v2701
        %2767 = vmatprep.subr.bf16.mxu0 %v2704
        %2768 = vmatpush1.bf16.msra.mxu0 %v2703
        %2769 = vmatprep.mubr.bf16.mxu0 %v2574
        %2770 = vmatmul.mubr.bf16.gmra.mrb[0].mxu0 %v2573
        %v2771 = vpop.f32.mrb[0].mxu0
        %v2772 = vadd.f32 0.0, %v2771
        %v2773 = vpop.f32.mrb[0].mxu0
        %v2774 = vadd.f32 0.0, %v2773
        %v2775 = vpop.f32.mrb[0].mxu0
        %v2776 = vadd.f32 0.0, %v2775
        %v2777 = vpop.f32.mrb[0].mxu0
        %v2778 = vadd.f32 0.0, %v2777
        %2779 = vmatprep.mubr.bf16.mxu0 %v2576
        %2780 = vmatmul.mubr.bf16.gmra.mrb[0].mxu0 %v2575
        %v2781 = vpop.f32.mrb[0].mxu0
        %v2782 = vadd.f32 0.0, %v2781
        %v2783 = vpop.f32.mrb[0].mxu0
        %v2784 = vadd.f32 0.0, %v2783
        %v2785 = vpop.f32.mrb[0].mxu0
        %v2786 = vadd.f32 0.0, %v2785
        %v2787 = vpop.f32.mrb[0].mxu0
        %v2788 = vadd.f32 0.0, %v2787
        %2789 = vdwg.mxu0
        %v2822 = vunpack.c.l.b16 %v2509
        %v2823 = vunpack.c.h.b16 %v2509
        %v2824 = vunpack.c.l.b16 %v2510
        %v2825 = vunpack.c.h.b16 %v2510
        %v2826 = vunpack.c.l.b16 %v2511
        %v2827 = vunpack.c.h.b16 %v2511
        %v2828 = vunpack.c.l.b16 %v2512
        %v2829 = vunpack.c.h.b16 %v2512
        %v2830 = vunpack.c.l.b16 %v2513
        %v2831 = vunpack.c.h.b16 %v2513
        %v2832 = vunpack.c.l.b16 %v2514
        %v2833 = vunpack.c.h.b16 %v2514
        %v2834 = vunpack.c.l.b16 %v2515
        %v2835 = vunpack.c.h.b16 %v2515
        %v2836 = vunpack.c.l.b16 %v2516
        %v2837 = vunpack.c.h.b16 %v2516
        %v2838 = vunpack.c.l.b16 %v2517
        %v2839 = vunpack.c.h.b16 %v2517
        %v2840 = vunpack.c.l.b16 %v2518
        %v2841 = vunpack.c.h.b16 %v2518
        %v2842 = vunpack.c.l.b16 %v2519
        %v2843 = vunpack.c.h.b16 %v2519
        %v2844 = vunpack.c.l.b16 %v2520
        %v2845 = vunpack.c.h.b16 %v2520
        %v2846 = vunpack.c.l.b16 %v2521
        %v2847 = vunpack.c.h.b16 %v2521
        %v2848 = vunpack.c.l.b16 %v2522
        %v2849 = vunpack.c.h.b16 %v2522
        %v2850 = vunpack.c.l.b16 %v2523
        %v2851 = vunpack.c.h.b16 %v2523
        %v2852 = vunpack.c.l.b16 %v2524
        %v2853 = vunpack.c.h.b16 %v2524
        %v2854 = vunpack.c.l.b16 %v2525
        %v2855 = vunpack.c.h.b16 %v2525
        %v2856 = vunpack.c.l.b16 %v2526
        %v2857 = vunpack.c.h.b16 %v2526
        %v2858 = vunpack.c.l.b16 %v2527
        %v2859 = vunpack.c.h.b16 %v2527
        %v2860 = vunpack.c.l.b16 %v2528
        %v2861 = vunpack.c.h.b16 %v2528
        %v2862 = vunpack.c.l.b16 %v2529
        %v2863 = vunpack.c.h.b16 %v2529
        %v2864 = vunpack.c.l.b16 %v2530
        %v2865 = vunpack.c.h.b16 %v2530
        %v2866 = vunpack.c.l.b16 %v2531
        %v2867 = vunpack.c.h.b16 %v2531
        %v2868 = vunpack.c.l.b16 %v2532
        %v2869 = vunpack.c.h.b16 %v2532
        %v2870 = vunpack.c.l.b16 %v2533
        %v2871 = vunpack.c.h.b16 %v2533
        %v2872 = vunpack.c.l.b16 %v2534
        %v2873 = vunpack.c.h.b16 %v2534
        %v2874 = vunpack.c.l.b16 %v2535
        %v2875 = vunpack.c.h.b16 %v2535
        %v2876 = vunpack.c.l.b16 %v2536
        %v2877 = vunpack.c.h.b16 %v2536
        %v2878 = vunpack.c.l.b16 %v2537
        %v2879 = vunpack.c.h.b16 %v2537
        %v2880 = vunpack.c.l.b16 %v2538
        %v2881 = vunpack.c.h.b16 %v2538
        %v2882 = vunpack.c.l.b16 %v2539
        %v2883 = vunpack.c.h.b16 %v2539
        %v2884 = vunpack.c.l.b16 %v2540
        %v2885 = vunpack.c.h.b16 %v2540
        %v2886 = vpack.c.b16 %v2824, %v2822
        %v2887 = vpack.c.b16 %v2825, %v2823
        %v2888 = vpack.c.b16 %v2828, %v2826
        %v2889 = vpack.c.b16 %v2829, %v2827
        %v2890 = vpack.c.b16 %v2832, %v2830
        %v2891 = vpack.c.b16 %v2833, %v2831
        %v2892 = vpack.c.b16 %v2836, %v2834
        %v2893 = vpack.c.b16 %v2837, %v2835
        %v2894 = vpack.c.b16 %v2840, %v2838
        %v2895 = vpack.c.b16 %v2841, %v2839
        %v2896 = vpack.c.b16 %v2844, %v2842
        %v2897 = vpack.c.b16 %v2845, %v2843
        %v2898 = vpack.c.b16 %v2848, %v2846
        %v2899 = vpack.c.b16 %v2849, %v2847
        %v2900 = vpack.c.b16 %v2852, %v2850
        %v2901 = vpack.c.b16 %v2853, %v2851
        %v2902 = vpack.c.b16 %v2856, %v2854
        %v2903 = vpack.c.b16 %v2857, %v2855
        %v2904 = vpack.c.b16 %v2860, %v2858
        %v2905 = vpack.c.b16 %v2861, %v2859
        %v2906 = vpack.c.b16 %v2864, %v2862
        %v2907 = vpack.c.b16 %v2865, %v2863
        %v2908 = vpack.c.b16 %v2868, %v2866
        %v2909 = vpack.c.b16 %v2869, %v2867
        %v2910 = vpack.c.b16 %v2872, %v2870
        %v2911 = vpack.c.b16 %v2873, %v2871
        %v2912 = vpack.c.b16 %v2876, %v2874
        %v2913 = vpack.c.b16 %v2877, %v2875
        %v2914 = vpack.c.b16 %v2880, %v2878
        %v2915 = vpack.c.b16 %v2881, %v2879
        %v2916 = vpack.c.b16 %v2884, %v2882
        %v2917 = vpack.c.b16 %v2885, %v2883
        %2950 = vmatprep.subr.bf16.mxu0 %v2887
        %2951 = vmatpush1.bf16.msra.mxu0 %v2886
        %2952 = vmatprep.subr.bf16.mxu0 %v2889
        %2953 = vmatpush1.bf16.msra.mxu0 %v2888
        %2954 = vmatprep.subr.bf16.mxu0 %v2891
        %2955 = vmatpush1.bf16.msra.mxu0 %v2890
        %2956 = vmatprep.subr.bf16.mxu0 %v2893
        %2957 = vmatpush1.bf16.msra.mxu0 %v2892
        %2958 = vmatprep.subr.bf16.mxu0 %v2895
        %2959 = vmatpush1.bf16.msra.mxu0 %v2894
        %2960 = vmatprep.subr.bf16.mxu0 %v2897
        %2961 = vmatpush1.bf16.msra.mxu0 %v2896
        %2962 = vmatprep.subr.bf16.mxu0 %v2899
        %2963 = vmatpush1.bf16.msra.mxu0 %v2898
        %2964 = vmatprep.subr.bf16.mxu0 %v2901
        %2965 = vmatpush1.bf16.msra.mxu0 %v2900
        %2966 = vmatprep.subr.bf16.mxu0 %v2903
        %2967 = vmatpush1.bf16.msra.mxu0 %v2902
        %2968 = vmatprep.subr.bf16.mxu0 %v2905
        %2969 = vmatpush1.bf16.msra.mxu0 %v2904
        %2970 = vmatprep.subr.bf16.mxu0 %v2907
        %2971 = vmatpush1.bf16.msra.mxu0 %v2906
        %2972 = vmatprep.subr.bf16.mxu0 %v2909
        %2973 = vmatpush1.bf16.msra.mxu0 %v2908
        %2974 = vmatprep.subr.bf16.mxu0 %v2911
        %2975 = vmatpush1.bf16.msra.mxu0 %v2910
        %2976 = vmatprep.subr.bf16.mxu0 %v2913
        %2977 = vmatpush1.bf16.msra.mxu0 %v2912
        %2978 = vmatprep.subr.bf16.mxu0 %v2915
        %2979 = vmatpush1.bf16.msra.mxu0 %v2914
        %2980 = vmatprep.subr.bf16.mxu0 %v2917
        %2981 = vmatpush1.bf16.msra.mxu0 %v2916
        %2982 = vmatprep.mubr.bf16.mxu0 %v2574
        %2983 = vmatmul.mubr.bf16.gmra.mrb[0].mxu0 %v2573
        %v2984 = vpop.f32.mrb[0].mxu0
        %v2985 = vadd.f32 0.0, %v2984
        %v2986 = vpop.f32.mrb[0].mxu0
        %v2987 = vadd.f32 0.0, %v2986
        %v2988 = vpop.f32.mrb[0].mxu0
        %v2989 = vadd.f32 0.0, %v2988
        %v2990 = vpop.f32.mrb[0].mxu0
        %v2991 = vadd.f32 0.0, %v2990
        %2992 = vmatprep.mubr.bf16.mxu0 %v2576
        %2993 = vmatmul.mubr.bf16.gmra.mrb[0].mxu0 %v2575
        %v2994 = vpop.f32.mrb[0].mxu0
        %v2995 = vadd.f32 0.0, %v2994
        %v2996 = vpop.f32.mrb[0].mxu0
        %v2997 = vadd.f32 0.0, %v2996
        %v2998 = vpop.f32.mrb[0].mxu0
        %v2999 = vadd.f32 0.0, %v2998
        %v3000 = vpop.f32.mrb[0].mxu0
        %v3001 = vadd.f32 0.0, %v3000
        %3002 = vdwg.mxu0
        %v3035 = vunpack.c.l.b16 %v2541
        %v3036 = vunpack.c.h.b16 %v2541
        %v3037 = vunpack.c.l.b16 %v2542
        %v3038 = vunpack.c.h.b16 %v2542
        %v3039 = vunpack.c.l.b16 %v2543
        %v3040 = vunpack.c.h.b16 %v2543
        %v3041 = vunpack.c.l.b16 %v2544
        %v3042 = vunpack.c.h.b16 %v2544
        %v3043 = vunpack.c.l.b16 %v2545
        %v3044 = vunpack.c.h.b16 %v2545
        %v3045 = vunpack.c.l.b16 %v2546
        %v3046 = vunpack.c.h.b16 %v2546
        %v3047 = vunpack.c.l.b16 %v2547
        %v3048 = vunpack.c.h.b16 %v2547
        %v3049 = vunpack.c.l.b16 %v2548
        %v3050 = vunpack.c.h.b16 %v2548
        %v3051 = vunpack.c.l.b16 %v2549
        %v3052 = vunpack.c.h.b16 %v2549
        %v3053 = vunpack.c.l.b16 %v2550
        %v3054 = vunpack.c.h.b16 %v2550
        %v3055 = vunpack.c.l.b16 %v2551
        %v3056 = vunpack.c.h.b16 %v2551
        %v3057 = vunpack.c.l.b16 %v2552
        %v3058 = vunpack.c.h.b16 %v2552
        %v3059 = vunpack.c.l.b16 %v2553
        %v3060 = vunpack.c.h.b16 %v2553
        %v3061 = vunpack.c.l.b16 %v2554
        %v3062 = vunpack.c.h.b16 %v2554
        %v3063 = vunpack.c.l.b16 %v2555
        %v3064 = vunpack.c.h.b16 %v2555
        %v3065 = vunpack.c.l.b16 %v2556
        %v3066 = vunpack.c.h.b16 %v2556
        %v3067 = vunpack.c.l.b16 %v2557
        %v3068 = vunpack.c.h.b16 %v2557
        %v3069 = vunpack.c.l.b16 %v2558
        %v3070 = vunpack.c.h.b16 %v2558
        %v3071 = vunpack.c.l.b16 %v2559
        %v3072 = vunpack.c.h.b16 %v2559
        %v3073 = vunpack.c.l.b16 %v2560
        %v3074 = vunpack.c.h.b16 %v2560
        %v3075 = vunpack.c.l.b16 %v2561
        %v3076 = vunpack.c.h.b16 %v2561
        %v3077 = vunpack.c.l.b16 %v2562
        %v3078 = vunpack.c.h.b16 %v2562
        %v3079 = vunpack.c.l.b16 %v2563
        %v3080 = vunpack.c.h.b16 %v2563
        %v3081 = vunpack.c.l.b16 %v2564
        %v3082 = vunpack.c.h.b16 %v2564
        %v3083 = vunpack.c.l.b16 %v2565
        %v3084 = vunpack.c.h.b16 %v2565
        %v3085 = vunpack.c.l.b16 %v2566
        %v3086 = vunpack.c.h.b16 %v2566
        %v3087 = vunpack.c.l.b16 %v2567
        %v3088 = vunpack.c.h.b16 %v2567
        %v3089 = vunpack.c.l.b16 %v2568
        %v3090 = vunpack.c.h.b16 %v2568
        %v3091 = vunpack.c.l.b16 %v2569
        %v3092 = vunpack.c.h.b16 %v2569
        %v3093 = vunpack.c.l.b16 %v2570
        %v3094 = vunpack.c.h.b16 %v2570
        %v3095 = vunpack.c.l.b16 %v2571
        %v3096 = vunpack.c.h.b16 %v2571
        %v3097 = vunpack.c.l.b16 %v2572
        %v3098 = vunpack.c.h.b16 %v2572
        %v3099 = vpack.c.b16 %v3037, %v3035
        %v3100 = vpack.c.b16 %v3038, %v3036
        %v3101 = vpack.c.b16 %v3041, %v3039
        %v3102 = vpack.c.b16 %v3042, %v3040
        %v3103 = vpack.c.b16 %v3045, %v3043
        %v3104 = vpack.c.b16 %v3046, %v3044
        %v3105 = vpack.c.b16 %v3049, %v3047
        %v3106 = vpack.c.b16 %v3050, %v3048
        %v3107 = vpack.c.b16 %v3053, %v3051
        %v3108 = vpack.c.b16 %v3054, %v3052
        %v3109 = vpack.c.b16 %v3057, %v3055
        %v3110 = vpack.c.b16 %v3058, %v3056
        %v3111 = vpack.c.b16 %v3061, %v3059
        %v3112 = vpack.c.b16 %v3062, %v3060
        %v3113 = vpack.c.b16 %v3065, %v3063
        %v3114 = vpack.c.b16 %v3066, %v3064
        %v3115 = vpack.c.b16 %v3069, %v3067
        %v3116 = vpack.c.b16 %v3070, %v3068
        %v3117 = vpack.c.b16 %v3073, %v3071
        %v3118 = vpack.c.b16 %v3074, %v3072
        %v3119 = vpack.c.b16 %v3077, %v3075
        %v3120 = vpack.c.b16 %v3078, %v3076
        %v3121 = vpack.c.b16 %v3081, %v3079
        %v3122 = vpack.c.b16 %v3082, %v3080
        %v3123 = vpack.c.b16 %v3085, %v3083
        %v3124 = vpack.c.b16 %v3086, %v3084
        %v3125 = vpack.c.b16 %v3089, %v3087
        %v3126 = vpack.c.b16 %v3090, %v3088
        %v3127 = vpack.c.b16 %v3093, %v3091
        %v3128 = vpack.c.b16 %v3094, %v3092
        %v3129 = vpack.c.b16 %v3097, %v3095
        %v3130 = vpack.c.b16 %v3098, %v3096
        %3163 = vmatprep.subr.bf16.mxu0 %v3100
        %3164 = vmatpush1.bf16.msra.mxu0 %v3099
        %3165 = vmatprep.subr.bf16.mxu0 %v3102
        %3166 = vmatpush1.bf16.msra.mxu0 %v3101
        %3167 = vmatprep.subr.bf16.mxu0 %v3104
        %3168 = vmatpush1.bf16.msra.mxu0 %v3103
        %3169 = vmatprep.subr.bf16.mxu0 %v3106
        %3170 = vmatpush1.bf16.msra.mxu0 %v3105
        %3171 = vmatprep.subr.bf16.mxu0 %v3108
        %3172 = vmatpush1.bf16.msra.mxu0 %v3107
        %3173 = vmatprep.subr.bf16.mxu0 %v3110
        %3174 = vmatpush1.bf16.msra.mxu0 %v3109
        %3175 = vmatprep.subr.bf16.mxu0 %v3112
        %3176 = vmatpush1.bf16.msra.mxu0 %v3111
        %3177 = vmatprep.subr.bf16.mxu0 %v3114
        %3178 = vmatpush1.bf16.msra.mxu0 %v3113
        %3179 = vmatprep.subr.bf16.mxu0 %v3116
        %3180 = vmatpush1.bf16.msra.mxu0 %v3115
        %3181 = vmatprep.subr.bf16.mxu0 %v3118
        %3182 = vmatpush1.bf16.msra.mxu0 %v3117
        %3183 = vmatprep.subr.bf16.mxu0 %v3120
        %3184 = vmatpush1.bf16.msra.mxu0 %v3119
        %3185 = vmatprep.subr.bf16.mxu0 %v3122
        %3186 = vmatpush1.bf16.msra.mxu0 %v3121
        %3187 = vmatprep.subr.bf16.mxu0 %v3124
        %3188 = vmatpush1.bf16.msra.mxu0 %v3123
        %3189 = vmatprep.subr.bf16.mxu0 %v3126
        %3190 = vmatpush1.bf16.msra.mxu0 %v3125
        %3191 = vmatprep.subr.bf16.mxu0 %v3128
        %3192 = vmatpush1.bf16.msra.mxu0 %v3127
        %3193 = vmatprep.subr.bf16.mxu0 %v3130
        %3194 = vmatpush1.bf16.msra.mxu0 %v3129
        %3195 = vmatprep.mubr.bf16.mxu0 %v2574
        %3196 = vmatmul.mubr.bf16.gmra.mrb[0].mxu0 %v2573
        %v3197 = vpop.f32.mrb[0].mxu0
        %v3198 = vadd.f32 0.0, %v3197
        %v3199 = vpop.f32.mrb[0].mxu0
        %v3200 = vadd.f32 0.0, %v3199
        %v3201 = vpop.f32.mrb[0].mxu0
        %v3202 = vadd.f32 0.0, %v3201
        %v3203 = vpop.f32.mrb[0].mxu0
        %v3204 = vadd.f32 0.0, %v3203
        %3205 = vmatprep.mubr.bf16.mxu0 %v2576
        %3206 = vmatmul.mubr.bf16.gmra.mrb[0].mxu0 %v2575
        %v3207 = vpop.f32.mrb[0].mxu0
        %v3208 = vadd.f32 0.0, %v3207
        %v3209 = vpop.f32.mrb[0].mxu0
        %v3210 = vadd.f32 0.0, %v3209
        %v3211 = vpop.f32.mrb[0].mxu0
        %v3212 = vadd.f32 0.0, %v3211
        %v3213 = vpop.f32.mrb[0].mxu0
        %v3214 = vadd.f32 0.0, %v3213
        %3215 = vdwg.mxu0
        %v3216 = vpack.c.bf16 %v2772, %v2772
        %v3217 = vpack.c.bf16 %v2774, %v2774
        %v3218 = vpack.c.bf16 %v2776, %v2776
        %v3219 = vpack.c.bf16 %v2778, %v2778
        %v3220 = vpack.c.bf16 %v2782, %v2782
        %v3221 = vpack.c.bf16 %v2784, %v2784
        %v3222 = vpack.c.bf16 %v2786, %v2786
        %v3223 = vpack.c.bf16 %v2788, %v2788
        %v3224 = vpack.c.bf16 %v2985, %v2985
        %v3225 = vpack.c.bf16 %v2987, %v2987
        %v3226 = vpack.c.bf16 %v2989, %v2989
        %v3227 = vpack.c.bf16 %v2991, %v2991
        %v3228 = vpack.c.bf16 %v2995, %v2995
        %v3229 = vpack.c.bf16 %v2997, %v2997
        %v3230 = vpack.c.bf16 %v2999, %v2999
        %v3231 = vpack.c.bf16 %v3001, %v3001
        %3232 = vmatprep.subr.bf16.mxu0 %v3225
        %3233 = vmatpush1.bf16.xpose.msra.mxu0 %v3224
        %3234 = vmatprep.subr.bf16.mxu0 0
        %3235 = vmatpush1.bf16.xpose.msra.mxu0 0
        %3236 = vmatprep.subr.bf16.mxu0 0
        %3237 = vmatpush1.bf16.xpose.msra.mxu0 0
        %3238 = vmatprep.subr.bf16.mxu0 0
        %3239 = vmatpush1.bf16.xpose.msra.mxu0 0
        %3240 = vmatprep.subr.bf16.mxu0 0
        %3241 = vmatpush1.bf16.xpose.msra.mxu0 0
        %3242 = vmatprep.subr.bf16.mxu0 0
        %3243 = vmatpush1.bf16.xpose.msra.mxu0 0
        %3244 = vmatprep.subr.bf16.mxu0 0
        %3245 = vmatpush1.bf16.xpose.msra.mxu0 0
        %3246 = vmatprep.subr.bf16.mxu0 0
        %3247 = vmatpush1.bf16.xpose.msra.mxu0 0
        %3248 = vmatprep.subr.bf16.mxu0 0
        %3249 = vmatpush1.bf16.xpose.msra.mxu0 0
        %3250 = vmatprep.subr.bf16.mxu0 0
        %3251 = vmatpush1.bf16.xpose.msra.mxu0 0
        %3252 = vmatprep.subr.bf16.mxu0 0
        %3253 = vmatpush1.bf16.xpose.msra.mxu0 0
        %3254 = vmatprep.subr.bf16.mxu0 0
        %3255 = vmatpush1.bf16.xpose.msra.mxu0 0
        %3256 = vmatprep.subr.bf16.mxu0 0
        %3257 = vmatpush1.bf16.xpose.msra.mxu0 0
        %3258 = vmatprep.subr.bf16.mxu0 0
        %3259 = vmatpush1.bf16.xpose.msra.mxu0 0
        %3260 = vmatprep.subr.bf16.mxu0 0
        %3261 = vmatpush1.bf16.xpose.msra.mxu0 0
        %3262 = vmatprep.subr.bf16.mxu0 0
        %3263 = vmatpush1.bf16.xpose.msra.mxu0 0
        %3264 = vmatprep.mubr.bf16.mxu0 %v3217
        %3265 = vmatmul.mubr.bf16.gmra.mrb[0].mxu0 %v3216
        %v3266 = vpop.f32.mrb[0].mxu0
        %v3267 = vadd.f32 0.0, %v3266
        %v3268 = vpop.f32.mrb[0].mxu0
        %v3269 = vpop.f32.mrb[0].mxu0
        %v3270 = vpop.f32.mrb[0].mxu0
        %3271 = vdwg.mxu0
        %3272 = vmatprep.subr.bf16.mxu0 %v3227
        %3273 = vmatpush1.bf16.xpose.msra.mxu0 %v3226
        %3274 = vmatprep.subr.bf16.mxu0 0
        %3275 = vmatpush1.bf16.xpose.msra.mxu0 0
        %3276 = vmatprep.subr.bf16.mxu0 0
        %3277 = vmatpush1.bf16.xpose.msra.mxu0 0
        %3278 = vmatprep.subr.bf16.mxu0 0
        %3279 = vmatpush1.bf16.xpose.msra.mxu0 0
        %3280 = vmatprep.subr.bf16.mxu0 0
        %3281 = vmatpush1.bf16.xpose.msra.mxu0 0
        %3282 = vmatprep.subr.bf16.mxu0 0
        %3283 = vmatpush1.bf16.xpose.msra.mxu0 0
        %3284 = vmatprep.subr.bf16.mxu0 0
        %3285 = vmatpush1.bf16.xpose.msra.mxu0 0
        %3286 = vmatprep.subr.bf16.mxu0 0
        %3287 = vmatpush1.bf16.xpose.msra.mxu0 0
        %3288 = vmatprep.subr.bf16.mxu0 0
        %3289 = vmatpush1.bf16.xpose.msra.mxu0 0
        %3290 = vmatprep.subr.bf16.mxu0 0
        %3291 = vmatpush1.bf16.xpose.msra.mxu0 0
        %3292 = vmatprep.subr.bf16.mxu0 0
        %3293 = vmatpush1.bf16.xpose.msra.mxu0 0
        %3294 = vmatprep.subr.bf16.mxu0 0
        %3295 = vmatpush1.bf16.xpose.msra.mxu0 0
        %3296 = vmatprep.subr.bf16.mxu0 0
        %3297 = vmatpush1.bf16.xpose.msra.mxu0 0
        %3298 = vmatprep.subr.bf16.mxu0 0
        %3299 = vmatpush1.bf16.xpose.msra.mxu0 0
        %3300 = vmatprep.subr.bf16.mxu0 0
        %3301 = vmatpush1.bf16.xpose.msra.mxu0 0
        %3302 = vmatprep.subr.bf16.mxu0 0
        %3303 = vmatpush1.bf16.xpose.msra.mxu0 0
        %3304 = vmatprep.mubr.bf16.mxu0 %v3219
        %3305 = vmatmul.mubr.bf16.gmra.mrb[0].mxu0 %v3218
        %v3306 = vpop.f32.mrb[0].mxu0
        %v3307 = vadd.f32 0.0, %v3306
        %v3308 = vpop.f32.mrb[0].mxu0
        %v3309 = vpop.f32.mrb[0].mxu0
        %v3310 = vpop.f32.mrb[0].mxu0
        %3311 = vdwg.mxu0
        %3312 = vmatprep.subr.bf16.mxu0 %v3229
        %3313 = vmatpush1.bf16.xpose.msra.mxu0 %v3228
        %3314 = vmatprep.subr.bf16.mxu0 0
        %3315 = vmatpush1.bf16.xpose.msra.mxu0 0
        %3316 = vmatprep.subr.bf16.mxu0 0
        %3317 = vmatpush1.bf16.xpose.msra.mxu0 0
        %3318 = vmatprep.subr.bf16.mxu0 0
        %3319 = vmatpush1.bf16.xpose.msra.mxu0 0
        %3320 = vmatprep.subr.bf16.mxu0 0
        %3321 = vmatpush1.bf16.xpose.msra.mxu0 0
        %3322 = vmatprep.subr.bf16.mxu0 0
        %3323 = vmatpush1.bf16.xpose.msra.mxu0 0
        %3324 = vmatprep.subr.bf16.mxu0 0
        %3325 = vmatpush1.bf16.xpose.msra.mxu0 0
        %3326 = vmatprep.subr.bf16.mxu0 0
        %3327 = vmatpush1.bf16.xpose.msra.mxu0 0
        %3328 = vmatprep.subr.bf16.mxu0 0
        %3329 = vmatpush1.bf16.xpose.msra.mxu0 0
        %3330 = vmatprep.subr.bf16.mxu0 0
        %3331 = vmatpush1.bf16.xpose.msra.mxu0 0
        %3332 = vmatprep.subr.bf16.mxu0 0
        %3333 = vmatpush1.bf16.xpose.msra.mxu0 0
        %3334 = vmatprep.subr.bf16.mxu0 0
        %3335 = vmatpush1.bf16.xpose.msra.mxu0 0
        %3336 = vmatprep.subr.bf16.mxu0 0
        %3337 = vmatpush1.bf16.xpose.msra.mxu0 0
        %3338 = vmatprep.subr.bf16.mxu0 0
        %3339 = vmatpush1.bf16.xpose.msra.mxu0 0
        %3340 = vmatprep.subr.bf16.mxu0 0
        %3341 = vmatpush1.bf16.xpose.msra.mxu0 0
        %3342 = vmatprep.subr.bf16.mxu0 0
        %3343 = vmatpush1.bf16.xpose.msra.mxu0 0
        %3344 = vmatprep.mubr.bf16.mxu0 %v3221
        %3345 = vmatmul.mubr.bf16.gmra.mrb[0].mxu0 %v3220
        %v3346 = vpop.f32.mrb[0].mxu0
        %v3347 = vadd.f32 0.0, %v3346
        %v3348 = vpop.f32.mrb[0].mxu0
        %v3349 = vpop.f32.mrb[0].mxu0
        %v3350 = vpop.f32.mrb[0].mxu0
        %3351 = vdwg.mxu0
        %3352 = vmatprep.subr.bf16.mxu0 %v3231
        %3353 = vmatpush1.bf16.xpose.msra.mxu0 %v3230
        %3354 = vmatprep.subr.bf16.mxu0 0
        %3355 = vmatpush1.bf16.xpose.msra.mxu0 0
        %3356 = vmatprep.subr.bf16.mxu0 0
        %3357 = vmatpush1.bf16.xpose.msra.mxu0 0
        %3358 = vmatprep.subr.bf16.mxu0 0
        %3359 = vmatpush1.bf16.xpose.msra.mxu0 0
        %3360 = vmatprep.subr.bf16.mxu0 0
        %3361 = vmatpush1.bf16.xpose.msra.mxu0 0
        %3362 = vmatprep.subr.bf16.mxu0 0
        %3363 = vmatpush1.bf16.xpose.msra.mxu0 0
        %3364 = vmatprep.subr.bf16.mxu0 0
        %3365 = vmatpush1.bf16.xpose.msra.mxu0 0
        %3366 = vmatprep.subr.bf16.mxu0 0
        %3367 = vmatpush1.bf16.xpose.msra.mxu0 0
        %3368 = vmatprep.subr.bf16.mxu0 0
        %3369 = vmatpush1.bf16.xpose.msra.mxu0 0
        %3370 = vmatprep.subr.bf16.mxu0 0
        %3371 = vmatpush1.bf16.xpose.msra.mxu0 0
        %3372 = vmatprep.subr.bf16.mxu0 0
        %3373 = vmatpush1.bf16.xpose.msra.mxu0 0
        %3374 = vmatprep.subr.bf16.mxu0 0
        %3375 = vmatpush1.bf16.xpose.msra.mxu0 0
        %3376 = vmatprep.subr.bf16.mxu0 0
        %3377 = vmatpush1.bf16.xpose.msra.mxu0 0
        %3378 = vmatprep.subr.bf16.mxu0 0
        %3379 = vmatpush1.bf16.xpose.msra.mxu0 0
        %3380 = vmatprep.subr.bf16.mxu0 0
        %3381 = vmatpush1.bf16.xpose.msra.mxu0 0
        %3382 = vmatprep.subr.bf16.mxu0 0
        %3383 = vmatpush1.bf16.xpose.msra.mxu0 0
        %3384 = vmatprep.mubr.bf16.mxu0 %v3223
        %3385 = vmatmul.mubr.bf16.gmra.mrb[0].mxu0 %v3222
        %v3386 = vpop.f32.mrb[0].mxu0
        %v3387 = vadd.f32 0.0, %v3386
        %v3388 = vpop.f32.mrb[0].mxu0
        %v3389 = vpop.f32.mrb[0].mxu0
        %v3390 = vpop.f32.mrb[0].mxu0
        %3391 = vdwg.mxu0
        %v3392 = vsel %vm1197, %v3267, -inf
        %3393 = vmax.xlane.f32.xlu0 %v3392
        %v3394 = vpop.xlane.xlu0 %3393
        %v3395 = vsel %vm1197, %v3307, -inf
        %3396 = vmax.xlane.f32.xlu0 %v3395
        %v3397 = vpop.xlane.xlu0 %3396
        %v3398 = vsel %vm1197, %v3347, -inf
        %3399 = vmax.xlane.f32.xlu0 %v3398
        %v3400 = vpop.xlane.xlu0 %3399
        %v3401 = vsel %vm1197, %v3387, -inf
        %3402 = vmax.xlane.f32.xlu0 %v3401
        %v3403 = vpop.xlane.xlu0 %3402
        %v3404 = vsub.f32 %v3267, %v3394
        %v3405 = vsub.f32 %v3307, %v3397
        %v3406 = vsub.f32 %v3347, %v3400
        %v3407 = vsub.f32 %v3387, %v3403
        %v3408 = vmul.f32 %v3404, 1.442695
        %v3409 = vpow.pop %v3408
        %v3410 = vmul.f32 %v3405, 1.442695
        %v3411 = vpow.pop %v3410
        %v3412 = vmul.f32 %v3406, 1.442695
        %v3413 = vpow.pop %v3412
        %v3414 = vmul.f32 %v3407, 1.442695
        %v3415 = vpow.pop %v3414
        %v3416 = vsel %vm1197, %v3409, 0.0
        %3417 = vadd.xlane.f32.xlu0 %v3416
        %v3418 = vpop.xlane.xlu0 %3417
        %v3419 = vsel %vm1197, %v3411, 0.0
        %3420 = vadd.xlane.f32.xlu0 %v3419
        %v3421 = vpop.xlane.xlu0 %3420
        %v3422 = vsel %vm1197, %v3413, 0.0
        %3423 = vadd.xlane.f32.xlu0 %v3422
        %v3424 = vpop.xlane.xlu0 %3423
        %v3425 = vsel %vm1197, %v3415, 0.0
        %3426 = vadd.xlane.f32.xlu0 %v3425
        %v3427 = vpop.xlane.xlu0 %3426
        %v3428 = vpack.c.bf16 %v3409, %v3409
        %v3429 = vpack.c.bf16 %v3411, %v3411
        %v3430 = vpack.c.bf16 %v3413, %v3413
        %v3431 = vpack.c.bf16 %v3415, %v3415
        %v3432 = vpack.c.bf16 %v3198, %v3198
        %v3433 = vpack.c.bf16 %v3200, %v3200
        %v3434 = vpack.c.bf16 %v3202, %v3202
        %v3435 = vpack.c.bf16 %v3204, %v3204
        %v3436 = vpack.c.bf16 %v3208, %v3208
        %v3437 = vpack.c.bf16 %v3210, %v3210
        %v3438 = vpack.c.bf16 %v3212, %v3212
        %v3439 = vpack.c.bf16 %v3214, %v3214
        %v3441 = vsel %vm1197, %v3428, 0
        %v3444 = vsel %vm1245, %v3432, 0
        %v3447 = vsel %vm1245, %v3433, 0
        %3449 = vmatprep.subr.bf16.mxu0 %v3447
        %3450 = vmatpush1.bf16.msra.mxu0 %v3444
        %3451 = vmatprep.subr.bf16.mxu0 0
        %3452 = vmatpush1.bf16.msra.mxu0 0
        %3453 = vmatprep.subr.bf16.mxu0 0
        %3454 = vmatpush1.bf16.msra.mxu0 0
        %3455 = vmatprep.subr.bf16.mxu0 0
        %3456 = vmatpush1.bf16.msra.mxu0 0
        %3457 = vmatprep.subr.bf16.mxu0 0
        %3458 = vmatpush1.bf16.msra.mxu0 0
        %3459 = vmatprep.subr.bf16.mxu0 0
        %3460 = vmatpush1.bf16.msra.mxu0 0
        %3461 = vmatprep.subr.bf16.mxu0 0
        %3462 = vmatpush1.bf16.msra.mxu0 0
        %3463 = vmatprep.subr.bf16.mxu0 0
        %3464 = vmatpush1.bf16.msra.mxu0 0
        %3465 = vmatprep.subr.bf16.mxu0 0
        %3466 = vmatpush1.bf16.msra.mxu0 0
        %3467 = vmatprep.subr.bf16.mxu0 0
        %3468 = vmatpush1.bf16.msra.mxu0 0
        %3469 = vmatprep.subr.bf16.mxu0 0
        %3470 = vmatpush1.bf16.msra.mxu0 0
        %3471 = vmatprep.subr.bf16.mxu0 0
        %3472 = vmatpush1.bf16.msra.mxu0 0
        %3473 = vmatprep.subr.bf16.mxu0 0
        %3474 = vmatpush1.bf16.msra.mxu0 0
        %3475 = vmatprep.subr.bf16.mxu0 0
        %3476 = vmatpush1.bf16.msra.mxu0 0
        %3477 = vmatprep.subr.bf16.mxu0 0
        %3478 = vmatpush1.bf16.msra.mxu0 0
        %3479 = vmatprep.subr.bf16.mxu0 0
        %3480 = vmatpush1.bf16.msra.mxu0 0
        %3481 = vmatprep.mubr.bf16.mxu0 0
        %3482 = vmatmul.mubr.bf16.gmra.mrb[0].mxu0 %v3441
        %v3483 = vpop.f32.mrb[0].mxu0
        %v3484 = vadd.f32 0.0, %v3483
        %v3485 = vpop.f32.mrb[0].mxu0
        %v3486 = vadd.f32 0.0, %v3485
        %v3487 = vpop.f32.mrb[0].mxu0
        %v3488 = vpop.f32.mrb[0].mxu0
        %3489 = vdwg.mxu0
        %v3491 = vsel %vm1197, %v3429, 0
        %v3494 = vsel %vm1245, %v3434, 0
        %v3497 = vsel %vm1245, %v3435, 0
        %3499 = vmatprep.subr.bf16.mxu0 %v3497
        %3500 = vmatpush1.bf16.msra.mxu0 %v3494
        %3501 = vmatprep.subr.bf16.mxu0 0
        %3502 = vmatpush1.bf16.msra.mxu0 0
        %3503 = vmatprep.subr.bf16.mxu0 0
        %3504 = vmatpush1.bf16.msra.mxu0 0
        %3505 = vmatprep.subr.bf16.mxu0 0
        %3506 = vmatpush1.bf16.msra.mxu0 0
        %3507 = vmatprep.subr.bf16.mxu0 0
        %3508 = vmatpush1.bf16.msra.mxu0 0
        %3509 = vmatprep.subr.bf16.mxu0 0
        %3510 = vmatpush1.bf16.msra.mxu0 0
        %3511 = vmatprep.subr.bf16.mxu0 0
        %3512 = vmatpush1.bf16.msra.mxu0 0
        %3513 = vmatprep.subr.bf16.mxu0 0
        %3514 = vmatpush1.bf16.msra.mxu0 0
        %3515 = vmatprep.subr.bf16.mxu0 0
        %3516 = vmatpush1.bf16.msra.mxu0 0
        %3517 = vmatprep.subr.bf16.mxu0 0
        %3518 = vmatpush1.bf16.msra.mxu0 0
        %3519 = vmatprep.subr.bf16.mxu0 0
        %3520 = vmatpush1.bf16.msra.mxu0 0
        %3521 = vmatprep.subr.bf16.mxu0 0
        %3522 = vmatpush1.bf16.msra.mxu0 0
        %3523 = vmatprep.subr.bf16.mxu0 0
        %3524 = vmatpush1.bf16.msra.mxu0 0
        %3525 = vmatprep.subr.bf16.mxu0 0
        %3526 = vmatpush1.bf16.msra.mxu0 0
        %3527 = vmatprep.subr.bf16.mxu0 0
        %3528 = vmatpush1.bf16.msra.mxu0 0
        %3529 = vmatprep.subr.bf16.mxu0 0
        %3530 = vmatpush1.bf16.msra.mxu0 0
        %3531 = vmatprep.mubr.bf16.mxu0 0
        %3532 = vmatmul.mubr.bf16.gmra.mrb[0].mxu0 %v3491
        %v3533 = vpop.f32.mrb[0].mxu0
        %v3534 = vadd.f32 0.0, %v3533
        %v3535 = vpop.f32.mrb[0].mxu0
        %v3536 = vadd.f32 0.0, %v3535
        %v3537 = vpop.f32.mrb[0].mxu0
        %v3538 = vpop.f32.mrb[0].mxu0
        %3539 = vdwg.mxu0
        %v3541 = vsel %vm1197, %v3430, 0
        %v3544 = vsel %vm1245, %v3436, 0
        %v3547 = vsel %vm1245, %v3437, 0
        %3549 = vmatprep.subr.bf16.mxu0 %v3547
        %3550 = vmatpush1.bf16.msra.mxu0 %v3544
        %3551 = vmatprep.subr.bf16.mxu0 0
        %3552 = vmatpush1.bf16.msra.mxu0 0
        %3553 = vmatprep.subr.bf16.mxu0 0
        %3554 = vmatpush1.bf16.msra.mxu0 0
        %3555 = vmatprep.subr.bf16.mxu0 0
        %3556 = vmatpush1.bf16.msra.mxu0 0
        %3557 = vmatprep.subr.bf16.mxu0 0
        %3558 = vmatpush1.bf16.msra.mxu0 0
        %3559 = vmatprep.subr.bf16.mxu0 0
        %3560 = vmatpush1.bf16.msra.mxu0 0
        %3561 = vmatprep.subr.bf16.mxu0 0
        %3562 = vmatpush1.bf16.msra.mxu0 0
        %3563 = vmatprep.subr.bf16.mxu0 0
        %3564 = vmatpush1.bf16.msra.mxu0 0
        %3565 = vmatprep.subr.bf16.mxu0 0
        %3566 = vmatpush1.bf16.msra.mxu0 0
        %3567 = vmatprep.subr.bf16.mxu0 0
        %3568 = vmatpush1.bf16.msra.mxu0 0
        %3569 = vmatprep.subr.bf16.mxu0 0
        %3570 = vmatpush1.bf16.msra.mxu0 0
        %3571 = vmatprep.subr.bf16.mxu0 0
        %3572 = vmatpush1.bf16.msra.mxu0 0
        %3573 = vmatprep.subr.bf16.mxu0 0
        %3574 = vmatpush1.bf16.msra.mxu0 0
        %3575 = vmatprep.subr.bf16.mxu0 0
        %3576 = vmatpush1.bf16.msra.mxu0 0
        %3577 = vmatprep.subr.bf16.mxu0 0
        %3578 = vmatpush1.bf16.msra.mxu0 0
        %3579 = vmatprep.subr.bf16.mxu0 0
        %3580 = vmatpush1.bf16.msra.mxu0 0
        %3581 = vmatprep.mubr.bf16.mxu0 0
        %3582 = vmatmul.mubr.bf16.gmra.mrb[0].mxu0 %v3541
        %v3583 = vpop.f32.mrb[0].mxu0
        %v3584 = vadd.f32 0.0, %v3583
        %v3585 = vpop.f32.mrb[0].mxu0
        %v3586 = vadd.f32 0.0, %v3585
        %v3587 = vpop.f32.mrb[0].mxu0
        %v3588 = vpop.f32.mrb[0].mxu0
        %3589 = vdwg.mxu0
        %v3591 = vsel %vm1197, %v3431, 0
        %v3594 = vsel %vm1245, %v3438, 0
        %v3597 = vsel %vm1245, %v3439, 0
        %3599 = vmatprep.subr.bf16.mxu0 %v3597
        %3600 = vmatpush1.bf16.msra.mxu0 %v3594
        %3601 = vmatprep.subr.bf16.mxu0 0
        %3602 = vmatpush1.bf16.msra.mxu0 0
        %3603 = vmatprep.subr.bf16.mxu0 0
        %3604 = vmatpush1.bf16.msra.mxu0 0
        %3605 = vmatprep.subr.bf16.mxu0 0
        %3606 = vmatpush1.bf16.msra.mxu0 0
        %3607 = vmatprep.subr.bf16.mxu0 0
        %3608 = vmatpush1.bf16.msra.mxu0 0
        %3609 = vmatprep.subr.bf16.mxu0 0
        %3610 = vmatpush1.bf16.msra.mxu0 0
        %3611 = vmatprep.subr.bf16.mxu0 0
        %3612 = vmatpush1.bf16.msra.mxu0 0
        %3613 = vmatprep.subr.bf16.mxu0 0
        %3614 = vmatpush1.bf16.msra.mxu0 0
        %3615 = vmatprep.subr.bf16.mxu0 0
        %3616 = vmatpush1.bf16.msra.mxu0 0
        %3617 = vmatprep.subr.bf16.mxu0 0
        %3618 = vmatpush1.bf16.msra.mxu0 0
        %3619 = vmatprep.subr.bf16.mxu0 0
        %3620 = vmatpush1.bf16.msra.mxu0 0
        %3621 = vmatprep.subr.bf16.mxu0 0
        %3622 = vmatpush1.bf16.msra.mxu0 0
        %3623 = vmatprep.subr.bf16.mxu0 0
        %3624 = vmatpush1.bf16.msra.mxu0 0
        %3625 = vmatprep.subr.bf16.mxu0 0
        %3626 = vmatpush1.bf16.msra.mxu0 0
        %3627 = vmatprep.subr.bf16.mxu0 0
        %3628 = vmatpush1.bf16.msra.mxu0 0
        %3629 = vmatprep.subr.bf16.mxu0 0
        %3630 = vmatpush1.bf16.msra.mxu0 0
        %3631 = vmatprep.mubr.bf16.mxu0 0
        %3632 = vmatmul.mubr.bf16.gmra.mrb[0].mxu0 %v3591
        %v3633 = vpop.f32.mrb[0].mxu0
        %v3634 = vadd.f32 0.0, %v3633
        %v3635 = vpop.f32.mrb[0].mxu0
        %v3636 = vadd.f32 0.0, %v3635
        %v3637 = vpop.f32.mrb[0].mxu0
        %v3638 = vpop.f32.mrb[0].mxu0
        %3639 = vdwg.mxu0
        %v3640 = vrcp.pop %v3418
        %v3641 = vrcp.pop %v3421
        %v3642 = vrcp.pop %v3424
        %v3643 = vrcp.pop %v3427
        %v3644 = vmul.f32 %v3484, %v3640
        %v3645 = vmul.f32 %v3486, %v3640
        %v3646 = vmul.f32 %v3534, %v3641
        %v3647 = vmul.f32 %v3536, %v3641
        %v3648 = vmul.f32 %v3584, %v3642
        %v3649 = vmul.f32 %v3586, %v3642
        %v3650 = vmul.f32 %v3634, %v3643
        %v3651 = vmul.f32 %v3636, %v3643
        %v3652 = vld [vmem:[#allocation19] sm:$0xf]
        %v3653 = vld [vmem:[#allocation19 + $0x4] sm:$0xf]
        %v3654 = vld [vmem:[#allocation19 + $0x8] sm:$0xf]
        %v3655 = vld [vmem:[#allocation19 + $0xc] sm:$0xf]
        %v3656 = vld [vmem:[#allocation19 + $0x10] sm:$0xf]
        %v3657 = vld [vmem:[#allocation19 + $0x14] sm:$0xf]
        %v3658 = vld [vmem:[#allocation19 + $0x18] sm:$0xf]
        %v3659 = vld [vmem:[#allocation19 + $0x1c] sm:$0xf]
        %v3660 = vld [vmem:[#allocation19 + $0x20] sm:$0xf]
        %v3661 = vld [vmem:[#allocation19 + $0x24] sm:$0xf]
        %v3662 = vld [vmem:[#allocation19 + $0x28] sm:$0xf]
        %v3663 = vld [vmem:[#allocation19 + $0x2c] sm:$0xf]
        %v3664 = vld [vmem:[#allocation19 + $0x30] sm:$0xf]
        %v3665 = vld [vmem:[#allocation19 + $0x34] sm:$0xf]
        %v3666 = vld [vmem:[#allocation19 + $0x38] sm:$0xf]
        %v3667 = vld [vmem:[#allocation19 + $0x3c] sm:$0xf]
        %v3668 = vld [vmem:[#allocation19 + $0x40] sm:$0xf]
        %v3669 = vld [vmem:[#allocation19 + $0x44] sm:$0xf]
        %v3670 = vld [vmem:[#allocation19 + $0x48] sm:$0xf]
        %v3671 = vld [vmem:[#allocation19 + $0x4c] sm:$0xf]
        %v3672 = vld [vmem:[#allocation19 + $0x50] sm:$0xf]
        %v3673 = vld [vmem:[#allocation19 + $0x54] sm:$0xf]
        %v3674 = vld [vmem:[#allocation19 + $0x58] sm:$0xf]
        %v3675 = vld [vmem:[#allocation19 + $0x5c] sm:$0xf]
        %v3676 = vld [vmem:[#allocation19 + $0x60] sm:$0xf]
        %v3677 = vld [vmem:[#allocation19 + $0x64] sm:$0xf]
        %v3678 = vld [vmem:[#allocation19 + $0x68] sm:$0xf]
        %v3679 = vld [vmem:[#allocation19 + $0x6c] sm:$0xf]
        %v3680 = vld [vmem:[#allocation19 + $0x70] sm:$0xf]
        %v3681 = vld [vmem:[#allocation19 + $0x74] sm:$0xf]
        %v3682 = vld [vmem:[#allocation19 + $0x78] sm:$0xf]
        %v3683 = vld [vmem:[#allocation19 + $0x7c] sm:$0xf]
        %v3684 = vld [vmem:[%s15] sm:$0x1]
        %v3685 = vpack.c.bf16 %v3646, %v3644
        %v3686 = vpack.c.bf16 %v3647, %v3645
        %v3687 = vpack.c.bf16 %v3650, %v3648
        %v3688 = vpack.c.bf16 %v3651, %v3649
        %v3690 = vlaneseq
        %v3691 = vshrl.u32 %v3690, 7
        %v3692 = vsub.s32 0, %v3691
        %v3693 = vrot.slane %v3684, %v3692
        %v3727 = vunpack.c.l.b16 %v3652
        %v3728 = vunpack.c.l.b16 %v3653
        %v3729 = vunpack.c.l.b16 %v3654
        %v3730 = vunpack.c.l.b16 %v3655
        %v3731 = vunpack.c.l.b16 %v3656
        %v3732 = vunpack.c.l.b16 %v3657
        %v3733 = vunpack.c.l.b16 %v3658
        %v3734 = vunpack.c.l.b16 %v3659
        %v3735 = vunpack.c.l.b16 %v3660
        %v3736 = vunpack.c.l.b16 %v3661
        %v3737 = vunpack.c.l.b16 %v3662
        %v3738 = vunpack.c.l.b16 %v3663
        %v3739 = vunpack.c.l.b16 %v3664
        %v3740 = vunpack.c.l.b16 %v3665
        %v3741 = vunpack.c.l.b16 %v3666
        %v3742 = vunpack.c.l.b16 %v3667
        %v3743 = vunpack.c.l.b16 %v3668
        %v3744 = vunpack.c.l.b16 %v3669
        %v3745 = vunpack.c.l.b16 %v3670
        %v3746 = vunpack.c.l.b16 %v3671
        %v3747 = vunpack.c.l.b16 %v3672
        %v3748 = vunpack.c.l.b16 %v3673
        %v3749 = vunpack.c.l.b16 %v3674
        %v3750 = vunpack.c.l.b16 %v3675
        %v3751 = vunpack.c.l.b16 %v3676
        %v3752 = vunpack.c.l.b16 %v3677
        %v3753 = vunpack.c.l.b16 %v3678
        %v3754 = vunpack.c.l.b16 %v3679
        %v3755 = vunpack.c.l.b16 %v3680
        %v3756 = vunpack.c.l.b16 %v3681
        %v3757 = vunpack.c.l.b16 %v3682
        %v3758 = vunpack.c.l.b16 %v3683
        %v3759 = vpack.c.b16 %v3728, %v3727
        %v3760 = vpack.c.b16 %v3730, %v3729
        %v3761 = vpack.c.b16 %v3732, %v3731
        %v3762 = vpack.c.b16 %v3734, %v3733
        %v3763 = vpack.c.b16 %v3736, %v3735
        %v3764 = vpack.c.b16 %v3738, %v3737
        %v3765 = vpack.c.b16 %v3740, %v3739
        %v3766 = vpack.c.b16 %v3742, %v3741
        %v3767 = vpack.c.b16 %v3744, %v3743
        %v3768 = vpack.c.b16 %v3746, %v3745
        %v3769 = vpack.c.b16 %v3748, %v3747
        %v3770 = vpack.c.b16 %v3750, %v3749
        %v3771 = vpack.c.b16 %v3752, %v3751
        %v3772 = vpack.c.b16 %v3754, %v3753
        %v3773 = vpack.c.b16 %v3756, %v3755
        %v3774 = vpack.c.b16 %v3758, %v3757
        %3791 = vmatprep.subr.bf16.mxu0 0
        %3792 = vmatpush1.bf16.msra.mxu0 %v3759
        %3793 = vmatprep.subr.bf16.mxu0 0
        %3794 = vmatpush1.bf16.msra.mxu0 %v3760
        %3795 = vmatprep.subr.bf16.mxu0 0
        %3796 = vmatpush1.bf16.msra.mxu0 %v3761
        %3797 = vmatprep.subr.bf16.mxu0 0
        %3798 = vmatpush1.bf16.msra.mxu0 %v3762
        %3799 = vmatprep.subr.bf16.mxu0 0
        %3800 = vmatpush1.bf16.msra.mxu0 %v3763
        %3801 = vmatprep.subr.bf16.mxu0 0
        %3802 = vmatpush1.bf16.msra.mxu0 %v3764
        %3803 = vmatprep.subr.bf16.mxu0 0
        %3804 = vmatpush1.bf16.msra.mxu0 %v3765
        %3805 = vmatprep.subr.bf16.mxu0 0
        %3806 = vmatpush1.bf16.msra.mxu0 %v3766
        %3807 = vmatprep.subr.bf16.mxu0 0
        %3808 = vmatpush1.bf16.msra.mxu0 %v3767
        %3809 = vmatprep.subr.bf16.mxu0 0
        %3810 = vmatpush1.bf16.msra.mxu0 %v3768
        %3811 = vmatprep.subr.bf16.mxu0 0
        %3812 = vmatpush1.bf16.msra.mxu0 %v3769
        %3813 = vmatprep.subr.bf16.mxu0 0
        %3814 = vmatpush1.bf16.msra.mxu0 %v3770
        %3815 = vmatprep.subr.bf16.mxu0 0
        %3816 = vmatpush1.bf16.msra.mxu0 %v3771
        %3817 = vmatprep.subr.bf16.mxu0 0
        %3818 = vmatpush1.bf16.msra.mxu0 %v3772
        %3819 = vmatprep.subr.bf16.mxu0 0
        %3820 = vmatpush1.bf16.msra.mxu0 %v3773
        %3821 = vmatprep.subr.bf16.mxu0 0
        %3822 = vmatpush1.bf16.msra.mxu0 %v3774
        %3823 = vmatprep.mubr.bf16.mxu0 %v3686
        %3824 = vmatmul.mubr.bf16.gmra.mrb[0].mxu0 %v3685
        %v3825 = vpop.f32.mrb[0].mxu0
        %v3826 = vadd.f32 %v3693, %v3825
        %v3827 = vpop.f32.mrb[0].mxu0
        %v3828 = vpop.f32.mrb[0].mxu0
        %v3829 = vadd.f32 %v3693, %v3828
        %v3830 = vpop.f32.mrb[0].mxu0
        %3831 = vmatprep.mubr.bf16.mxu0 %v3688
        %3832 = vmatmul.mubr.bf16.gmra.mrb[0].mxu0 %v3687
        %v3833 = vpop.f32.mrb[0].mxu0
        %v3834 = vadd.f32 %v3693, %v3833
        %v3835 = vpop.f32.mrb[0].mxu0
        %v3836 = vpop.f32.mrb[0].mxu0
        %v3837 = vadd.f32 %v3693, %v3836
        %v3838 = vpop.f32.mrb[0].mxu0
        %3839 = vdwg.mxu0
        %v3840 = vmax.f32 %v3826, 0.0
        %v3841 = vmax.f32 %v3829, 0.0
        %v3842 = vmax.f32 %v3834, 0.0
        %v3843 = vmax.f32 %v3837, 0.0
        %3844 = vst [vmem:[%s675] sm:$0xff] %v3840
        %3845 = vst [vmem:[%s675 + $0x8] sm:$0xff] %v3841
        %3846 = vst [vmem:[%s675 + $0x10] sm:$0xff] %v3842
        %3847 = vst [vmem:[%s675 + $0x18] sm:$0xff] %v3843
        %s3848 = sand.u32 %s385, 1
        %s3849 = scalar_lea.sflag [#allocation4], %s3848
        %s3850 = sand.u32 %s385, 1
        %s3851 = smul.addr %s3850, 32
        %s3852 = scalar_lea.vmem [#allocation20], %s3851
        // Predicated region
        $region129: #{fully_connected_network.1} parent=83 // pred_check
          %p3853 = pneg %p395
        $region130: #{fully_connected_network.1} parent=83 // pred_check_branch
          %3855 = sbr.rel (%p3853) target = $region132
        $region131: #{fully_connected_network.1} parent=83 // pred_region
          %s3856 = smul.u32 4, %s36
          %s3858 = ssub.s32 512, 512
          %3859 = vsyncadd %s3849, %s3858
          %s3860 = smul.addr %s3856, 128
          %s3861 = scalar_lea.hbm %s16, %s3860
          %s3862 = sshll.u32 %s3852, 4
          %s3863 = int_to_ptr.vmem [resolvable:$true] %s3862
          %3868 = dma.vmem_to_hbm [thread:$0]  %s3863, 512, %s3861, %s3849, 128, 128, 8
        $region132: #{fully_connected_network.1} parent=83 // pred_fallthru
          _
      $region84: #{fully_connected_network.1} parent=5 // pred_fallthru
        _
      %p3869 = scmp.le.s32.totalorder 2, %s31
      // Predicated region
      $region133: #{fully_connected_network.1} parent=5 // pred_check
        %p3870 = pneg %p3869
      $region134: #{fully_connected_network.1} parent=5 // pred_check_branch
        %3872 = sbr.rel (%p3870) target = $region136
      $region135: #{fully_connected_network.1} parent=5 // pred_region
        %s3873 = ssub.s32 %s31, 2
        // Predicated region
        $region137: #{fully_connected_network.1} parent=135 // pred_check
          %p3874 = pneg %p401
        $region138: #{fully_connected_network.1} parent=135 // pred_check_branch
          %3876 = sbr.rel (%p3874) target = $region140
        $region139: #{fully_connected_network.1} parent=135 // pred_region
          %s3877 = sand.u32 %s386, 1
          %s3878 = scalar_lea.sflag [#allocation4], %s3877
          %s3879 = sand.u32 %s386, 1
          %s3880 = smul.addr %s3879, 32
          %s3881 = scalar_lea.vmem [#allocation20], %s3880
          %3882 = dma.done %s3878, 512
        $region140: #{fully_connected_network.1} parent=135 // pred_fallthru
          _
      $region136: #{fully_connected_network.1} parent=5 // pred_fallthru
        _
    $region6: #{fully_connected_network.1} parent=1 // loop_footer
      %s35 = sadd.s32 1, %s31
    $region7: #{fully_connected_network.1} parent=1 // loop_footer_branch
      %30 = sbr.rel target = $region3
    $region8: #{fully_connected_network.1} parent=1 // loop_exit
      _
    %3883 = vsyncpa [#allocation3], 1
    %s3884 = scalar_lea.sflag [#allocation3], 1
    %3885 = vsyncpa %s3884, 1
    %3886 = vsyncpa [#allocation6], 1
    %3887 = vsyncpa [#allocation9], 1
    %3888 = vsyncpa [#allocation12], 1
    %3889 = vsyncpa [#allocation15], 1
    %3890 = vsyncpa [#allocation18], 1
    %3891 = vsyncpa [#allocation4], 1
    %s3892 = scalar_lea.sflag [#allocation4], 1
    %3893 = vsyncpa %s3892, 1

</llo_original>
